<compile_context>
chip_gen: v7x
topology: tpu7x:2x2x1
jax: 0.10.0
libtpu: 0.0.40
codegen_flags: <defaults>
</compile_context>

<pallas_src>
import functools
import jax
import jax.numpy as jnp
from jax.experimental import pallas as pl
from jax.experimental.pallas import tpu as pltpu

# ---- small, self-consistent hyperparameters (scaled down from the reference) ----
VOCAB_SIZE = 65          # len(chars) stand-in
N_EMBEDS   = 32          # n_embeds
BLOCK_SIZE = 8           # block_size (max context)
N_HEADS    = 4           # n_heads
N_LAYERS   = 2           # n_layers
HEAD_SIZE  = N_EMBEDS // N_HEADS
FF_HIDDEN  = 4 * N_EMBEDS
LN_EPS     = 1e-5        # PyTorch nn.LayerNorm default
VOCAB_PAD  = 128         # lane-dense embedding rows + lm_head cols (sliced back outside)

LAYER_PARAM_NAMES = ("ln1_g", "ln1_b", "wqkv", "wp", "bp",
                     "ln2_g", "ln2_b", "w1", "b1", "w2", "b2")   # 11 per layer


def _layernorm(h, g, b):
    mu = jnp.mean(h, axis=-1, keepdims=True)
    var = jnp.mean((h - mu) ** 2, axis=-1, keepdims=True)
    return (h - mu) * jax.lax.rsqrt(var + LN_EPS) * g + b


def _gpt_kernel(idx_ref, tok_emb_ref, pos_ref, *refs, n_layers, n_heads, batch, seq):
    """Full forward for the whole batch: embed -> n_layers blocks -> ln_f -> lm_head."""
    o_ref = refs[-1]
    lnf_g_ref, lnf_b_ref, wlm_ref, blm_ref = refs[-5:-1]
    layer_refs = refs[:-5]                       # n_layers groups of 11 weight refs

    vpad, C = tok_emb_ref.shape
    hs = C // n_heads
    bt = batch * seq
    # NOTE: reference scales by C ** -0.5 where C == n_embeds (not head_size) — keep that quirk.
    scale = C ** -0.5

    # --- token embedding gather as a lane-dense one-hot MXU matmul (vocab rows padded to 128) ---
    onehot = (jax.lax.broadcasted_iota(jnp.int32, (bt, vpad), 1)
              == idx_ref[...]).astype(jnp.float32)                              # (BT, 128)
    x = jnp.dot(onehot, tok_emb_ref[...], preferred_element_type=jnp.float32)   # (BT, C)
    x = x + jnp.concatenate([pos_ref[...]] * batch, axis=0)                     # += pos embeds

    # Causal mask built once, reused by every layer / (batch,head) group.
    row = jax.lax.broadcasted_iota(jnp.int32, (seq, seq), 0)
    col = jax.lax.broadcasted_iota(jnp.int32, (seq, seq), 1)
    causal = (col <= row)[None, :, :]            # (1, T, T); diagonal unmasked -> -inf safe

    for li in range(n_layers):
        (ln1g, ln1b, wqkv, wp, bp,
         ln2g, ln2b, w1, b1, w2, b2) = layer_refs[li * 11:(li + 1) * 11]

        # --- multi-head self-attention on ln1(x) ---
        h = _layernorm(x, ln1g[...], ln1b[...])
        qkv = jnp.dot(h, wqkv[...], preferred_element_type=jnp.float32)     # (BT, 3C) one MXU pass

        def heads(base):    # split into (B*H, T, hs) groups (static lane/row slices + stack)
            return jnp.stack([qkv[b * seq:(b + 1) * seq,
                                  base + hh * hs: base + (hh + 1) * hs]
                              for b in range(batch) for hh in range(n_heads)], axis=0)
        q, k, v = heads(0), heads(C), heads(2 * C)

        wei = jnp.einsum('gtd,gsd->gts', q, k,
                         preferred_element_type=jnp.float32) * scale        # (B*H, T, T)
        wei = jnp.where(causal, wei, -jnp.inf)
        wei = wei - jnp.max(wei, axis=-1, keepdims=True)
        e = jnp.exp(wei)
        p = e * pl.reciprocal(jnp.sum(e, axis=-1, keepdims=True), approx=True)
        # dropout(p) is identity in eval mode
        out = jnp.einsum('gts,gsd->gtd', p, v,
                         preferred_element_type=jnp.float32)                 # (B*H, T, hs)
        attn = jnp.concatenate(
            [jnp.concatenate([out[b * n_heads + hh] for hh in range(n_heads)], axis=-1)
             for b in range(batch)], axis=0)                                 # (BT, C)
        x = x + jnp.dot(attn, wp[...], preferred_element_type=jnp.float32) + bp[...]

        # --- feed-forward on ln2(x) ---
        h2 = _layernorm(x, ln2g[...], ln2b[...])
        ff = jnp.maximum(jnp.dot(h2, w1[...], preferred_element_type=jnp.float32) + b1[...], 0.0)
        x = x + jnp.dot(ff, w2[...], preferred_element_type=jnp.float32) + b2[...]

    # --- final layernorm + lm_head (vocab lane-padded to 128 -> full-lane stores) ---
    hf = _layernorm(x, lnf_g_ref[...], lnf_b_ref[...])
    o_ref[...] = jnp.dot(hf, wlm_ref[...], preferred_element_type=jnp.float32) + blm_ref[...]


def gpt_forward(idx, params, targets=None):
    """Equivalent of GPTLanguageModel.forward (targets=None path)."""
    B, T = idx.shape
    idx_flat = idx.reshape(B * T, 1).astype(jnp.int32)
    pos = params["pos_emb"][:T].astype(jnp.float32)                         # (T, C)

    flat = [idx_flat, params["tok_emb_pad"], pos]
    for lp in params["layers"]:
        flat += [lp[n] for n in LAYER_PARAM_NAMES]
    flat += [params["lnf_g"], params["lnf_b"], params["wlm_pad"], params["blm_pad"]]

    def full_spec(a):
        nd = a.ndim
        return pl.BlockSpec(a.shape, lambda i, _nd=nd: (0,) * _nd)   # full array, resident

    out = pl.pallas_call(
        functools.partial(_gpt_kernel, n_layers=N_LAYERS, n_heads=N_HEADS, batch=B, seq=T),
        out_shape=jax.ShapeDtypeStruct((B * T, VOCAB_PAD), jnp.float32),
        grid=(1,),
        in_specs=[full_spec(a) for a in flat],
        out_specs=pl.BlockSpec((B * T, VOCAB_PAD), lambda i: (0, 0)),
        compiler_params=pltpu.CompilerParams(dimension_semantics=("arbitrary",)),
    )(*flat)

    logits = out.reshape(B, T, VOCAB_PAD)[..., :VOCAB_SIZE]
    loss = None   # TODO(synk): cross_entropy path (targets is not None) not exercised here
    return logits, loss


def init_params(key):
    def normal(k, shape, scale=0.02):
        return scale * jax.random.normal(k, shape, dtype=jnp.float32)

    keys = iter(jax.random.split(key, 4 + N_LAYERS * 6))
    tok = normal(next(keys), (VOCAB_SIZE, N_EMBEDS))
    params = {
        # token embedding table padded 65 -> 128 rows for the in-kernel one-hot matmul
        "tok_emb_pad": jnp.zeros((VOCAB_PAD, N_EMBEDS), jnp.float32).at[:VOCAB_SIZE].set(tok),
        "pos_emb": normal(next(keys), (BLOCK_SIZE, N_EMBEDS)),
        "lnf_g": jnp.ones((1, N_EMBEDS), jnp.float32),
        "lnf_b": jnp.zeros((1, N_EMBEDS), jnp.float32),
        "layers": [],
    }
    wlm = normal(next(keys), (N_EMBEDS, VOCAB_SIZE))
    blm = normal(next(keys), (1, VOCAB_SIZE))
    params["wlm_pad"] = jnp.zeros((N_EMBEDS, VOCAB_PAD), jnp.float32).at[:, :VOCAB_SIZE].set(wlm)
    params["blm_pad"] = jnp.zeros((1, VOCAB_PAD), jnp.float32).at[:, :VOCAB_SIZE].set(blm)
    for _ in range(N_LAYERS):
        wq = normal(next(keys), (N_EMBEDS, N_EMBEDS))
        wk = normal(next(keys), (N_EMBEDS, N_EMBEDS))
        wv = normal(next(keys), (N_EMBEDS, N_EMBEDS))
        lp = {
            "ln1_g": jnp.ones((1, N_EMBEDS), jnp.float32),
            "ln1_b": jnp.zeros((1, N_EMBEDS), jnp.float32),
            # q|k|v stacked along the output axis -> single (C, 3C) MXU pass in the kernel
            "wqkv": jnp.concatenate([wq, wk, wv], axis=1),
            "wp": normal(next(keys), (N_EMBEDS, N_EMBEDS)),
            "bp": jnp.zeros((1, N_EMBEDS), jnp.float32),
            "ln2_g": jnp.ones((1, N_EMBEDS), jnp.float32),
            "ln2_b": jnp.zeros((1, N_EMBEDS), jnp.float32),
            "w1": normal(next(keys), (N_EMBEDS, FF_HIDDEN)),
            "b1": jnp.zeros((1, FF_HIDDEN), jnp.float32),
            "w2": normal(next(keys), (FF_HIDDEN, N_EMBEDS)),
            "b2": jnp.zeros((1, N_EMBEDS), jnp.float32),
        }
        params["layers"].append(lp)
    return params


if __name__ == "__main__":
    key = jax.random.PRNGKey(0)
    k_param, k_idx = jax.random.split(key)
    params = init_params(k_param)

    B, T = 2, BLOCK_SIZE
    idx = jax.random.randint(k_idx, (B, T), 0, VOCAB_SIZE, dtype=jnp.int32)

    logits, loss = jax.jit(lambda i, p: gpt_forward(i, p))(idx, params)
    logits = jax.block_until_ready(logits)
    assert logits.shape == (B, T, VOCAB_SIZE), logits.shape
    assert bool(jnp.all(jnp.isfinite(logits)))
    print("KERNEL_OK")
</pallas_src>

<mosaic_0001>
module attributes {stable_mosaic.version = 11 : i64} {
  func.func @_gpt_kernel(%arg0: i32, %arg1: memref<16x1xi32, #tpu.memory_space<vmem>>, %arg2: memref<128x32xf32, #tpu.memory_space<vmem>>, %arg3: memref<8x32xf32, #tpu.memory_space<vmem>>, %arg4: memref<1x32xf32, #tpu.memory_space<vmem>>, %arg5: memref<1x32xf32, #tpu.memory_space<vmem>>, %arg6: memref<32x96xf32, #tpu.memory_space<vmem>>, %arg7: memref<32x32xf32, #tpu.memory_space<vmem>>, %arg8: memref<1x32xf32, #tpu.memory_space<vmem>>, %arg9: memref<1x32xf32, #tpu.memory_space<vmem>>, %arg10: memref<1x32xf32, #tpu.memory_space<vmem>>, %arg11: memref<32x128xf32, #tpu.memory_space<vmem>>, %arg12: memref<1x128xf32, #tpu.memory_space<vmem>>, %arg13: memref<128x32xf32, #tpu.memory_space<vmem>>, %arg14: memref<1x32xf32, #tpu.memory_space<vmem>>, %arg15: memref<1x32xf32, #tpu.memory_space<vmem>>, %arg16: memref<1x32xf32, #tpu.memory_space<vmem>>, %arg17: memref<32x96xf32, #tpu.memory_space<vmem>>, %arg18: memref<32x32xf32, #tpu.memory_space<vmem>>, %arg19: memref<1x32xf32, #tpu.memory_space<vmem>>, %arg20: memref<1x32xf32, #tpu.memory_space<vmem>>, %arg21: memref<1x32xf32, #tpu.memory_space<vmem>>, %arg22: memref<32x128xf32, #tpu.memory_space<vmem>>, %arg23: memref<1x128xf32, #tpu.memory_space<vmem>>, %arg24: memref<128x32xf32, #tpu.memory_space<vmem>>, %arg25: memref<1x32xf32, #tpu.memory_space<vmem>>, %arg26: memref<1x32xf32, #tpu.memory_space<vmem>>, %arg27: memref<1x32xf32, #tpu.memory_space<vmem>>, %arg28: memref<32x128xf32, #tpu.memory_space<vmem>>, %arg29: memref<1x128xf32, #tpu.memory_space<vmem>>, %arg30: memref<16x128xf32, #tpu.memory_space<vmem>>) attributes {dimension_semantics = [#tpu.dimension_semantics<arbitrary>], iteration_bounds = array<i64: 1>, scalar_prefetch = 0 : i64, scratch_operands = 0 : i64, tpu.core_type = #tpu.core_type<tc>, window_params = [{pipeline_mode = #tpu.pipeline_mode<synchronous>, transform_indices = @transform_0, window_bounds = array<i64: 16, 1>}, {pipeline_mode = #tpu.pipeline_mode<synchronous>, transform_indices = @transform_1, window_bounds = array<i64: 128, 32>}, {pipeline_mode = #tpu.pipeline_mode<synchronous>, transform_indices = @transform_2, window_bounds = array<i64: 8, 32>}, {pipeline_mode = #tpu.pipeline_mode<synchronous>, transform_indices = @transform_3, window_bounds = array<i64: 1, 32>}, {pipeline_mode = #tpu.pipeline_mode<synchronous>, transform_indices = @transform_4, window_bounds = array<i64: 1, 32>}, {pipeline_mode = #tpu.pipeline_mode<synchronous>, transform_indices = @transform_5, window_bounds = array<i64: 32, 96>}, {pipeline_mode = #tpu.pipeline_mode<synchronous>, transform_indices = @transform_6, window_bounds = array<i64: 32, 32>}, {pipeline_mode = #tpu.pipeline_mode<synchronous>, transform_indices = @transform_7, window_bounds = array<i64: 1, 32>}, {pipeline_mode = #tpu.pipeline_mode<synchronous>, transform_indices = @transform_8, window_bounds = array<i64: 1, 32>}, {pipeline_mode = #tpu.pipeline_mode<synchronous>, transform_indices = @transform_9, window_bounds = array<i64: 1, 32>}, {pipeline_mode = #tpu.pipeline_mode<synchronous>, transform_indices = @transform_10, window_bounds = array<i64: 32, 128>}, {pipeline_mode = #tpu.pipeline_mode<synchronous>, transform_indices = @transform_11, window_bounds = array<i64: 1, 128>}, {pipeline_mode = #tpu.pipeline_mode<synchronous>, transform_indices = @transform_12, window_bounds = array<i64: 128, 32>}, {pipeline_mode = #tpu.pipeline_mode<synchronous>, transform_indices = @transform_13, window_bounds = array<i64: 1, 32>}, {pipeline_mode = #tpu.pipeline_mode<synchronous>, transform_indices = @transform_14, window_bounds = array<i64: 1, 32>}, {pipeline_mode = #tpu.pipeline_mode<synchronous>, transform_indices = @transform_15, window_bounds = array<i64: 1, 32>}, {pipeline_mode = #tpu.pipeline_mode<synchronous>, transform_indices = @transform_16, window_bounds = array<i64: 32, 96>}, {pipeline_mode = #tpu.pipeline_mode<synchronous>, transform_indices = @transform_17, window_bounds = array<i64: 32, 32>}, {pipeline_mode = #tpu.pipeline_mode<synchronous>, transform_indices = @transform_18, window_bounds = array<i64: 1, 32>}, {pipeline_mode = #tpu.pipeline_mode<synchronous>, transform_indices = @transform_19, window_bounds = array<i64: 1, 32>}, {pipeline_mode = #tpu.pipeline_mode<synchronous>, transform_indices = @transform_20, window_bounds = array<i64: 1, 32>}, {pipeline_mode = #tpu.pipeline_mode<synchronous>, transform_indices = @transform_21, window_bounds = array<i64: 32, 128>}, {pipeline_mode = #tpu.pipeline_mode<synchronous>, transform_indices = @transform_22, window_bounds = array<i64: 1, 128>}, {pipeline_mode = #tpu.pipeline_mode<synchronous>, transform_indices = @transform_23, window_bounds = array<i64: 128, 32>}, {pipeline_mode = #tpu.pipeline_mode<synchronous>, transform_indices = @transform_24, window_bounds = array<i64: 1, 32>}, {pipeline_mode = #tpu.pipeline_mode<synchronous>, transform_indices = @transform_25, window_bounds = array<i64: 1, 32>}, {pipeline_mode = #tpu.pipeline_mode<synchronous>, transform_indices = @transform_26, window_bounds = array<i64: 1, 32>}, {pipeline_mode = #tpu.pipeline_mode<synchronous>, transform_indices = @transform_27, window_bounds = array<i64: 32, 128>}, {pipeline_mode = #tpu.pipeline_mode<synchronous>, transform_indices = @transform_28, window_bounds = array<i64: 1, 128>}, {pipeline_mode = #tpu.pipeline_mode<synchronous>, transform_indices = @transform_29, window_bounds = array<i64: 16, 128>}]} {
    %0 = tpu.iota {dimensions = array<i32: 1>} : vector<16x128xi32>
    %c0 = arith.constant 0 : index
    %c0_0 = arith.constant 0 : index
    %1 = vector.load %arg1[%c0, %c0_0] : memref<16x1xi32, #tpu.memory_space<vmem>>, vector<16x1xi32>
    %2 = vector.broadcast %1 : vector<16x1xi32> to vector<16x128xi32>
    %3 = arith.cmpi eq, %0, %2 : vector<16x128xi32>
    %4 = arith.extui %3 : vector<16x128xi1> to vector<16x128xi32>
    %5 = arith.sitofp %4 : vector<16x128xi32> to vector<16x128xf32>
    %c0_1 = arith.constant 0 : index
    %c0_2 = arith.constant 0 : index
    %6 = vector.load %arg2[%c0_1, %c0_2] : memref<128x32xf32, #tpu.memory_space<vmem>>, vector<128x32xf32>
    %cst = arith.constant dense<0.000000e+00> : vector<16x32xf32>
    %7 = tpu.matmul %5, %6, %cst {dimension_numbers = #tpu.dot_dimension_numbers<[1], [0], [0], [1], [0, 0, 1, 1], [], []>} : vector<16x128xf32>, vector<128x32xf32>, vector<16x32xf32> -> vector<16x32xf32>
    %c0_3 = arith.constant 0 : index
    %c0_4 = arith.constant 0 : index
    %8 = vector.load %arg3[%c0_3, %c0_4] : memref<8x32xf32, #tpu.memory_space<vmem>>, vector<8x32xf32>
    %9 = tpu.concatenate %8, %8 in 0 : vector<8x32xf32>, vector<8x32xf32> -> vector<16x32xf32>
    %10 = arith.addf %7, %9 : vector<16x32xf32>
    %11 = tpu.iota {dimensions = array<i32: 0>} : vector<8x8xi32>
    %12 = tpu.iota {dimensions = array<i32: 1>} : vector<8x8xi32>
    %13 = arith.cmpi sle, %12, %11 : vector<8x8xi32>
    %14 = vector.shape_cast %13 : vector<8x8xi1> to vector<1x8x8xi1>
    %c0_5 = arith.constant 0 : index
    %c0_6 = arith.constant 0 : index
    %15 = vector.load %arg4[%c0_5, %c0_6] : memref<1x32xf32, #tpu.memory_space<vmem>>, vector<1x32xf32>
    %c0_7 = arith.constant 0 : index
    %c0_8 = arith.constant 0 : index
    %16 = vector.load %arg5[%c0_7, %c0_8] : memref<1x32xf32, #tpu.memory_space<vmem>>, vector<1x32xf32>
    %cst_9 = arith.constant dense<0.000000e+00> : vector<16xf32>
    %17 = vector.multi_reduction <add>, %10, %cst_9 [1] : vector<16x32xf32> to vector<16xf32>
    %18 = vector.shape_cast %17 : vector<16xf32> to vector<16x1xf32>
    %cst_10 = arith.constant 3.200000e+01 : f32
    %19 = vector.broadcast %cst_10 : f32 to vector<16x1xf32>
    %20 = arith.divf %18, %19 : vector<16x1xf32>
    %21 = vector.broadcast %20 : vector<16x1xf32> to vector<16x32xf32>
    %22 = arith.subf %10, %21 : vector<16x32xf32>
    %23 = arith.mulf %22, %22 : vector<16x32xf32>
    %cst_11 = arith.constant dense<0.000000e+00> : vector<16xf32>
    %24 = vector.multi_reduction <add>, %23, %cst_11 [1] : vector<16x32xf32> to vector<16xf32>
    %25 = vector.shape_cast %24 : vector<16xf32> to vector<16x1xf32>
    %cst_12 = arith.constant 3.200000e+01 : f32
    %26 = vector.broadcast %cst_12 : f32 to vector<16x1xf32>
    %27 = arith.divf %25, %26 : vector<16x1xf32>
    %28 = vector.broadcast %20 : vector<16x1xf32> to vector<16x32xf32>
    %29 = arith.subf %10, %28 : vector<16x32xf32>
    %cst_13 = arith.constant 9.99999974E-6 : f32
    %30 = vector.broadcast %cst_13 : f32 to vector<16x1xf32>
    %31 = arith.addf %27, %30 : vector<16x1xf32>
    %32 = math.rsqrt %31 : vector<16x1xf32>
    %33 = vector.broadcast %32 : vector<16x1xf32> to vector<16x32xf32>
    %34 = arith.mulf %29, %33 : vector<16x32xf32>
    %35 = vector.broadcast %15 : vector<1x32xf32> to vector<16x32xf32>
    %36 = arith.mulf %34, %35 : vector<16x32xf32>
    %37 = vector.broadcast %16 : vector<1x32xf32> to vector<16x32xf32>
    %38 = arith.addf %36, %37 : vector<16x32xf32>
    %c0_14 = arith.constant 0 : index
    %c0_15 = arith.constant 0 : index
    %39 = vector.load %arg6[%c0_14, %c0_15] : memref<32x96xf32, #tpu.memory_space<vmem>>, vector<32x96xf32>
    %cst_16 = arith.constant dense<0.000000e+00> : vector<16x96xf32>
    %40 = tpu.matmul %38, %39, %cst_16 {dimension_numbers = #tpu.dot_dimension_numbers<[1], [0], [0], [1], [0, 0, 1, 1], [], []>} : vector<16x32xf32>, vector<32x96xf32>, vector<16x96xf32> -> vector<16x96xf32>
    %41 = vector.extract_strided_slice %40 {offsets = [0, 0], sizes = [8, 8], strides = [1, 1]} : vector<16x96xf32> to vector<8x8xf32>
    %42 = vector.extract_strided_slice %40 {offsets = [0, 8], sizes = [8, 8], strides = [1, 1]} : vector<16x96xf32> to vector<8x8xf32>
    %43 = vector.extract_strided_slice %40 {offsets = [0, 16], sizes = [8, 8], strides = [1, 1]} : vector<16x96xf32> to vector<8x8xf32>
    %44 = vector.extract_strided_slice %40 {offsets = [0, 24], sizes = [8, 8], strides = [1, 1]} : vector<16x96xf32> to vector<8x8xf32>
    %45 = vector.extract_strided_slice %40 {offsets = [8, 0], sizes = [8, 8], strides = [1, 1]} : vector<16x96xf32> to vector<8x8xf32>
    %46 = vector.extract_strided_slice %40 {offsets = [8, 8], sizes = [8, 8], strides = [1, 1]} : vector<16x96xf32> to vector<8x8xf32>
    %47 = vector.extract_strided_slice %40 {offsets = [8, 16], sizes = [8, 8], strides = [1, 1]} : vector<16x96xf32> to vector<8x8xf32>
    %48 = vector.extract_strided_slice %40 {offsets = [8, 24], sizes = [8, 8], strides = [1, 1]} : vector<16x96xf32> to vector<8x8xf32>
    %49 = vector.shape_cast %41 : vector<8x8xf32> to vector<1x8x8xf32>
    %50 = vector.shape_cast %42 : vector<8x8xf32> to vector<1x8x8xf32>
    %51 = vector.shape_cast %43 : vector<8x8xf32> to vector<1x8x8xf32>
    %52 = vector.shape_cast %44 : vector<8x8xf32> to vector<1x8x8xf32>
    %53 = vector.shape_cast %45 : vector<8x8xf32> to vector<1x8x8xf32>
    %54 = vector.shape_cast %46 : vector<8x8xf32> to vector<1x8x8xf32>
    %55 = vector.shape_cast %47 : vector<8x8xf32> to vector<1x8x8xf32>
    %56 = vector.shape_cast %48 : vector<8x8xf32> to vector<1x8x8xf32>
    %57 = tpu.concatenate %49, %50, %51, %52, %53, %54, %55, %56 in 0 : vector<1x8x8xf32>, vector<1x8x8xf32>, vector<1x8x8xf32>, vector<1x8x8xf32>, vector<1x8x8xf32>, vector<1x8x8xf32>, vector<1x8x8xf32>, vector<1x8x8xf32> -> vector<8x8x8xf32>
    %58 = vector.extract_strided_slice %40 {offsets = [0, 32], sizes = [8, 8], strides = [1, 1]} : vector<16x96xf32> to vector<8x8xf32>
    %59 = vector.extract_strided_slice %40 {offsets = [0, 40], sizes = [8, 8], strides = [1, 1]} : vector<16x96xf32> to vector<8x8xf32>
    %60 = vector.extract_strided_slice %40 {offsets = [0, 48], sizes = [8, 8], strides = [1, 1]} : vector<16x96xf32> to vector<8x8xf32>
    %61 = vector.extract_strided_slice %40 {offsets = [0, 56], sizes = [8, 8], strides = [1, 1]} : vector<16x96xf32> to vector<8x8xf32>
    %62 = vector.extract_strided_slice %40 {offsets = [8, 32], sizes = [8, 8], strides = [1, 1]} : vector<16x96xf32> to vector<8x8xf32>
    %63 = vector.extract_strided_slice %40 {offsets = [8, 40], sizes = [8, 8], strides = [1, 1]} : vector<16x96xf32> to vector<8x8xf32>
    %64 = vector.extract_strided_slice %40 {offsets = [8, 48], sizes = [8, 8], strides = [1, 1]} : vector<16x96xf32> to vector<8x8xf32>
    %65 = vector.extract_strided_slice %40 {offsets = [8, 56], sizes = [8, 8], strides = [1, 1]} : vector<16x96xf32> to vector<8x8xf32>
    %66 = vector.shape_cast %58 : vector<8x8xf32> to vector<1x8x8xf32>
    %67 = vector.shape_cast %59 : vector<8x8xf32> to vector<1x8x8xf32>
    %68 = vector.shape_cast %60 : vector<8x8xf32> to vector<1x8x8xf32>
    %69 = vector.shape_cast %61 : vector<8x8xf32> to vector<1x8x8xf32>
    %70 = vector.shape_cast %62 : vector<8x8xf32> to vector<1x8x8xf32>
    %71 = vector.shape_cast %63 : vector<8x8xf32> to vector<1x8x8xf32>
    %72 = vector.shape_cast %64 : vector<8x8xf32> to vector<1x8x8xf32>
    %73 = vector.shape_cast %65 : vector<8x8xf32> to vector<1x8x8xf32>
    %74 = tpu.concatenate %66, %67, %68, %69, %70, %71, %72, %73 in 0 : vector<1x8x8xf32>, vector<1x8x8xf32>, vector<1x8x8xf32>, vector<1x8x8xf32>, vector<1x8x8xf32>, vector<1x8x8xf32>, vector<1x8x8xf32>, vector<1x8x8xf32> -> vector<8x8x8xf32>
    %75 = vector.extract_strided_slice %40 {offsets = [0, 64], sizes = [8, 8], strides = [1, 1]} : vector<16x96xf32> to vector<8x8xf32>
    %76 = vector.extract_strided_slice %40 {offsets = [0, 72], sizes = [8, 8], strides = [1, 1]} : vector<16x96xf32> to vector<8x8xf32>
    %77 = vector.extract_strided_slice %40 {offsets = [0, 80], sizes = [8, 8], strides = [1, 1]} : vector<16x96xf32> to vector<8x8xf32>
    %78 = vector.extract_strided_slice %40 {offsets = [0, 88], sizes = [8, 8], strides = [1, 1]} : vector<16x96xf32> to vector<8x8xf32>
    %79 = vector.extract_strided_slice %40 {offsets = [8, 64], sizes = [8, 8], strides = [1, 1]} : vector<16x96xf32> to vector<8x8xf32>
    %80 = vector.extract_strided_slice %40 {offsets = [8, 72], sizes = [8, 8], strides = [1, 1]} : vector<16x96xf32> to vector<8x8xf32>
    %81 = vector.extract_strided_slice %40 {offsets = [8, 80], sizes = [8, 8], strides = [1, 1]} : vector<16x96xf32> to vector<8x8xf32>
    %82 = vector.extract_strided_slice %40 {offsets = [8, 88], sizes = [8, 8], strides = [1, 1]} : vector<16x96xf32> to vector<8x8xf32>
    %83 = vector.shape_cast %75 : vector<8x8xf32> to vector<1x8x8xf32>
    %84 = vector.shape_cast %76 : vector<8x8xf32> to vector<1x8x8xf32>
    %85 = vector.shape_cast %77 : vector<8x8xf32> to vector<1x8x8xf32>
    %86 = vector.shape_cast %78 : vector<8x8xf32> to vector<1x8x8xf32>
    %87 = vector.shape_cast %79 : vector<8x8xf32> to vector<1x8x8xf32>
    %88 = vector.shape_cast %80 : vector<8x8xf32> to vector<1x8x8xf32>
    %89 = vector.shape_cast %81 : vector<8x8xf32> to vector<1x8x8xf32>
    %90 = vector.shape_cast %82 : vector<8x8xf32> to vector<1x8x8xf32>
    %91 = tpu.concatenate %83, %84, %85, %86, %87, %88, %89, %90 in 0 : vector<1x8x8xf32>, vector<1x8x8xf32>, vector<1x8x8xf32>, vector<1x8x8xf32>, vector<1x8x8xf32>, vector<1x8x8xf32>, vector<1x8x8xf32>, vector<1x8x8xf32> -> vector<8x8x8xf32>
    "tpu.trace_start"() <{level = 10 : i32, message = "gtd,gsd->gts"}> : () -> ()
    %cst_17 = arith.constant dense<0.000000e+00> : vector<8x8x8xf32>
    %92 = tpu.matmul %57, %74, %cst_17 {dimension_numbers = #tpu.dot_dimension_numbers<[2], [2], [1], [1], [0, 0, 0, 1, 1, 1], [0], [0]>} : vector<8x8x8xf32>, vector<8x8x8xf32>, vector<8x8x8xf32> -> vector<8x8x8xf32>
    "tpu.trace_stop"() : () -> ()
    %cst_18 = arith.constant 0.176776692 : f32
    %93 = vector.broadcast %cst_18 : f32 to vector<8x8x8xf32>
    %94 = arith.mulf %92, %93 : vector<8x8x8xf32>
    %cst_19 = arith.constant 0xFF800000 : f32
    %95 = vector.shape_cast %14 : vector<1x8x8xi1> to vector<1x8x8xi1>
    %96 = vector.broadcast %95 : vector<1x8x8xi1> to vector<8x8x8xi1>
    %97 = vector.broadcast %cst_19 : f32 to vector<8x8x8xf32>
    %98 = arith.select %96, %94, %97 : vector<8x8x8xi1>, vector<8x8x8xf32>
    %cst_20 = arith.constant dense<0xFF800000> : vector<8x8xf32>
    %99 = vector.multi_reduction <maximumf>, %98, %cst_20 [2] : vector<8x8x8xf32> to vector<8x8xf32>
    %100 = vector.shape_cast %99 : vector<8x8xf32> to vector<8x8x1xf32>
    %101 = vector.broadcast %100 : vector<8x8x1xf32> to vector<8x8x8xf32>
    %102 = arith.subf %98, %101 : vector<8x8x8xf32>
    %103 = math.exp %102 : vector<8x8x8xf32>
    %cst_21 = arith.constant dense<0.000000e+00> : vector<8x8xf32>
    %104 = vector.multi_reduction <add>, %103, %cst_21 [2] : vector<8x8x8xf32> to vector<8x8xf32>
    %105 = vector.shape_cast %104 : vector<8x8xf32> to vector<8x8x1xf32>
    %106 = tpu.reciprocal %105 {approx = true} : vector<8x8x1xf32> -> vector<8x8x1xf32>
    %107 = vector.broadcast %106 : vector<8x8x1xf32> to vector<8x8x8xf32>
    %108 = arith.mulf %103, %107 : vector<8x8x8xf32>
    "tpu.trace_start"() <{level = 10 : i32, message = "gts,gsd->gtd"}> : () -> ()
    %cst_22 = arith.constant dense<0.000000e+00> : vector<8x8x8xf32>
    %109 = tpu.matmul %108, %91, %cst_22 {dimension_numbers = #tpu.dot_dimension_numbers<[2], [1], [1], [2], [0, 0, 0, 1, 1, 2], [0], [0]>} : vector<8x8x8xf32>, vector<8x8x8xf32>, vector<8x8x8xf32> -> vector<8x8x8xf32>
    "tpu.trace_stop"() : () -> ()
    %110 = vector.extract_strided_slice %109 {offsets = [0, 0, 0], sizes = [1, 8, 8], strides = [1, 1, 1]} : vector<8x8x8xf32> to vector<1x8x8xf32>
    %111 = vector.shape_cast %110 : vector<1x8x8xf32> to vector<8x8xf32>
    %112 = vector.extract_strided_slice %109 {offsets = [1, 0, 0], sizes = [1, 8, 8], strides = [1, 1, 1]} : vector<8x8x8xf32> to vector<1x8x8xf32>
    %113 = vector.shape_cast %112 : vector<1x8x8xf32> to vector<8x8xf32>
    %114 = vector.extract_strided_slice %109 {offsets = [2, 0, 0], sizes = [1, 8, 8], strides = [1, 1, 1]} : vector<8x8x8xf32> to vector<1x8x8xf32>
    %115 = vector.shape_cast %114 : vector<1x8x8xf32> to vector<8x8xf32>
    %116 = vector.extract_strided_slice %109 {offsets = [3, 0, 0], sizes = [1, 8, 8], strides = [1, 1, 1]} : vector<8x8x8xf32> to vector<1x8x8xf32>
    %117 = vector.shape_cast %116 : vector<1x8x8xf32> to vector<8x8xf32>
    %118 = tpu.concatenate %111, %113, %115, %117 in 1 : vector<8x8xf32>, vector<8x8xf32>, vector<8x8xf32>, vector<8x8xf32> -> vector<8x32xf32>
    %119 = vector.extract_strided_slice %109 {offsets = [4, 0, 0], sizes = [1, 8, 8], strides = [1, 1, 1]} : vector<8x8x8xf32> to vector<1x8x8xf32>
    %120 = vector.shape_cast %119 : vector<1x8x8xf32> to vector<8x8xf32>
    %121 = vector.extract_strided_slice %109 {offsets = [5, 0, 0], sizes = [1, 8, 8], strides = [1, 1, 1]} : vector<8x8x8xf32> to vector<1x8x8xf32>
    %122 = vector.shape_cast %121 : vector<1x8x8xf32> to vector<8x8xf32>
    %123 = vector.extract_strided_slice %109 {offsets = [6, 0, 0], sizes = [1, 8, 8], strides = [1, 1, 1]} : vector<8x8x8xf32> to vector<1x8x8xf32>
    %124 = vector.shape_cast %123 : vector<1x8x8xf32> to vector<8x8xf32>
    %125 = vector.extract_strided_slice %109 {offsets = [7, 0, 0], sizes = [1, 8, 8], strides = [1, 1, 1]} : vector<8x8x8xf32> to vector<1x8x8xf32>
    %126 = vector.shape_cast %125 : vector<1x8x8xf32> to vector<8x8xf32>
    %127 = tpu.concatenate %120, %122, %124, %126 in 1 : vector<8x8xf32>, vector<8x8xf32>, vector<8x8xf32>, vector<8x8xf32> -> vector<8x32xf32>
    %128 = tpu.concatenate %118, %127 in 0 : vector<8x32xf32>, vector<8x32xf32> -> vector<16x32xf32>
    %c0_23 = arith.constant 0 : index
    %c0_24 = arith.constant 0 : index
    %129 = vector.load %arg7[%c0_23, %c0_24] : memref<32x32xf32, #tpu.memory_space<vmem>>, vector<32x32xf32>
    %cst_25 = arith.constant dense<0.000000e+00> : vector<16x32xf32>
    %130 = tpu.matmul %128, %129, %cst_25 {dimension_numbers = #tpu.dot_dimension_numbers<[1], [0], [0], [1], [0, 0, 1, 1], [], []>} : vector<16x32xf32>, vector<32x32xf32>, vector<16x32xf32> -> vector<16x32xf32>
    %131 = arith.addf %10, %130 : vector<16x32xf32>
    %c0_26 = arith.constant 0 : index
    %c0_27 = arith.constant 0 : index
    %132 = vector.load %arg8[%c0_26, %c0_27] : memref<1x32xf32, #tpu.memory_space<vmem>>, vector<1x32xf32>
    %133 = vector.broadcast %132 : vector<1x32xf32> to vector<16x32xf32>
    %134 = arith.addf %131, %133 : vector<16x32xf32>
    %c0_28 = arith.constant 0 : index
    %c0_29 = arith.constant 0 : index
    %135 = vector.load %arg9[%c0_28, %c0_29] : memref<1x32xf32, #tpu.memory_space<vmem>>, vector<1x32xf32>
    %c0_30 = arith.constant 0 : index
    %c0_31 = arith.constant 0 : index
    %136 = vector.load %arg10[%c0_30, %c0_31] : memref<1x32xf32, #tpu.memory_space<vmem>>, vector<1x32xf32>
    %cst_32 = arith.constant dense<0.000000e+00> : vector<16xf32>
    %137 = vector.multi_reduction <add>, %134, %cst_32 [1] : vector<16x32xf32> to vector<16xf32>
    %138 = vector.shape_cast %137 : vector<16xf32> to vector<16x1xf32>
    %cst_33 = arith.constant 3.200000e+01 : f32
    %139 = vector.broadcast %cst_33 : f32 to vector<16x1xf32>
    %140 = arith.divf %138, %139 : vector<16x1xf32>
    %141 = vector.broadcast %140 : vector<16x1xf32> to vector<16x32xf32>
    %142 = arith.subf %134, %141 : vector<16x32xf32>
    %143 = arith.mulf %142, %142 : vector<16x32xf32>
    %cst_34 = arith.constant dense<0.000000e+00> : vector<16xf32>
    %144 = vector.multi_reduction <add>, %143, %cst_34 [1] : vector<16x32xf32> to vector<16xf32>
    %145 = vector.shape_cast %144 : vector<16xf32> to vector<16x1xf32>
    %cst_35 = arith.constant 3.200000e+01 : f32
    %146 = vector.broadcast %cst_35 : f32 to vector<16x1xf32>
    %147 = arith.divf %145, %146 : vector<16x1xf32>
    %148 = vector.broadcast %140 : vector<16x1xf32> to vector<16x32xf32>
    %149 = arith.subf %134, %148 : vector<16x32xf32>
    %cst_36 = arith.constant 9.99999974E-6 : f32
    %150 = vector.broadcast %cst_36 : f32 to vector<16x1xf32>
    %151 = arith.addf %147, %150 : vector<16x1xf32>
    %152 = math.rsqrt %151 : vector<16x1xf32>
    %153 = vector.broadcast %152 : vector<16x1xf32> to vector<16x32xf32>
    %154 = arith.mulf %149, %153 : vector<16x32xf32>
    %155 = vector.broadcast %135 : vector<1x32xf32> to vector<16x32xf32>
    %156 = arith.mulf %154, %155 : vector<16x32xf32>
    %157 = vector.broadcast %136 : vector<1x32xf32> to vector<16x32xf32>
    %158 = arith.addf %156, %157 : vector<16x32xf32>
    %c0_37 = arith.constant 0 : index
    %c0_38 = arith.constant 0 : index
    %159 = vector.load %arg11[%c0_37, %c0_38] : memref<32x128xf32, #tpu.memory_space<vmem>>, vector<32x128xf32>
    %cst_39 = arith.constant dense<0.000000e+00> : vector<16x128xf32>
    %160 = tpu.matmul %158, %159, %cst_39 {dimension_numbers = #tpu.dot_dimension_numbers<[1], [0], [0], [1], [0, 0, 1, 1], [], []>} : vector<16x32xf32>, vector<32x128xf32>, vector<16x128xf32> -> vector<16x128xf32>
    %c0_40 = arith.constant 0 : index
    %c0_41 = arith.constant 0 : index
    %161 = vector.load %arg12[%c0_40, %c0_41] : memref<1x128xf32, #tpu.memory_space<vmem>>, vector<1x128xf32>
    %162 = vector.broadcast %161 : vector<1x128xf32> to vector<16x128xf32>
    %163 = arith.addf %160, %162 : vector<16x128xf32>
    %cst_42 = arith.constant 0.000000e+00 : f32
    %164 = vector.broadcast %cst_42 : f32 to vector<16x128xf32>
    %165 = arith.maximumf %163, %164 : vector<16x128xf32>
    %c0_43 = arith.constant 0 : index
    %c0_44 = arith.constant 0 : index
    %166 = vector.load %arg13[%c0_43, %c0_44] : memref<128x32xf32, #tpu.memory_space<vmem>>, vector<128x32xf32>
    %cst_45 = arith.constant dense<0.000000e+00> : vector<16x32xf32>
    %167 = tpu.matmul %165, %166, %cst_45 {dimension_numbers = #tpu.dot_dimension_numbers<[1], [0], [0], [1], [0, 0, 1, 1], [], []>} : vector<16x128xf32>, vector<128x32xf32>, vector<16x32xf32> -> vector<16x32xf32>
    %168 = arith.addf %134, %167 : vector<16x32xf32>
    %c0_46 = arith.constant 0 : index
    %c0_47 = arith.constant 0 : index
    %169 = vector.load %arg14[%c0_46, %c0_47] : memref<1x32xf32, #tpu.memory_space<vmem>>, vector<1x32xf32>
    %170 = vector.broadcast %169 : vector<1x32xf32> to vector<16x32xf32>
    %171 = arith.addf %168, %170 : vector<16x32xf32>
    %c0_48 = arith.constant 0 : index
    %c0_49 = arith.constant 0 : index
    %172 = vector.load %arg15[%c0_48, %c0_49] : memref<1x32xf32, #tpu.memory_space<vmem>>, vector<1x32xf32>
    %c0_50 = arith.constant 0 : index
    %c0_51 = arith.constant 0 : index
    %173 = vector.load %arg16[%c0_50, %c0_51] : memref<1x32xf32, #tpu.memory_space<vmem>>, vector<1x32xf32>
    %cst_52 = arith.constant dense<0.000000e+00> : vector<16xf32>
    %174 = vector.multi_reduction <add>, %171, %cst_52 [1] : vector<16x32xf32> to vector<16xf32>
    %175 = vector.shape_cast %174 : vector<16xf32> to vector<16x1xf32>
    %cst_53 = arith.constant 3.200000e+01 : f32
    %176 = vector.broadcast %cst_53 : f32 to vector<16x1xf32>
    %177 = arith.divf %175, %176 : vector<16x1xf32>
    %178 = vector.broadcast %177 : vector<16x1xf32> to vector<16x32xf32>
    %179 = arith.subf %171, %178 : vector<16x32xf32>
    %180 = arith.mulf %179, %179 : vector<16x32xf32>
    %cst_54 = arith.constant dense<0.000000e+00> : vector<16xf32>
    %181 = vector.multi_reduction <add>, %180, %cst_54 [1] : vector<16x32xf32> to vector<16xf32>
    %182 = vector.shape_cast %181 : vector<16xf32> to vector<16x1xf32>
    %cst_55 = arith.constant 3.200000e+01 : f32
    %183 = vector.broadcast %cst_55 : f32 to vector<16x1xf32>
    %184 = arith.divf %182, %183 : vector<16x1xf32>
    %185 = vector.broadcast %177 : vector<16x1xf32> to vector<16x32xf32>
    %186 = arith.subf %171, %185 : vector<16x32xf32>
    %cst_56 = arith.constant 9.99999974E-6 : f32
    %187 = vector.broadcast %cst_56 : f32 to vector<16x1xf32>
    %188 = arith.addf %184, %187 : vector<16x1xf32>
    %189 = math.rsqrt %188 : vector<16x1xf32>
    %190 = vector.broadcast %189 : vector<16x1xf32> to vector<16x32xf32>
    %191 = arith.mulf %186, %190 : vector<16x32xf32>
    %192 = vector.broadcast %172 : vector<1x32xf32> to vector<16x32xf32>
    %193 = arith.mulf %191, %192 : vector<16x32xf32>
    %194 = vector.broadcast %173 : vector<1x32xf32> to vector<16x32xf32>
    %195 = arith.addf %193, %194 : vector<16x32xf32>
    %c0_57 = arith.constant 0 : index
    %c0_58 = arith.constant 0 : index
    %196 = vector.load %arg17[%c0_57, %c0_58] : memref<32x96xf32, #tpu.memory_space<vmem>>, vector<32x96xf32>
    %cst_59 = arith.constant dense<0.000000e+00> : vector<16x96xf32>
    %197 = tpu.matmul %195, %196, %cst_59 {dimension_numbers = #tpu.dot_dimension_numbers<[1], [0], [0], [1], [0, 0, 1, 1], [], []>} : vector<16x32xf32>, vector<32x96xf32>, vector<16x96xf32> -> vector<16x96xf32>
    %198 = vector.extract_strided_slice %197 {offsets = [0, 0], sizes = [8, 8], strides = [1, 1]} : vector<16x96xf32> to vector<8x8xf32>
    %199 = vector.extract_strided_slice %197 {offsets = [0, 8], sizes = [8, 8], strides = [1, 1]} : vector<16x96xf32> to vector<8x8xf32>
    %200 = vector.extract_strided_slice %197 {offsets = [0, 16], sizes = [8, 8], strides = [1, 1]} : vector<16x96xf32> to vector<8x8xf32>
    %201 = vector.extract_strided_slice %197 {offsets = [0, 24], sizes = [8, 8], strides = [1, 1]} : vector<16x96xf32> to vector<8x8xf32>
    %202 = vector.extract_strided_slice %197 {offsets = [8, 0], sizes = [8, 8], strides = [1, 1]} : vector<16x96xf32> to vector<8x8xf32>
    %203 = vector.extract_strided_slice %197 {offsets = [8, 8], sizes = [8, 8], strides = [1, 1]} : vector<16x96xf32> to vector<8x8xf32>
    %204 = vector.extract_strided_slice %197 {offsets = [8, 16], sizes = [8, 8], strides = [1, 1]} : vector<16x96xf32> to vector<8x8xf32>
    %205 = vector.extract_strided_slice %197 {offsets = [8, 24], sizes = [8, 8], strides = [1, 1]} : vector<16x96xf32> to vector<8x8xf32>
    %206 = vector.shape_cast %198 : vector<8x8xf32> to vector<1x8x8xf32>
    %207 = vector.shape_cast %199 : vector<8x8xf32> to vector<1x8x8xf32>
    %208 = vector.shape_cast %200 : vector<8x8xf32> to vector<1x8x8xf32>
    %209 = vector.shape_cast %201 : vector<8x8xf32> to vector<1x8x8xf32>
    %210 = vector.shape_cast %202 : vector<8x8xf32> to vector<1x8x8xf32>
    %211 = vector.shape_cast %203 : vector<8x8xf32> to vector<1x8x8xf32>
    %212 = vector.shape_cast %204 : vector<8x8xf32> to vector<1x8x8xf32>
    %213 = vector.shape_cast %205 : vector<8x8xf32> to vector<1x8x8xf32>
    %214 = tpu.concatenate %206, %207, %208, %209, %210, %211, %212, %213 in 0 : vector<1x8x8xf32>, vector<1x8x8xf32>, vector<1x8x8xf32>, vector<1x8x8xf32>, vector<1x8x8xf32>, vector<1x8x8xf32>, vector<1x8x8xf32>, vector<1x8x8xf32> -> vector<8x8x8xf32>
    %215 = vector.extract_strided_slice %197 {offsets = [0, 32], sizes = [8, 8], strides = [1, 1]} : vector<16x96xf32> to vector<8x8xf32>
    %216 = vector.extract_strided_slice %197 {offsets = [0, 40], sizes = [8, 8], strides = [1, 1]} : vector<16x96xf32> to vector<8x8xf32>
    %217 = vector.extract_strided_slice %197 {offsets = [0, 48], sizes = [8, 8], strides = [1, 1]} : vector<16x96xf32> to vector<8x8xf32>
    %218 = vector.extract_strided_slice %197 {offsets = [0, 56], sizes = [8, 8], strides = [1, 1]} : vector<16x96xf32> to vector<8x8xf32>
    %219 = vector.extract_strided_slice %197 {offsets = [8, 32], sizes = [8, 8], strides = [1, 1]} : vector<16x96xf32> to vector<8x8xf32>
    %220 = vector.extract_strided_slice %197 {offsets = [8, 40], sizes = [8, 8], strides = [1, 1]} : vector<16x96xf32> to vector<8x8xf32>
    %221 = vector.extract_strided_slice %197 {offsets = [8, 48], sizes = [8, 8], strides = [1, 1]} : vector<16x96xf32> to vector<8x8xf32>
    %222 = vector.extract_strided_slice %197 {offsets = [8, 56], sizes = [8, 8], strides = [1, 1]} : vector<16x96xf32> to vector<8x8xf32>
    %223 = vector.shape_cast %215 : vector<8x8xf32> to vector<1x8x8xf32>
    %224 = vector.shape_cast %216 : vector<8x8xf32> to vector<1x8x8xf32>
    %225 = vector.shape_cast %217 : vector<8x8xf32> to vector<1x8x8xf32>
    %226 = vector.shape_cast %218 : vector<8x8xf32> to vector<1x8x8xf32>
    %227 = vector.shape_cast %219 : vector<8x8xf32> to vector<1x8x8xf32>
    %228 = vector.shape_cast %220 : vector<8x8xf32> to vector<1x8x8xf32>
    %229 = vector.shape_cast %221 : vector<8x8xf32> to vector<1x8x8xf32>
    %230 = vector.shape_cast %222 : vector<8x8xf32> to vector<1x8x8xf32>
    %231 = tpu.concatenate %223, %224, %225, %226, %227, %228, %229, %230 in 0 : vector<1x8x8xf32>, vector<1x8x8xf32>, vector<1x8x8xf32>, vector<1x8x8xf32>, vector<1x8x8xf32>, vector<1x8x8xf32>, vector<1x8x8xf32>, vector<1x8x8xf32> -> vector<8x8x8xf32>
    %232 = vector.extract_strided_slice %197 {offsets = [0, 64], sizes = [8, 8], strides = [1, 1]} : vector<16x96xf32> to vector<8x8xf32>
    %233 = vector.extract_strided_slice %197 {offsets = [0, 72], sizes = [8, 8], strides = [1, 1]} : vector<16x96xf32> to vector<8x8xf32>
    %234 = vector.extract_strided_slice %197 {offsets = [0, 80], sizes = [8, 8], strides = [1, 1]} : vector<16x96xf32> to vector<8x8xf32>
    %235 = vector.extract_strided_slice %197 {offsets = [0, 88], sizes = [8, 8], strides = [1, 1]} : vector<16x96xf32> to vector<8x8xf32>
    %236 = vector.extract_strided_slice %197 {offsets = [8, 64], sizes = [8, 8], strides = [1, 1]} : vector<16x96xf32> to vector<8x8xf32>
    %237 = vector.extract_strided_slice %197 {offsets = [8, 72], sizes = [8, 8], strides = [1, 1]} : vector<16x96xf32> to vector<8x8xf32>
    %238 = vector.extract_strided_slice %197 {offsets = [8, 80], sizes = [8, 8], strides = [1, 1]} : vector<16x96xf32> to vector<8x8xf32>
    %239 = vector.extract_strided_slice %197 {offsets = [8, 88], sizes = [8, 8], strides = [1, 1]} : vector<16x96xf32> to vector<8x8xf32>
    %240 = vector.shape_cast %232 : vector<8x8xf32> to vector<1x8x8xf32>
    %241 = vector.shape_cast %233 : vector<8x8xf32> to vector<1x8x8xf32>
    %242 = vector.shape_cast %234 : vector<8x8xf32> to vector<1x8x8xf32>
    %243 = vector.shape_cast %235 : vector<8x8xf32> to vector<1x8x8xf32>
    %244 = vector.shape_cast %236 : vector<8x8xf32> to vector<1x8x8xf32>
    %245 = vector.shape_cast %237 : vector<8x8xf32> to vector<1x8x8xf32>
    %246 = vector.shape_cast %238 : vector<8x8xf32> to vector<1x8x8xf32>
    %247 = vector.shape_cast %239 : vector<8x8xf32> to vector<1x8x8xf32>
    %248 = tpu.concatenate %240, %241, %242, %243, %244, %245, %246, %247 in 0 : vector<1x8x8xf32>, vector<1x8x8xf32>, vector<1x8x8xf32>, vector<1x8x8xf32>, vector<1x8x8xf32>, vector<1x8x8xf32>, vector<1x8x8xf32>, vector<1x8x8xf32> -> vector<8x8x8xf32>
    "tpu.trace_start"() <{level = 10 : i32, message = "gtd,gsd->gts"}> : () -> ()
    %cst_60 = arith.constant dense<0.000000e+00> : vector<8x8x8xf32>
    %249 = tpu.matmul %214, %231, %cst_60 {dimension_numbers = #tpu.dot_dimension_numbers<[2], [2], [1], [1], [0, 0, 0, 1, 1, 1], [0], [0]>} : vector<8x8x8xf32>, vector<8x8x8xf32>, vector<8x8x8xf32> -> vector<8x8x8xf32>
    "tpu.trace_stop"() : () -> ()
    %cst_61 = arith.constant 0.176776692 : f32
    %250 = vector.broadcast %cst_61 : f32 to vector<8x8x8xf32>
    %251 = arith.mulf %249, %250 : vector<8x8x8xf32>
    %cst_62 = arith.constant 0xFF800000 : f32
    %252 = vector.shape_cast %14 : vector<1x8x8xi1> to vector<1x8x8xi1>
    %253 = vector.broadcast %252 : vector<1x8x8xi1> to vector<8x8x8xi1>
    %254 = vector.broadcast %cst_62 : f32 to vector<8x8x8xf32>
    %255 = arith.select %253, %251, %254 : vector<8x8x8xi1>, vector<8x8x8xf32>
    %cst_63 = arith.constant dense<0xFF800000> : vector<8x8xf32>
    %256 = vector.multi_reduction <maximumf>, %255, %cst_63 [2] : vector<8x8x8xf32> to vector<8x8xf32>
    %257 = vector.shape_cast %256 : vector<8x8xf32> to vector<8x8x1xf32>
    %258 = vector.broadcast %257 : vector<8x8x1xf32> to vector<8x8x8xf32>
    %259 = arith.subf %255, %258 : vector<8x8x8xf32>
    %260 = math.exp %259 : vector<8x8x8xf32>
    %cst_64 = arith.constant dense<0.000000e+00> : vector<8x8xf32>
    %261 = vector.multi_reduction <add>, %260, %cst_64 [2] : vector<8x8x8xf32> to vector<8x8xf32>
    %262 = vector.shape_cast %261 : vector<8x8xf32> to vector<8x8x1xf32>
    %263 = tpu.reciprocal %262 {approx = true} : vector<8x8x1xf32> -> vector<8x8x1xf32>
    %264 = vector.broadcast %263 : vector<8x8x1xf32> to vector<8x8x8xf32>
    %265 = arith.mulf %260, %264 : vector<8x8x8xf32>
    "tpu.trace_start"() <{level = 10 : i32, message = "gts,gsd->gtd"}> : () -> ()
    %cst_65 = arith.constant dense<0.000000e+00> : vector<8x8x8xf32>
    %266 = tpu.matmul %265, %248, %cst_65 {dimension_numbers = #tpu.dot_dimension_numbers<[2], [1], [1], [2], [0, 0, 0, 1, 1, 2], [0], [0]>} : vector<8x8x8xf32>, vector<8x8x8xf32>, vector<8x8x8xf32> -> vector<8x8x8xf32>
    "tpu.trace_stop"() : () -> ()
    %267 = vector.extract_strided_slice %266 {offsets = [0, 0, 0], sizes = [1, 8, 8], strides = [1, 1, 1]} : vector<8x8x8xf32> to vector<1x8x8xf32>
    %268 = vector.shape_cast %267 : vector<1x8x8xf32> to vector<8x8xf32>
    %269 = vector.extract_strided_slice %266 {offsets = [1, 0, 0], sizes = [1, 8, 8], strides = [1, 1, 1]} : vector<8x8x8xf32> to vector<1x8x8xf32>
    %270 = vector.shape_cast %269 : vector<1x8x8xf32> to vector<8x8xf32>
    %271 = vector.extract_strided_slice %266 {offsets = [2, 0, 0], sizes = [1, 8, 8], strides = [1, 1, 1]} : vector<8x8x8xf32> to vector<1x8x8xf32>
    %272 = vector.shape_cast %271 : vector<1x8x8xf32> to vector<8x8xf32>
    %273 = vector.extract_strided_slice %266 {offsets = [3, 0, 0], sizes = [1, 8, 8], strides = [1, 1, 1]} : vector<8x8x8xf32> to vector<1x8x8xf32>
    %274 = vector.shape_cast %273 : vector<1x8x8xf32> to vector<8x8xf32>
    %275 = tpu.concatenate %268, %270, %272, %274 in 1 : vector<8x8xf32>, vector<8x8xf32>, vector<8x8xf32>, vector<8x8xf32> -> vector<8x32xf32>
    %276 = vector.extract_strided_slice %266 {offsets = [4, 0, 0], sizes = [1, 8, 8], strides = [1, 1, 1]} : vector<8x8x8xf32> to vector<1x8x8xf32>
    %277 = vector.shape_cast %276 : vector<1x8x8xf32> to vector<8x8xf32>
    %278 = vector.extract_strided_slice %266 {offsets = [5, 0, 0], sizes = [1, 8, 8], strides = [1, 1, 1]} : vector<8x8x8xf32> to vector<1x8x8xf32>
    %279 = vector.shape_cast %278 : vector<1x8x8xf32> to vector<8x8xf32>
    %280 = vector.extract_strided_slice %266 {offsets = [6, 0, 0], sizes = [1, 8, 8], strides = [1, 1, 1]} : vector<8x8x8xf32> to vector<1x8x8xf32>
    %281 = vector.shape_cast %280 : vector<1x8x8xf32> to vector<8x8xf32>
    %282 = vector.extract_strided_slice %266 {offsets = [7, 0, 0], sizes = [1, 8, 8], strides = [1, 1, 1]} : vector<8x8x8xf32> to vector<1x8x8xf32>
    %283 = vector.shape_cast %282 : vector<1x8x8xf32> to vector<8x8xf32>
    %284 = tpu.concatenate %277, %279, %281, %283 in 1 : vector<8x8xf32>, vector<8x8xf32>, vector<8x8xf32>, vector<8x8xf32> -> vector<8x32xf32>
    %285 = tpu.concatenate %275, %284 in 0 : vector<8x32xf32>, vector<8x32xf32> -> vector<16x32xf32>
    %c0_66 = arith.constant 0 : index
    %c0_67 = arith.constant 0 : index
    %286 = vector.load %arg18[%c0_66, %c0_67] : memref<32x32xf32, #tpu.memory_space<vmem>>, vector<32x32xf32>
    %cst_68 = arith.constant dense<0.000000e+00> : vector<16x32xf32>
    %287 = tpu.matmul %285, %286, %cst_68 {dimension_numbers = #tpu.dot_dimension_numbers<[1], [0], [0], [1], [0, 0, 1, 1], [], []>} : vector<16x32xf32>, vector<32x32xf32>, vector<16x32xf32> -> vector<16x32xf32>
    %288 = arith.addf %171, %287 : vector<16x32xf32>
    %c0_69 = arith.constant 0 : index
    %c0_70 = arith.constant 0 : index
    %289 = vector.load %arg19[%c0_69, %c0_70] : memref<1x32xf32, #tpu.memory_space<vmem>>, vector<1x32xf32>
    %290 = vector.broadcast %289 : vector<1x32xf32> to vector<16x32xf32>
    %291 = arith.addf %288, %290 : vector<16x32xf32>
    %c0_71 = arith.constant 0 : index
    %c0_72 = arith.constant 0 : index
    %292 = vector.load %arg20[%c0_71, %c0_72] : memref<1x32xf32, #tpu.memory_space<vmem>>, vector<1x32xf32>
    %c0_73 = arith.constant 0 : index
    %c0_74 = arith.constant 0 : index
    %293 = vector.load %arg21[%c0_73, %c0_74] : memref<1x32xf32, #tpu.memory_space<vmem>>, vector<1x32xf32>
    %cst_75 = arith.constant dense<0.000000e+00> : vector<16xf32>
    %294 = vector.multi_reduction <add>, %291, %cst_75 [1] : vector<16x32xf32> to vector<16xf32>
    %295 = vector.shape_cast %294 : vector<16xf32> to vector<16x1xf32>
    %cst_76 = arith.constant 3.200000e+01 : f32
    %296 = vector.broadcast %cst_76 : f32 to vector<16x1xf32>
    %297 = arith.divf %295, %296 : vector<16x1xf32>
    %298 = vector.broadcast %297 : vector<16x1xf32> to vector<16x32xf32>
    %299 = arith.subf %291, %298 : vector<16x32xf32>
    %300 = arith.mulf %299, %299 : vector<16x32xf32>
    %cst_77 = arith.constant dense<0.000000e+00> : vector<16xf32>
    %301 = vector.multi_reduction <add>, %300, %cst_77 [1] : vector<16x32xf32> to vector<16xf32>
    %302 = vector.shape_cast %301 : vector<16xf32> to vector<16x1xf32>
    %cst_78 = arith.constant 3.200000e+01 : f32
    %303 = vector.broadcast %cst_78 : f32 to vector<16x1xf32>
    %304 = arith.divf %302, %303 : vector<16x1xf32>
    %305 = vector.broadcast %297 : vector<16x1xf32> to vector<16x32xf32>
    %306 = arith.subf %291, %305 : vector<16x32xf32>
    %cst_79 = arith.constant 9.99999974E-6 : f32
    %307 = vector.broadcast %cst_79 : f32 to vector<16x1xf32>
    %308 = arith.addf %304, %307 : vector<16x1xf32>
    %309 = math.rsqrt %308 : vector<16x1xf32>
    %310 = vector.broadcast %309 : vector<16x1xf32> to vector<16x32xf32>
    %311 = arith.mulf %306, %310 : vector<16x32xf32>
    %312 = vector.broadcast %292 : vector<1x32xf32> to vector<16x32xf32>
    %313 = arith.mulf %311, %312 : vector<16x32xf32>
    %314 = vector.broadcast %293 : vector<1x32xf32> to vector<16x32xf32>
    %315 = arith.addf %313, %314 : vector<16x32xf32>
    %c0_80 = arith.constant 0 : index
    %c0_81 = arith.constant 0 : index
    %316 = vector.load %arg22[%c0_80, %c0_81] : memref<32x128xf32, #tpu.memory_space<vmem>>, vector<32x128xf32>
    %cst_82 = arith.constant dense<0.000000e+00> : vector<16x128xf32>
    %317 = tpu.matmul %315, %316, %cst_82 {dimension_numbers = #tpu.dot_dimension_numbers<[1], [0], [0], [1], [0, 0, 1, 1], [], []>} : vector<16x32xf32>, vector<32x128xf32>, vector<16x128xf32> -> vector<16x128xf32>
    %c0_83 = arith.constant 0 : index
    %c0_84 = arith.constant 0 : index
    %318 = vector.load %arg23[%c0_83, %c0_84] : memref<1x128xf32, #tpu.memory_space<vmem>>, vector<1x128xf32>
    %319 = vector.broadcast %318 : vector<1x128xf32> to vector<16x128xf32>
    %320 = arith.addf %317, %319 : vector<16x128xf32>
    %cst_85 = arith.constant 0.000000e+00 : f32
    %321 = vector.broadcast %cst_85 : f32 to vector<16x128xf32>
    %322 = arith.maximumf %320, %321 : vector<16x128xf32>
    %c0_86 = arith.constant 0 : index
    %c0_87 = arith.constant 0 : index
    %323 = vector.load %arg24[%c0_86, %c0_87] : memref<128x32xf32, #tpu.memory_space<vmem>>, vector<128x32xf32>
    %cst_88 = arith.constant dense<0.000000e+00> : vector<16x32xf32>
    %324 = tpu.matmul %322, %323, %cst_88 {dimension_numbers = #tpu.dot_dimension_numbers<[1], [0], [0], [1], [0, 0, 1, 1], [], []>} : vector<16x128xf32>, vector<128x32xf32>, vector<16x32xf32> -> vector<16x32xf32>
    %325 = arith.addf %291, %324 : vector<16x32xf32>
    %c0_89 = arith.constant 0 : index
    %c0_90 = arith.constant 0 : index
    %326 = vector.load %arg25[%c0_89, %c0_90] : memref<1x32xf32, #tpu.memory_space<vmem>>, vector<1x32xf32>
    %327 = vector.broadcast %326 : vector<1x32xf32> to vector<16x32xf32>
    %328 = arith.addf %325, %327 : vector<16x32xf32>
    %c0_91 = arith.constant 0 : index
    %c0_92 = arith.constant 0 : index
    %329 = vector.load %arg26[%c0_91, %c0_92] : memref<1x32xf32, #tpu.memory_space<vmem>>, vector<1x32xf32>
    %c0_93 = arith.constant 0 : index
    %c0_94 = arith.constant 0 : index
    %330 = vector.load %arg27[%c0_93, %c0_94] : memref<1x32xf32, #tpu.memory_space<vmem>>, vector<1x32xf32>
    %cst_95 = arith.constant dense<0.000000e+00> : vector<16xf32>
    %331 = vector.multi_reduction <add>, %328, %cst_95 [1] : vector<16x32xf32> to vector<16xf32>
    %332 = vector.shape_cast %331 : vector<16xf32> to vector<16x1xf32>
    %cst_96 = arith.constant 3.200000e+01 : f32
    %333 = vector.broadcast %cst_96 : f32 to vector<16x1xf32>
    %334 = arith.divf %332, %333 : vector<16x1xf32>
    %335 = vector.broadcast %334 : vector<16x1xf32> to vector<16x32xf32>
    %336 = arith.subf %328, %335 : vector<16x32xf32>
    %337 = arith.mulf %336, %336 : vector<16x32xf32>
    %cst_97 = arith.constant dense<0.000000e+00> : vector<16xf32>
    %338 = vector.multi_reduction <add>, %337, %cst_97 [1] : vector<16x32xf32> to vector<16xf32>
    %339 = vector.shape_cast %338 : vector<16xf32> to vector<16x1xf32>
    %cst_98 = arith.constant 3.200000e+01 : f32
    %340 = vector.broadcast %cst_98 : f32 to vector<16x1xf32>
    %341 = arith.divf %339, %340 : vector<16x1xf32>
    %342 = vector.broadcast %334 : vector<16x1xf32> to vector<16x32xf32>
    %343 = arith.subf %328, %342 : vector<16x32xf32>
    %cst_99 = arith.constant 9.99999974E-6 : f32
    %344 = vector.broadcast %cst_99 : f32 to vector<16x1xf32>
    %345 = arith.addf %341, %344 : vector<16x1xf32>
    %346 = math.rsqrt %345 : vector<16x1xf32>
    %347 = vector.broadcast %346 : vector<16x1xf32> to vector<16x32xf32>
    %348 = arith.mulf %343, %347 : vector<16x32xf32>
    %349 = vector.broadcast %329 : vector<1x32xf32> to vector<16x32xf32>
    %350 = arith.mulf %348, %349 : vector<16x32xf32>
    %351 = vector.broadcast %330 : vector<1x32xf32> to vector<16x32xf32>
    %352 = arith.addf %350, %351 : vector<16x32xf32>
    %c0_100 = arith.constant 0 : index
    %c0_101 = arith.constant 0 : index
    %353 = vector.load %arg28[%c0_100, %c0_101] : memref<32x128xf32, #tpu.memory_space<vmem>>, vector<32x128xf32>
    %cst_102 = arith.constant dense<0.000000e+00> : vector<16x128xf32>
    %354 = tpu.matmul %352, %353, %cst_102 {dimension_numbers = #tpu.dot_dimension_numbers<[1], [0], [0], [1], [0, 0, 1, 1], [], []>} : vector<16x32xf32>, vector<32x128xf32>, vector<16x128xf32> -> vector<16x128xf32>
    %c0_103 = arith.constant 0 : index
    %c0_104 = arith.constant 0 : index
    %355 = vector.load %arg29[%c0_103, %c0_104] : memref<1x128xf32, #tpu.memory_space<vmem>>, vector<1x128xf32>
    %356 = vector.broadcast %355 : vector<1x128xf32> to vector<16x128xf32>
    %357 = arith.addf %354, %356 : vector<16x128xf32>
    %c0_105 = arith.constant 0 : index
    %c0_106 = arith.constant 0 : index
    %358 = vector.load %arg30[%c0_105, %c0_106] : memref<16x128xf32, #tpu.memory_space<vmem>>, vector<16x128xf32>
    tpu.vector_store %arg30[%c0_105, %c0_106], %357 {strides = array<i32>} : memref<16x128xf32, #tpu.memory_space<vmem>>, vector<16x128xf32>,
    return
  }
  func.func @transform_0(%arg0: i32) -> (i32, i32) {
    %c0_i32 = arith.constant 0 : i32
    %c0_i32_0 = arith.constant 0 : i32
    %c0_i32_1 = arith.constant 0 : i32
    return %c0_i32, %c0_i32_0 : i32, i32
  }
  func.func @transform_1(%arg0: i32) -> (i32, i32) {
    %c0_i32 = arith.constant 0 : i32
    %c0_i32_0 = arith.constant 0 : i32
    %c0_i32_1 = arith.constant 0 : i32
    return %c0_i32, %c0_i32_0 : i32, i32
  }
  func.func @transform_2(%arg0: i32) -> (i32, i32) {
    %c0_i32 = arith.constant 0 : i32
    %c0_i32_0 = arith.constant 0 : i32
    %c0_i32_1 = arith.constant 0 : i32
    return %c0_i32, %c0_i32_0 : i32, i32
  }
  func.func @transform_3(%arg0: i32) -> (i32, i32) {
    %c0_i32 = arith.constant 0 : i32
    %c0_i32_0 = arith.constant 0 : i32
    %c0_i32_1 = arith.constant 0 : i32
    return %c0_i32, %c0_i32_0 : i32, i32
  }
  func.func @transform_4(%arg0: i32) -> (i32, i32) {
    %c0_i32 = arith.constant 0 : i32
    %c0_i32_0 = arith.constant 0 : i32
    %c0_i32_1 = arith.constant 0 : i32
    return %c0_i32, %c0_i32_0 : i32, i32
  }
  func.func @transform_5(%arg0: i32) -> (i32, i32) {
    %c0_i32 = arith.constant 0 : i32
    %c0_i32_0 = arith.constant 0 : i32
    %c0_i32_1 = arith.constant 0 : i32
    return %c0_i32, %c0_i32_0 : i32, i32
  }
  func.func @transform_6(%arg0: i32) -> (i32, i32) {
    %c0_i32 = arith.constant 0 : i32
    %c0_i32_0 = arith.constant 0 : i32
    %c0_i32_1 = arith.constant 0 : i32
    return %c0_i32, %c0_i32_0 : i32, i32
  }
  func.func @transform_7(%arg0: i32) -> (i32, i32) {
    %c0_i32 = arith.constant 0 : i32
    %c0_i32_0 = arith.constant 0 : i32
    %c0_i32_1 = arith.constant 0 : i32
    return %c0_i32, %c0_i32_0 : i32, i32
  }
  func.func @transform_8(%arg0: i32) -> (i32, i32) {
    %c0_i32 = arith.constant 0 : i32
    %c0_i32_0 = arith.constant 0 : i32
    %c0_i32_1 = arith.constant 0 : i32
    return %c0_i32, %c0_i32_0 : i32, i32
  }
  func.func @transform_9(%arg0: i32) -> (i32, i32) {
    %c0_i32 = arith.constant 0 : i32
    %c0_i32_0 = arith.constant 0 : i32
    %c0_i32_1 = arith.constant 0 : i32
    return %c0_i32, %c0_i32_0 : i32, i32
  }
  func.func @transform_10(%arg0: i32) -> (i32, i32) {
    %c0_i32 = arith.constant 0 : i32
    %c0_i32_0 = arith.constant 0 : i32
    %c0_i32_1 = arith.constant 0 : i32
    return %c0_i32, %c0_i32_0 : i32, i32
  }
  func.func @transform_11(%arg0: i32) -> (i32, i32) {
    %c0_i32 = arith.constant 0 : i32
    %c0_i32_0 = arith.constant 0 : i32
    %c0_i32_1 = arith.constant 0 : i32
    return %c0_i32, %c0_i32_0 : i32, i32
  }
  func.func @transform_12(%arg0: i32) -> (i32, i32) {
    %c0_i32 = arith.constant 0 : i32
    %c0_i32_0 = arith.constant 0 : i32
    %c0_i32_1 = arith.constant 0 : i32
    return %c0_i32, %c0_i32_0 : i32, i32
  }
  func.func @transform_13(%arg0: i32) -> (i32, i32) {
    %c0_i32 = arith.constant 0 : i32
    %c0_i32_0 = arith.constant 0 : i32
    %c0_i32_1 = arith.constant 0 : i32
    return %c0_i32, %c0_i32_0 : i32, i32
  }
  func.func @transform_14(%arg0: i32) -> (i32, i32) {
    %c0_i32 = arith.constant 0 : i32
    %c0_i32_0 = arith.constant 0 : i32
    %c0_i32_1 = arith.constant 0 : i32
    return %c0_i32, %c0_i32_0 : i32, i32
  }
  func.func @transform_15(%arg0: i32) -> (i32, i32) {
    %c0_i32 = arith.constant 0 : i32
    %c0_i32_0 = arith.constant 0 : i32
    %c0_i32_1 = arith.constant 0 : i32
    return %c0_i32, %c0_i32_0 : i32, i32
  }
  func.func @transform_16(%arg0: i32) -> (i32, i32) {
    %c0_i32 = arith.constant 0 : i32
    %c0_i32_0 = arith.constant 0 : i32
    %c0_i32_1 = arith.constant 0 : i32
    return %c0_i32, %c0_i32_0 : i32, i32
  }
  func.func @transform_17(%arg0: i32) -> (i32, i32) {
    %c0_i32 = arith.constant 0 : i32
    %c0_i32_0 = arith.constant 0 : i32
    %c0_i32_1 = arith.constant 0 : i32
    return %c0_i32, %c0_i32_0 : i32, i32
  }
  func.func @transform_18(%arg0: i32) -> (i32, i32) {
    %c0_i32 = arith.constant 0 : i32
    %c0_i32_0 = arith.constant 0 : i32
    %c0_i32_1 = arith.constant 0 : i32
    return %c0_i32, %c0_i32_0 : i32, i32
  }
  func.func @transform_19(%arg0: i32) -> (i32, i32) {
    %c0_i32 = arith.constant 0 : i32
    %c0_i32_0 = arith.constant 0 : i32
    %c0_i32_1 = arith.constant 0 : i32
    return %c0_i32, %c0_i32_0 : i32, i32
  }
  func.func @transform_20(%arg0: i32) -> (i32, i32) {
    %c0_i32 = arith.constant 0 : i32
    %c0_i32_0 = arith.constant 0 : i32
    %c0_i32_1 = arith.constant 0 : i32
    return %c0_i32, %c0_i32_0 : i32, i32
  }
  func.func @transform_21(%arg0: i32) -> (i32, i32) {
    %c0_i32 = arith.constant 0 : i32
    %c0_i32_0 = arith.constant 0 : i32
    %c0_i32_1 = arith.constant 0 : i32
    return %c0_i32, %c0_i32_0 : i32, i32
  }
  func.func @transform_22(%arg0: i32) -> (i32, i32) {
    %c0_i32 = arith.constant 0 : i32
    %c0_i32_0 = arith.constant 0 : i32
    %c0_i32_1 = arith.constant 0 : i32
    return %c0_i32, %c0_i32_0 : i32, i32
  }
  func.func @transform_23(%arg0: i32) -> (i32, i32) {
    %c0_i32 = arith.constant 0 : i32
    %c0_i32_0 = arith.constant 0 : i32
    %c0_i32_1 = arith.constant 0 : i32
    return %c0_i32, %c0_i32_0 : i32, i32
  }
  func.func @transform_24(%arg0: i32) -> (i32, i32) {
    %c0_i32 = arith.constant 0 : i32
    %c0_i32_0 = arith.constant 0 : i32
    %c0_i32_1 = arith.constant 0 : i32
    return %c0_i32, %c0_i32_0 : i32, i32
  }
  func.func @transform_25(%arg0: i32) -> (i32, i32) {
    %c0_i32 = arith.constant 0 : i32
    %c0_i32_0 = arith.constant 0 : i32
    %c0_i32_1 = arith.constant 0 : i32
    return %c0_i32, %c0_i32_0 : i32, i32
  }
  func.func @transform_26(%arg0: i32) -> (i32, i32) {
    %c0_i32 = arith.constant 0 : i32
    %c0_i32_0 = arith.constant 0 : i32
    %c0_i32_1 = arith.constant 0 : i32
    return %c0_i32, %c0_i32_0 : i32, i32
  }
  func.func @transform_27(%arg0: i32) -> (i32, i32) {
    %c0_i32 = arith.constant 0 : i32
    %c0_i32_0 = arith.constant 0 : i32
    %c0_i32_1 = arith.constant 0 : i32
    return %c0_i32, %c0_i32_0 : i32, i32
  }
  func.func @transform_28(%arg0: i32) -> (i32, i32) {
    %c0_i32 = arith.constant 0 : i32
    %c0_i32_0 = arith.constant 0 : i32
    %c0_i32_1 = arith.constant 0 : i32
    return %c0_i32, %c0_i32_0 : i32, i32
  }
  func.func @transform_29(%arg0: i32) -> (i32, i32) {
    %c0_i32 = arith.constant 0 : i32
    %c0_i32_0 = arith.constant 0 : i32
    %c0_i32_1 = arith.constant 0 : i32
    return %c0_i32, %c0_i32_0 : i32, i32
  }
}

</mosaic_0001>

<llo_original>
// kernel: _lambda_.1
$region0: #{_lambda_.1}
  #allocation0 [shape = 'u32[]', space=smem, size = 0x4, offset = 0x4, fixed_abs, tag = 'smem constant byte address 0x4 - core index']
  #allocation1 [shape = 'u32[144,128]{1,0:T(1,128)}', space=vmem, size = 0x12000, scoped, tag = 'internal scratch']
  %s0 = inlined_call_operand.smem [shape: u32[30], index: -1, kind: input, shape index: {}]
  %s1 = sld [smem:[%s0]]
  %s2 = scalar_lea.smem %s0, 1
  %s3 = sld [smem:[%s2]]
  %s4 = scalar_lea.smem %s0, 2
  %s5 = sld [smem:[%s4]]
  %s6 = scalar_lea.smem %s0, 3
  %s7 = sld [smem:[%s6]]
  %s8 = scalar_lea.smem %s0, 4
  %s9 = sld [smem:[%s8]]
  %s10 = scalar_lea.smem %s0, 5
  %s11 = sld [smem:[%s10]]
  %s12 = scalar_lea.smem %s0, 6
  %s13 = sld [smem:[%s12]]
  %s14 = scalar_lea.smem %s0, 7
  %s15 = sld [smem:[%s14]]
  %s16 = scalar_lea.smem %s0, 8
  %s17 = sld [smem:[%s16]]
  %s18 = scalar_lea.smem %s0, 9
  %s19 = sld [smem:[%s18]]
  %s20 = scalar_lea.smem %s0, 10
  %s21 = sld [smem:[%s20]]
  %s22 = scalar_lea.smem %s0, 11
  %s23 = sld [smem:[%s22]]
  %s24 = scalar_lea.smem %s0, 12
  %s25 = sld [smem:[%s24]]
  %s26 = scalar_lea.smem %s0, 13
  %s27 = sld [smem:[%s26]]
  %s28 = scalar_lea.smem %s0, 14
  %s29 = sld [smem:[%s28]]
  %s30 = scalar_lea.smem %s0, 15
  %s31 = sld [smem:[%s30]]
  %s32 = scalar_lea.smem %s0, 16
  %s33 = sld [smem:[%s32]]
  %s34 = scalar_lea.smem %s0, 17
  %s35 = sld [smem:[%s34]]
  %s36 = scalar_lea.smem %s0, 18
  %s37 = sld [smem:[%s36]]
  %s38 = scalar_lea.smem %s0, 19
  %s39 = sld [smem:[%s38]]
  %s40 = scalar_lea.smem %s0, 20
  %s41 = sld [smem:[%s40]]
  %s42 = scalar_lea.smem %s0, 21
  %s43 = sld [smem:[%s42]]
  %s44 = scalar_lea.smem %s0, 22
  %s45 = sld [smem:[%s44]]
  %s46 = scalar_lea.smem %s0, 23
  %s47 = sld [smem:[%s46]]
  %s48 = scalar_lea.smem %s0, 24
  %s49 = sld [smem:[%s48]]
  %s50 = scalar_lea.smem %s0, 25
  %s51 = sld [smem:[%s50]]
  %s52 = scalar_lea.smem %s0, 26
  %s53 = sld [smem:[%s52]]
  %s54 = scalar_lea.smem %s0, 27
  %s55 = sld [smem:[%s54]]
  %s56 = scalar_lea.smem %s0, 28
  %s57 = sld [smem:[%s56]]
  %s58 = scalar_lea.smem %s0, 29
  %s59 = sld [smem:[%s58]]
  %s60 = sld [smem:[#allocation0]]
  $region126: #{_lambda_.1} parent=0
    _
  %s62 = ssub.s32 1, %s60
  %s63 = scalar_select 0, %s62, %s60
  $region1: #{_lambda_.1} parent=0
    #allocation2 [shape = 'u8[8192]{0}', space=vmem, size = 0x2000, scoped, tag = 'output window, operand 0, single buffered']
    #allocation3 [shape = 's32[1]{0}', space=sflag, size = 0x4, scoped, tag = 'scoped memory for _lambda_.1']
    %64 = vsyncpa [#allocation3], 0
    // Predicated region
    $region2: #{_lambda_.1} parent=1 // pred_check
      _
    $region3: #{_lambda_.1} parent=1 // pred_check_branch
      %66 = sbr.rel (0) target = $region5
    $region4: #{_lambda_.1} parent=1 // pred_region
      _
    $region5: #{_lambda_.1} parent=1 // pred_fallthru
      _
    // Predicated region
    $region6: #{_lambda_.1} parent=1 // pred_check
      _
    $region7: #{_lambda_.1} parent=1 // pred_check_branch
      %68 = sbr.rel (0) target = $region9
    $region8: #{_lambda_.1} parent=1 // pred_region
      _
    $region9: #{_lambda_.1} parent=1 // pred_fallthru
      _
    // Predicated region
    $region10: #{_lambda_.1} parent=1 // pred_check
      _
    $region11: #{_lambda_.1} parent=1 // pred_check_branch
      %70 = sbr.rel (0) target = $region13
    $region12: #{_lambda_.1} parent=1 // pred_region
      _
    $region13: #{_lambda_.1} parent=1 // pred_fallthru
      _
    // Predicated region
    $region14: #{_lambda_.1} parent=1 // pred_check
      _
    $region15: #{_lambda_.1} parent=1 // pred_check_branch
      %72 = sbr.rel (0) target = $region17
    $region16: #{_lambda_.1} parent=1 // pred_region
      _
    $region17: #{_lambda_.1} parent=1 // pred_fallthru
      _
    // Predicated region
    $region18: #{_lambda_.1} parent=1 // pred_check
      _
    $region19: #{_lambda_.1} parent=1 // pred_check_branch
      %74 = sbr.rel (0) target = $region21
    $region20: #{_lambda_.1} parent=1 // pred_region
      _
    $region21: #{_lambda_.1} parent=1 // pred_fallthru
      _
    // Predicated region
    $region22: #{_lambda_.1} parent=1 // pred_check
      _
    $region23: #{_lambda_.1} parent=1 // pred_check_branch
      %76 = sbr.rel (0) target = $region25
    $region24: #{_lambda_.1} parent=1 // pred_region
      _
    $region25: #{_lambda_.1} parent=1 // pred_fallthru
      _
    // Predicated region
    $region26: #{_lambda_.1} parent=1 // pred_check
      _
    $region27: #{_lambda_.1} parent=1 // pred_check_branch
      %78 = sbr.rel (0) target = $region29
    $region28: #{_lambda_.1} parent=1 // pred_region
      _
    $region29: #{_lambda_.1} parent=1 // pred_fallthru
      _
    // Predicated region
    $region30: #{_lambda_.1} parent=1 // pred_check
      _
    $region31: #{_lambda_.1} parent=1 // pred_check_branch
      %80 = sbr.rel (0) target = $region33
    $region32: #{_lambda_.1} parent=1 // pred_region
      _
    $region33: #{_lambda_.1} parent=1 // pred_fallthru
      _
    // Predicated region
    $region34: #{_lambda_.1} parent=1 // pred_check
      _
    $region35: #{_lambda_.1} parent=1 // pred_check_branch
      %82 = sbr.rel (0) target = $region37
    $region36: #{_lambda_.1} parent=1 // pred_region
      _
    $region37: #{_lambda_.1} parent=1 // pred_fallthru
      _
    // Predicated region
    $region38: #{_lambda_.1} parent=1 // pred_check
      _
    $region39: #{_lambda_.1} parent=1 // pred_check_branch
      %84 = sbr.rel (0) target = $region41
    $region40: #{_lambda_.1} parent=1 // pred_region
      _
    $region41: #{_lambda_.1} parent=1 // pred_fallthru
      _
    // Predicated region
    $region42: #{_lambda_.1} parent=1 // pred_check
      _
    $region43: #{_lambda_.1} parent=1 // pred_check_branch
      %86 = sbr.rel (0) target = $region45
    $region44: #{_lambda_.1} parent=1 // pred_region
      _
    $region45: #{_lambda_.1} parent=1 // pred_fallthru
      _
    // Predicated region
    $region46: #{_lambda_.1} parent=1 // pred_check
      _
    $region47: #{_lambda_.1} parent=1 // pred_check_branch
      %88 = sbr.rel (0) target = $region49
    $region48: #{_lambda_.1} parent=1 // pred_region
      _
    $region49: #{_lambda_.1} parent=1 // pred_fallthru
      _
    // Predicated region
    $region50: #{_lambda_.1} parent=1 // pred_check
      _
    $region51: #{_lambda_.1} parent=1 // pred_check_branch
      %90 = sbr.rel (0) target = $region53
    $region52: #{_lambda_.1} parent=1 // pred_region
      _
    $region53: #{_lambda_.1} parent=1 // pred_fallthru
      _
    // Predicated region
    $region54: #{_lambda_.1} parent=1 // pred_check
      _
    $region55: #{_lambda_.1} parent=1 // pred_check_branch
      %92 = sbr.rel (0) target = $region57
    $region56: #{_lambda_.1} parent=1 // pred_region
      _
    $region57: #{_lambda_.1} parent=1 // pred_fallthru
      _
    // Predicated region
    $region58: #{_lambda_.1} parent=1 // pred_check
      _
    $region59: #{_lambda_.1} parent=1 // pred_check_branch
      %94 = sbr.rel (0) target = $region61
    $region60: #{_lambda_.1} parent=1 // pred_region
      _
    $region61: #{_lambda_.1} parent=1 // pred_fallthru
      _
    // Predicated region
    $region62: #{_lambda_.1} parent=1 // pred_check
      _
    $region63: #{_lambda_.1} parent=1 // pred_check_branch
      %96 = sbr.rel (0) target = $region65
    $region64: #{_lambda_.1} parent=1 // pred_region
      _
    $region65: #{_lambda_.1} parent=1 // pred_fallthru
      _
    // Predicated region
    $region66: #{_lambda_.1} parent=1 // pred_check
      _
    $region67: #{_lambda_.1} parent=1 // pred_check_branch
      %98 = sbr.rel (0) target = $region69
    $region68: #{_lambda_.1} parent=1 // pred_region
      _
    $region69: #{_lambda_.1} parent=1 // pred_fallthru
      _
    // Predicated region
    $region70: #{_lambda_.1} parent=1 // pred_check
      _
    $region71: #{_lambda_.1} parent=1 // pred_check_branch
      %100 = sbr.rel (0) target = $region73
    $region72: #{_lambda_.1} parent=1 // pred_region
      _
    $region73: #{_lambda_.1} parent=1 // pred_fallthru
      _
    // Predicated region
    $region74: #{_lambda_.1} parent=1 // pred_check
      _
    $region75: #{_lambda_.1} parent=1 // pred_check_branch
      %102 = sbr.rel (0) target = $region77
    $region76: #{_lambda_.1} parent=1 // pred_region
      _
    $region77: #{_lambda_.1} parent=1 // pred_fallthru
      _
    // Predicated region
    $region78: #{_lambda_.1} parent=1 // pred_check
      _
    $region79: #{_lambda_.1} parent=1 // pred_check_branch
      %104 = sbr.rel (0) target = $region81
    $region80: #{_lambda_.1} parent=1 // pred_region
      _
    $region81: #{_lambda_.1} parent=1 // pred_fallthru
      _
    // Predicated region
    $region82: #{_lambda_.1} parent=1 // pred_check
      _
    $region83: #{_lambda_.1} parent=1 // pred_check_branch
      %106 = sbr.rel (0) target = $region85
    $region84: #{_lambda_.1} parent=1 // pred_region
      _
    $region85: #{_lambda_.1} parent=1 // pred_fallthru
      _
    // Predicated region
    $region86: #{_lambda_.1} parent=1 // pred_check
      _
    $region87: #{_lambda_.1} parent=1 // pred_check_branch
      %108 = sbr.rel (0) target = $region89
    $region88: #{_lambda_.1} parent=1 // pred_region
      _
    $region89: #{_lambda_.1} parent=1 // pred_fallthru
      _
    // Predicated region
    $region90: #{_lambda_.1} parent=1 // pred_check
      _
    $region91: #{_lambda_.1} parent=1 // pred_check_branch
      %110 = sbr.rel (0) target = $region93
    $region92: #{_lambda_.1} parent=1 // pred_region
      _
    $region93: #{_lambda_.1} parent=1 // pred_fallthru
      _
    // Predicated region
    $region94: #{_lambda_.1} parent=1 // pred_check
      _
    $region95: #{_lambda_.1} parent=1 // pred_check_branch
      %112 = sbr.rel (0) target = $region97
    $region96: #{_lambda_.1} parent=1 // pred_region
      _
    $region97: #{_lambda_.1} parent=1 // pred_fallthru
      _
    // Predicated region
    $region98: #{_lambda_.1} parent=1 // pred_check
      _
    $region99: #{_lambda_.1} parent=1 // pred_check_branch
      %114 = sbr.rel (0) target = $region101
    $region100: #{_lambda_.1} parent=1 // pred_region
      _
    $region101: #{_lambda_.1} parent=1 // pred_fallthru
      _
    // Predicated region
    $region102: #{_lambda_.1} parent=1 // pred_check
      _
    $region103: #{_lambda_.1} parent=1 // pred_check_branch
      %116 = sbr.rel (0) target = $region105
    $region104: #{_lambda_.1} parent=1 // pred_region
      _
    $region105: #{_lambda_.1} parent=1 // pred_fallthru
      _
    // Predicated region
    $region106: #{_lambda_.1} parent=1 // pred_check
      _
    $region107: #{_lambda_.1} parent=1 // pred_check_branch
      %118 = sbr.rel (0) target = $region109
    $region108: #{_lambda_.1} parent=1 // pred_region
      _
    $region109: #{_lambda_.1} parent=1 // pred_fallthru
      _
    // Predicated region
    $region110: #{_lambda_.1} parent=1 // pred_check
      _
    $region111: #{_lambda_.1} parent=1 // pred_check_branch
      %120 = sbr.rel (0) target = $region113
    $region112: #{_lambda_.1} parent=1 // pred_region
      _
    $region113: #{_lambda_.1} parent=1 // pred_fallthru
      _
    // Predicated region
    $region114: #{_lambda_.1} parent=1 // pred_check
      _
    $region115: #{_lambda_.1} parent=1 // pred_check_branch
      %122 = sbr.rel (0) target = $region117
    $region116: #{_lambda_.1} parent=1 // pred_region
      _
    $region117: #{_lambda_.1} parent=1 // pred_fallthru
      _
    %v123 = vlaneseq
    %v124 = vand.u32 %v123, 127
    %v125 = vld [vmem:[%s1] sm:$0xff]
    %v126 = vld [vmem:[%s1 + $0x8] sm:$0xff]
    %127 = vset.pattern.permute.xlu0 0
    %128 = vperm.xlu0 %127, %v125
    %v129 = vpop.permute.xlu0 %128
    %130 = vset.pattern.permute.xlu0 0
    %131 = vperm.xlu0 %130, %v126
    %v132 = vpop.permute.xlu0 %131
    %vm133 = vcmp.eq.s32.totalorder %v124, %v129
    %vm134 = vcmp.eq.s32.totalorder %v124, %v132
    %v135 = vsel %vm133, 1, 0
    %v136 = vsel %vm134, 1, 0
    %v137 = vcvt.s32.f32 %v135
    %v138 = vcvt.s32.f32 %v136
    %v139 = vld [vmem:[%s3] sm:$0xff]
    %v140 = vld [vmem:[%s3 + $0x8] sm:$0xff]
    %v141 = vld [vmem:[%s3 + $0x10] sm:$0xff]
    %v142 = vld [vmem:[%s3 + $0x18] sm:$0xff]
    %v143 = vld [vmem:[%s3 + $0x20] sm:$0xff]
    %v144 = vld [vmem:[%s3 + $0x28] sm:$0xff]
    %v145 = vld [vmem:[%s3 + $0x30] sm:$0xff]
    %v146 = vld [vmem:[%s3 + $0x38] sm:$0xff]
    %v147 = vld [vmem:[%s3 + $0x40] sm:$0xff]
    %v148 = vld [vmem:[%s3 + $0x48] sm:$0xff]
    %v149 = vld [vmem:[%s3 + $0x50] sm:$0xff]
    %v150 = vld [vmem:[%s3 + $0x58] sm:$0xff]
    %v151 = vld [vmem:[%s3 + $0x60] sm:$0xff]
    %v152 = vld [vmem:[%s3 + $0x68] sm:$0xff]
    %v153 = vld [vmem:[%s3 + $0x70] sm:$0xff]
    %v154 = vld [vmem:[%s3 + $0x78] sm:$0xff]
    %v155 = vld [vmem:[%s5] sm:$0xff]
    %156 = vmatprep.subr.mxu0 0.0
    %157 = vmatpush1.msra.mxu0 %v139
    %158 = vmatprep.subr.mxu0 0.0
    %159 = vmatpush1.msra.mxu0 %v140
    %160 = vmatprep.subr.mxu0 0.0
    %161 = vmatpush1.msra.mxu0 %v141
    %162 = vmatprep.subr.mxu0 0.0
    %163 = vmatpush1.msra.mxu0 %v142
    %164 = vmatprep.subr.mxu0 0.0
    %165 = vmatpush1.msra.mxu0 %v143
    %166 = vmatprep.subr.mxu0 0.0
    %167 = vmatpush1.msra.mxu0 %v144
    %168 = vmatprep.subr.mxu0 0.0
    %169 = vmatpush1.msra.mxu0 %v145
    %170 = vmatprep.subr.mxu0 0.0
    %171 = vmatpush1.msra.mxu0 %v146
    %172 = vmatprep.subr.mxu0 0.0
    %173 = vmatpush1.msra.mxu0 %v147
    %174 = vmatprep.subr.mxu0 0.0
    %175 = vmatpush1.msra.mxu0 %v148
    %176 = vmatprep.subr.mxu0 0.0
    %177 = vmatpush1.msra.mxu0 %v149
    %178 = vmatprep.subr.mxu0 0.0
    %179 = vmatpush1.msra.mxu0 %v150
    %180 = vmatprep.subr.mxu0 0.0
    %181 = vmatpush1.msra.mxu0 %v151
    %182 = vmatprep.subr.mxu0 0.0
    %183 = vmatpush1.msra.mxu0 %v152
    %184 = vmatprep.subr.mxu0 0.0
    %185 = vmatpush1.msra.mxu0 %v153
    %186 = vmatprep.subr.mxu0 0.0
    %187 = vmatpush1.msra.mxu0 %v154
    %188 = vmatprep.subr.mxu0 0.0
    %189 = vmatpush1.msra.mxu0 0.0
    %190 = vmatprep.subr.mxu0 0.0
    %191 = vmatpush1.msra.mxu0 0.0
    %192 = vmatprep.subr.mxu0 0.0
    %193 = vmatpush1.msra.mxu0 0.0
    %194 = vmatprep.subr.mxu0 0.0
    %195 = vmatpush1.msra.mxu0 0.0
    %196 = vmatprep.subr.mxu0 0.0
    %197 = vmatpush1.msra.mxu0 0.0
    %198 = vmatprep.subr.mxu0 0.0
    %199 = vmatpush1.msra.mxu0 0.0
    %200 = vmatprep.subr.mxu0 0.0
    %201 = vmatpush1.msra.mxu0 0.0
    %202 = vmatprep.subr.mxu0 0.0
    %203 = vmatpush1.msra.mxu0 0.0
    %204 = vmatprep.subr.mxu0 0.0
    %205 = vmatpush1.msra.mxu0 0.0
    %206 = vmatprep.subr.mxu0 0.0
    %207 = vmatpush1.msra.mxu0 0.0
    %208 = vmatprep.subr.mxu0 0.0
    %209 = vmatpush1.msra.mxu0 0.0
    %210 = vmatprep.subr.mxu0 0.0
    %211 = vmatpush1.msra.mxu0 0.0
    %212 = vmatprep.subr.mxu0 0.0
    %213 = vmatpush1.msra.mxu0 0.0
    %214 = vmatprep.subr.mxu0 0.0
    %215 = vmatpush1.msra.mxu0 0.0
    %216 = vmatprep.subr.mxu0 0.0
    %217 = vmatpush1.msra.mxu0 0.0
    %218 = vmatprep.subr.mxu0 0.0
    %219 = vmatpush1.msra.mxu0 0.0
    %220 = vmatprep.mubr.f32.mxu0 0.0
    %221 = vmatmul.mubr.f32.gmra.mrb[0].mxu0 %v137
    %v222 = vpop.f32.mrb[0].mxu0
    %v223 = vadd.f32 %v155, %v222
    %v224 = vpop.f32.mrb[0].mxu0
    %225 = vmatprep.mubr.f32.mxu0 0.0
    %226 = vmatmul.mubr.f32.gmra.mrb[0].mxu0 %v138
    %v227 = vpop.f32.mrb[0].mxu0
    %v228 = vadd.f32 %v155, %v227
    %v229 = vpop.f32.mrb[0].mxu0
    %230 = vdwg.mxu0
    %v231 = vlaneseq
    %v232 = vshrl.u32 %v231, 7
    %vm233 = vcmp.le.s32.totalorder %v124, %v232
    %v234 = vld [vmem:[%s7] sm:$0x1]
    %v235 = vld [vmem:[%s9] sm:$0x1]
    %vm236 = vcmask 261120
    %v237 = vsel %vm236, %v223, 0.0
    %238 = vadd.xlane.f32.xlu0 %v237
    %v239 = vpop.xlane.xlu0 %238
    %v240 = vsel %vm236, %v228, 0.0
    %241 = vadd.xlane.f32.xlu0 %v240
    %v242 = vpop.xlane.xlu0 %241
    %v243 = vrcp.pop 32.0
    %v244 = vmul.f32 %v239, %v243
    %v245 = vmul.f32 %v242, %v243
    %v246 = vsub.f32 %v223, %v244
    %v247 = vsub.f32 %v228, %v245
    %v248 = vmul.f32 %v246, %v246
    %v249 = vmul.f32 %v247, %v247
    %v250 = vsel %vm236, %v248, 0.0
    %251 = vadd.xlane.f32.xlu0 %v250
    %v252 = vpop.xlane.xlu0 %251
    %v253 = vsel %vm236, %v249, 0.0
    %254 = vadd.xlane.f32.xlu0 %v253
    %v255 = vpop.xlane.xlu0 %254
    %v256 = vmul.f32 %v252, %v243
    %v257 = vmul.f32 %v255, %v243
    %v258 = vadd.f32 %v256, 1e-05
    %v259 = vadd.f32 %v257, 1e-05
    %v260 = vrsqrt.pop %v258
    %v261 = vrsqrt.pop %v259
    %v262 = vmul.f32 %v246, %v260
    %v263 = vmul.f32 %v247, %v261
    %v265 = vlaneseq
    %v266 = vshrl.u32 %v265, 7
    %v267 = vsub.s32 0, %v266
    %v268 = vrot.slane %v234, %v267
    %v270 = vmul.f32 %v262, %v268
    %v271 = vmul.f32 %v263, %v268
    %v273 = vlaneseq
    %v274 = vshrl.u32 %v273, 7
    %v275 = vsub.s32 0, %v274
    %v276 = vrot.slane %v235, %v275
    %v278 = vadd.f32 %v270, %v276
    %v279 = vadd.f32 %v271, %v276
    %v280 = vld [vmem:[%s11] sm:$0xff]
    %v281 = vld [vmem:[%s11 + $0x8] sm:$0xff]
    %v282 = vld [vmem:[%s11 + $0x10] sm:$0xff]
    %v283 = vld [vmem:[%s11 + $0x18] sm:$0xff]
    %v285 = vsel %vm236, %v278, 0
    %v288 = vsel %vm236, %v279, 0
    %290 = vmatprep.subr.mxu0 0.0
    %291 = vmatpush1.msra.mxu0 %v280
    %292 = vmatprep.subr.mxu0 0.0
    %293 = vmatpush1.msra.mxu0 %v281
    %294 = vmatprep.subr.mxu0 0.0
    %295 = vmatpush1.msra.mxu0 %v282
    %296 = vmatprep.subr.mxu0 0.0
    %297 = vmatpush1.msra.mxu0 %v283
    %298 = vmatprep.subr.mxu0 0.0
    %299 = vmatpush1.msra.mxu0 0.0
    %300 = vmatprep.subr.mxu0 0.0
    %301 = vmatpush1.msra.mxu0 0.0
    %302 = vmatprep.subr.mxu0 0.0
    %303 = vmatpush1.msra.mxu0 0.0
    %304 = vmatprep.subr.mxu0 0.0
    %305 = vmatpush1.msra.mxu0 0.0
    %306 = vmatprep.subr.mxu0 0.0
    %307 = vmatpush1.msra.mxu0 0.0
    %308 = vmatprep.subr.mxu0 0.0
    %309 = vmatpush1.msra.mxu0 0.0
    %310 = vmatprep.subr.mxu0 0.0
    %311 = vmatpush1.msra.mxu0 0.0
    %312 = vmatprep.subr.mxu0 0.0
    %313 = vmatpush1.msra.mxu0 0.0
    %314 = vmatprep.subr.mxu0 0.0
    %315 = vmatpush1.msra.mxu0 0.0
    %316 = vmatprep.subr.mxu0 0.0
    %317 = vmatpush1.msra.mxu0 0.0
    %318 = vmatprep.subr.mxu0 0.0
    %319 = vmatpush1.msra.mxu0 0.0
    %320 = vmatprep.subr.mxu0 0.0
    %321 = vmatpush1.msra.mxu0 0.0
    %322 = vmatprep.subr.mxu0 0.0
    %323 = vmatpush1.msra.mxu0 0.0
    %324 = vmatprep.subr.mxu0 0.0
    %325 = vmatpush1.msra.mxu0 0.0
    %326 = vmatprep.subr.mxu0 0.0
    %327 = vmatpush1.msra.mxu0 0.0
    %328 = vmatprep.subr.mxu0 0.0
    %329 = vmatpush1.msra.mxu0 0.0
    %330 = vmatprep.subr.mxu0 0.0
    %331 = vmatpush1.msra.mxu0 0.0
    %332 = vmatprep.subr.mxu0 0.0
    %333 = vmatpush1.msra.mxu0 0.0
    %334 = vmatprep.subr.mxu0 0.0
    %335 = vmatpush1.msra.mxu0 0.0
    %336 = vmatprep.subr.mxu0 0.0
    %337 = vmatpush1.msra.mxu0 0.0
    %338 = vmatprep.subr.mxu0 0.0
    %339 = vmatpush1.msra.mxu0 0.0
    %340 = vmatprep.subr.mxu0 0.0
    %341 = vmatpush1.msra.mxu0 0.0
    %342 = vmatprep.subr.mxu0 0.0
    %343 = vmatpush1.msra.mxu0 0.0
    %344 = vmatprep.subr.mxu0 0.0
    %345 = vmatpush1.msra.mxu0 0.0
    %346 = vmatprep.subr.mxu0 0.0
    %347 = vmatpush1.msra.mxu0 0.0
    %348 = vmatprep.subr.mxu0 0.0
    %349 = vmatpush1.msra.mxu0 0.0
    %350 = vmatprep.subr.mxu0 0.0
    %351 = vmatpush1.msra.mxu0 0.0
    %352 = vmatprep.subr.mxu0 0.0
    %353 = vmatpush1.msra.mxu0 0.0
    %354 = vmatprep.mubr.f32.mxu0 0.0
    %355 = vmatmul.mubr.f32.gmra.mrb[0].mxu0 %v285
    %v356 = vpop.f32.mrb[0].mxu0
    %v357 = vadd.f32 0.0, %v356
    %v358 = vpop.f32.mrb[0].mxu0
    %359 = vmatprep.mubr.f32.mxu0 0.0
    %360 = vmatmul.mubr.f32.gmra.mrb[0].mxu0 %v288
    %v361 = vpop.f32.mrb[0].mxu0
    %v362 = vadd.f32 0.0, %v361
    %v363 = vpop.f32.mrb[0].mxu0
    %364 = vdwg.mxu0
    %366 = vrot.lane.b32.xlu0 %v357, 120
    %v367 = vpop.permute.xlu0 %366
    %368 = vrot.lane.b32.xlu0 %v357, 112
    %v369 = vpop.permute.xlu0 %368
    %370 = vrot.lane.b32.xlu0 %v357, 104
    %v371 = vpop.permute.xlu0 %370
    %373 = vrot.lane.b32.xlu0 %v362, 120
    %v374 = vpop.permute.xlu0 %373
    %375 = vrot.lane.b32.xlu0 %v362, 112
    %v376 = vpop.permute.xlu0 %375
    %377 = vrot.lane.b32.xlu0 %v362, 104
    %v378 = vpop.permute.xlu0 %377
    %379 = vrot.lane.b32.xlu0 %v357, 96
    %v380 = vpop.permute.xlu0 %379
    %vm381 = vcmask 64512
    %v382 = vsel %vm381, %v357, 0
    %v384 = vsel %vm381, %v380, 0
    %386 = vmatprep.subr.mxu0 0.0
    %387 = vmatpush1.xpose.msra.mxu0 %v384
    %388 = vmatprep.subr.mxu0 0.0
    %389 = vmatpush1.xpose.msra.mxu0 0.0
    %390 = vmatprep.subr.mxu0 0.0
    %391 = vmatpush1.xpose.msra.mxu0 0.0
    %392 = vmatprep.subr.mxu0 0.0
    %393 = vmatpush1.xpose.msra.mxu0 0.0
    %394 = vmatprep.subr.mxu0 0.0
    %395 = vmatpush1.xpose.msra.mxu0 0.0
    %396 = vmatprep.subr.mxu0 0.0
    %397 = vmatpush1.xpose.msra.mxu0 0.0
    %398 = vmatprep.subr.mxu0 0.0
    %399 = vmatpush1.xpose.msra.mxu0 0.0
    %400 = vmatprep.subr.mxu0 0.0
    %401 = vmatpush1.xpose.msra.mxu0 0.0
    %402 = vmatprep.subr.mxu0 0.0
    %403 = vmatpush1.xpose.msra.mxu0 0.0
    %404 = vmatprep.subr.mxu0 0.0
    %405 = vmatpush1.xpose.msra.mxu0 0.0
    %406 = vmatprep.subr.mxu0 0.0
    %407 = vmatpush1.xpose.msra.mxu0 0.0
    %408 = vmatprep.subr.mxu0 0.0
    %409 = vmatpush1.xpose.msra.mxu0 0.0
    %410 = vmatprep.subr.mxu0 0.0
    %411 = vmatpush1.xpose.msra.mxu0 0.0
    %412 = vmatprep.subr.mxu0 0.0
    %413 = vmatpush1.xpose.msra.mxu0 0.0
    %414 = vmatprep.subr.mxu0 0.0
    %415 = vmatpush1.xpose.msra.mxu0 0.0
    %416 = vmatprep.subr.mxu0 0.0
    %417 = vmatpush1.xpose.msra.mxu0 0.0
    %418 = vmatprep.subr.mxu0 0.0
    %419 = vmatpush1.xpose.msra.mxu0 0.0
    %420 = vmatprep.subr.mxu0 0.0
    %421 = vmatpush1.xpose.msra.mxu0 0.0
    %422 = vmatprep.subr.mxu0 0.0
    %423 = vmatpush1.xpose.msra.mxu0 0.0
    %424 = vmatprep.subr.mxu0 0.0
    %425 = vmatpush1.xpose.msra.mxu0 0.0
    %426 = vmatprep.subr.mxu0 0.0
    %427 = vmatpush1.xpose.msra.mxu0 0.0
    %428 = vmatprep.subr.mxu0 0.0
    %429 = vmatpush1.xpose.msra.mxu0 0.0
    %430 = vmatprep.subr.mxu0 0.0
    %431 = vmatpush1.xpose.msra.mxu0 0.0
    %432 = vmatprep.subr.mxu0 0.0
    %433 = vmatpush1.xpose.msra.mxu0 0.0
    %434 = vmatprep.subr.mxu0 0.0
    %435 = vmatpush1.xpose.msra.mxu0 0.0
    %436 = vmatprep.subr.mxu0 0.0
    %437 = vmatpush1.xpose.msra.mxu0 0.0
    %438 = vmatprep.subr.mxu0 0.0
    %439 = vmatpush1.xpose.msra.mxu0 0.0
    %440 = vmatprep.subr.mxu0 0.0
    %441 = vmatpush1.xpose.msra.mxu0 0.0
    %442 = vmatprep.subr.mxu0 0.0
    %443 = vmatpush1.xpose.msra.mxu0 0.0
    %444 = vmatprep.subr.mxu0 0.0
    %445 = vmatpush1.xpose.msra.mxu0 0.0
    %446 = vmatprep.subr.mxu0 0.0
    %447 = vmatpush1.xpose.msra.mxu0 0.0
    %448 = vmatprep.subr.mxu0 0.0
    %449 = vmatpush1.xpose.msra.mxu0 0.0
    %450 = vmatprep.mubr.f32.mxu0 0.0
    %451 = vmatmul.mubr.f32.gmra.mrb[0].mxu0 %v382
    %v452 = vpop.f32.mrb[0].mxu0
    %v453 = vadd.f32 0.0, %v452
    %v454 = vpop.f32.mrb[0].mxu0
    %455 = vdwg.mxu0
    %456 = vrot.lane.b32.xlu0 %v367, 96
    %v457 = vpop.permute.xlu0 %456
    %v458 = vsel %vm381, %v367, 0
    %v460 = vsel %vm381, %v457, 0
    %462 = vmatprep.subr.mxu0 0.0
    %463 = vmatpush1.xpose.msra.mxu0 %v460
    %464 = vmatprep.subr.mxu0 0.0
    %465 = vmatpush1.xpose.msra.mxu0 0.0
    %466 = vmatprep.subr.mxu0 0.0
    %467 = vmatpush1.xpose.msra.mxu0 0.0
    %468 = vmatprep.subr.mxu0 0.0
    %469 = vmatpush1.xpose.msra.mxu0 0.0
    %470 = vmatprep.subr.mxu0 0.0
    %471 = vmatpush1.xpose.msra.mxu0 0.0
    %472 = vmatprep.subr.mxu0 0.0
    %473 = vmatpush1.xpose.msra.mxu0 0.0
    %474 = vmatprep.subr.mxu0 0.0
    %475 = vmatpush1.xpose.msra.mxu0 0.0
    %476 = vmatprep.subr.mxu0 0.0
    %477 = vmatpush1.xpose.msra.mxu0 0.0
    %478 = vmatprep.subr.mxu0 0.0
    %479 = vmatpush1.xpose.msra.mxu0 0.0
    %480 = vmatprep.subr.mxu0 0.0
    %481 = vmatpush1.xpose.msra.mxu0 0.0
    %482 = vmatprep.subr.mxu0 0.0
    %483 = vmatpush1.xpose.msra.mxu0 0.0
    %484 = vmatprep.subr.mxu0 0.0
    %485 = vmatpush1.xpose.msra.mxu0 0.0
    %486 = vmatprep.subr.mxu0 0.0
    %487 = vmatpush1.xpose.msra.mxu0 0.0
    %488 = vmatprep.subr.mxu0 0.0
    %489 = vmatpush1.xpose.msra.mxu0 0.0
    %490 = vmatprep.subr.mxu0 0.0
    %491 = vmatpush1.xpose.msra.mxu0 0.0
    %492 = vmatprep.subr.mxu0 0.0
    %493 = vmatpush1.xpose.msra.mxu0 0.0
    %494 = vmatprep.subr.mxu0 0.0
    %495 = vmatpush1.xpose.msra.mxu0 0.0
    %496 = vmatprep.subr.mxu0 0.0
    %497 = vmatpush1.xpose.msra.mxu0 0.0
    %498 = vmatprep.subr.mxu0 0.0
    %499 = vmatpush1.xpose.msra.mxu0 0.0
    %500 = vmatprep.subr.mxu0 0.0
    %501 = vmatpush1.xpose.msra.mxu0 0.0
    %502 = vmatprep.subr.mxu0 0.0
    %503 = vmatpush1.xpose.msra.mxu0 0.0
    %504 = vmatprep.subr.mxu0 0.0
    %505 = vmatpush1.xpose.msra.mxu0 0.0
    %506 = vmatprep.subr.mxu0 0.0
    %507 = vmatpush1.xpose.msra.mxu0 0.0
    %508 = vmatprep.subr.mxu0 0.0
    %509 = vmatpush1.xpose.msra.mxu0 0.0
    %510 = vmatprep.subr.mxu0 0.0
    %511 = vmatpush1.xpose.msra.mxu0 0.0
    %512 = vmatprep.subr.mxu0 0.0
    %513 = vmatpush1.xpose.msra.mxu0 0.0
    %514 = vmatprep.subr.mxu0 0.0
    %515 = vmatpush1.xpose.msra.mxu0 0.0
    %516 = vmatprep.subr.mxu0 0.0
    %517 = vmatpush1.xpose.msra.mxu0 0.0
    %518 = vmatprep.subr.mxu0 0.0
    %519 = vmatpush1.xpose.msra.mxu0 0.0
    %520 = vmatprep.subr.mxu0 0.0
    %521 = vmatpush1.xpose.msra.mxu0 0.0
    %522 = vmatprep.subr.mxu0 0.0
    %523 = vmatpush1.xpose.msra.mxu0 0.0
    %524 = vmatprep.subr.mxu0 0.0
    %525 = vmatpush1.xpose.msra.mxu0 0.0
    %526 = vmatprep.mubr.f32.mxu0 0.0
    %527 = vmatmul.mubr.f32.gmra.mrb[0].mxu0 %v458
    %v528 = vpop.f32.mrb[0].mxu0
    %v529 = vadd.f32 0.0, %v528
    %v530 = vpop.f32.mrb[0].mxu0
    %531 = vdwg.mxu0
    %532 = vrot.lane.b32.xlu0 %v369, 96
    %v533 = vpop.permute.xlu0 %532
    %v534 = vsel %vm381, %v369, 0
    %v536 = vsel %vm381, %v533, 0
    %538 = vmatprep.subr.mxu0 0.0
    %539 = vmatpush1.xpose.msra.mxu0 %v536
    %540 = vmatprep.subr.mxu0 0.0
    %541 = vmatpush1.xpose.msra.mxu0 0.0
    %542 = vmatprep.subr.mxu0 0.0
    %543 = vmatpush1.xpose.msra.mxu0 0.0
    %544 = vmatprep.subr.mxu0 0.0
    %545 = vmatpush1.xpose.msra.mxu0 0.0
    %546 = vmatprep.subr.mxu0 0.0
    %547 = vmatpush1.xpose.msra.mxu0 0.0
    %548 = vmatprep.subr.mxu0 0.0
    %549 = vmatpush1.xpose.msra.mxu0 0.0
    %550 = vmatprep.subr.mxu0 0.0
    %551 = vmatpush1.xpose.msra.mxu0 0.0
    %552 = vmatprep.subr.mxu0 0.0
    %553 = vmatpush1.xpose.msra.mxu0 0.0
    %554 = vmatprep.subr.mxu0 0.0
    %555 = vmatpush1.xpose.msra.mxu0 0.0
    %556 = vmatprep.subr.mxu0 0.0
    %557 = vmatpush1.xpose.msra.mxu0 0.0
    %558 = vmatprep.subr.mxu0 0.0
    %559 = vmatpush1.xpose.msra.mxu0 0.0
    %560 = vmatprep.subr.mxu0 0.0
    %561 = vmatpush1.xpose.msra.mxu0 0.0
    %562 = vmatprep.subr.mxu0 0.0
    %563 = vmatpush1.xpose.msra.mxu0 0.0
    %564 = vmatprep.subr.mxu0 0.0
    %565 = vmatpush1.xpose.msra.mxu0 0.0
    %566 = vmatprep.subr.mxu0 0.0
    %567 = vmatpush1.xpose.msra.mxu0 0.0
    %568 = vmatprep.subr.mxu0 0.0
    %569 = vmatpush1.xpose.msra.mxu0 0.0
    %570 = vmatprep.subr.mxu0 0.0
    %571 = vmatpush1.xpose.msra.mxu0 0.0
    %572 = vmatprep.subr.mxu0 0.0
    %573 = vmatpush1.xpose.msra.mxu0 0.0
    %574 = vmatprep.subr.mxu0 0.0
    %575 = vmatpush1.xpose.msra.mxu0 0.0
    %576 = vmatprep.subr.mxu0 0.0
    %577 = vmatpush1.xpose.msra.mxu0 0.0
    %578 = vmatprep.subr.mxu0 0.0
    %579 = vmatpush1.xpose.msra.mxu0 0.0
    %580 = vmatprep.subr.mxu0 0.0
    %581 = vmatpush1.xpose.msra.mxu0 0.0
    %582 = vmatprep.subr.mxu0 0.0
    %583 = vmatpush1.xpose.msra.mxu0 0.0
    %584 = vmatprep.subr.mxu0 0.0
    %585 = vmatpush1.xpose.msra.mxu0 0.0
    %586 = vmatprep.subr.mxu0 0.0
    %587 = vmatpush1.xpose.msra.mxu0 0.0
    %588 = vmatprep.subr.mxu0 0.0
    %589 = vmatpush1.xpose.msra.mxu0 0.0
    %590 = vmatprep.subr.mxu0 0.0
    %591 = vmatpush1.xpose.msra.mxu0 0.0
    %592 = vmatprep.subr.mxu0 0.0
    %593 = vmatpush1.xpose.msra.mxu0 0.0
    %594 = vmatprep.subr.mxu0 0.0
    %595 = vmatpush1.xpose.msra.mxu0 0.0
    %596 = vmatprep.subr.mxu0 0.0
    %597 = vmatpush1.xpose.msra.mxu0 0.0
    %598 = vmatprep.subr.mxu0 0.0
    %599 = vmatpush1.xpose.msra.mxu0 0.0
    %600 = vmatprep.subr.mxu0 0.0
    %601 = vmatpush1.xpose.msra.mxu0 0.0
    %602 = vmatprep.mubr.f32.mxu0 0.0
    %603 = vmatmul.mubr.f32.gmra.mrb[0].mxu0 %v534
    %v604 = vpop.f32.mrb[0].mxu0
    %v605 = vadd.f32 0.0, %v604
    %v606 = vpop.f32.mrb[0].mxu0
    %607 = vdwg.mxu0
    %608 = vrot.lane.b32.xlu0 %v371, 96
    %v609 = vpop.permute.xlu0 %608
    %v610 = vsel %vm381, %v371, 0
    %v612 = vsel %vm381, %v609, 0
    %614 = vmatprep.subr.mxu0 0.0
    %615 = vmatpush1.xpose.msra.mxu0 %v612
    %616 = vmatprep.subr.mxu0 0.0
    %617 = vmatpush1.xpose.msra.mxu0 0.0
    %618 = vmatprep.subr.mxu0 0.0
    %619 = vmatpush1.xpose.msra.mxu0 0.0
    %620 = vmatprep.subr.mxu0 0.0
    %621 = vmatpush1.xpose.msra.mxu0 0.0
    %622 = vmatprep.subr.mxu0 0.0
    %623 = vmatpush1.xpose.msra.mxu0 0.0
    %624 = vmatprep.subr.mxu0 0.0
    %625 = vmatpush1.xpose.msra.mxu0 0.0
    %626 = vmatprep.subr.mxu0 0.0
    %627 = vmatpush1.xpose.msra.mxu0 0.0
    %628 = vmatprep.subr.mxu0 0.0
    %629 = vmatpush1.xpose.msra.mxu0 0.0
    %630 = vmatprep.subr.mxu0 0.0
    %631 = vmatpush1.xpose.msra.mxu0 0.0
    %632 = vmatprep.subr.mxu0 0.0
    %633 = vmatpush1.xpose.msra.mxu0 0.0
    %634 = vmatprep.subr.mxu0 0.0
    %635 = vmatpush1.xpose.msra.mxu0 0.0
    %636 = vmatprep.subr.mxu0 0.0
    %637 = vmatpush1.xpose.msra.mxu0 0.0
    %638 = vmatprep.subr.mxu0 0.0
    %639 = vmatpush1.xpose.msra.mxu0 0.0
    %640 = vmatprep.subr.mxu0 0.0
    %641 = vmatpush1.xpose.msra.mxu0 0.0
    %642 = vmatprep.subr.mxu0 0.0
    %643 = vmatpush1.xpose.msra.mxu0 0.0
    %644 = vmatprep.subr.mxu0 0.0
    %645 = vmatpush1.xpose.msra.mxu0 0.0
    %646 = vmatprep.subr.mxu0 0.0
    %647 = vmatpush1.xpose.msra.mxu0 0.0
    %648 = vmatprep.subr.mxu0 0.0
    %649 = vmatpush1.xpose.msra.mxu0 0.0
    %650 = vmatprep.subr.mxu0 0.0
    %651 = vmatpush1.xpose.msra.mxu0 0.0
    %652 = vmatprep.subr.mxu0 0.0
    %653 = vmatpush1.xpose.msra.mxu0 0.0
    %654 = vmatprep.subr.mxu0 0.0
    %655 = vmatpush1.xpose.msra.mxu0 0.0
    %656 = vmatprep.subr.mxu0 0.0
    %657 = vmatpush1.xpose.msra.mxu0 0.0
    %658 = vmatprep.subr.mxu0 0.0
    %659 = vmatpush1.xpose.msra.mxu0 0.0
    %660 = vmatprep.subr.mxu0 0.0
    %661 = vmatpush1.xpose.msra.mxu0 0.0
    %662 = vmatprep.subr.mxu0 0.0
    %663 = vmatpush1.xpose.msra.mxu0 0.0
    %664 = vmatprep.subr.mxu0 0.0
    %665 = vmatpush1.xpose.msra.mxu0 0.0
    %666 = vmatprep.subr.mxu0 0.0
    %667 = vmatpush1.xpose.msra.mxu0 0.0
    %668 = vmatprep.subr.mxu0 0.0
    %669 = vmatpush1.xpose.msra.mxu0 0.0
    %670 = vmatprep.subr.mxu0 0.0
    %671 = vmatpush1.xpose.msra.mxu0 0.0
    %672 = vmatprep.subr.mxu0 0.0
    %673 = vmatpush1.xpose.msra.mxu0 0.0
    %674 = vmatprep.subr.mxu0 0.0
    %675 = vmatpush1.xpose.msra.mxu0 0.0
    %676 = vmatprep.subr.mxu0 0.0
    %677 = vmatpush1.xpose.msra.mxu0 0.0
    %678 = vmatprep.mubr.f32.mxu0 0.0
    %679 = vmatmul.mubr.f32.gmra.mrb[0].mxu0 %v610
    %v680 = vpop.f32.mrb[0].mxu0
    %v681 = vadd.f32 0.0, %v680
    %v682 = vpop.f32.mrb[0].mxu0
    %683 = vdwg.mxu0
    %684 = vrot.lane.b32.xlu0 %v362, 96
    %v685 = vpop.permute.xlu0 %684
    %v686 = vsel %vm381, %v362, 0
    %v688 = vsel %vm381, %v685, 0
    %690 = vmatprep.subr.mxu0 0.0
    %691 = vmatpush1.xpose.msra.mxu0 %v688
    %692 = vmatprep.subr.mxu0 0.0
    %693 = vmatpush1.xpose.msra.mxu0 0.0
    %694 = vmatprep.subr.mxu0 0.0
    %695 = vmatpush1.xpose.msra.mxu0 0.0
    %696 = vmatprep.subr.mxu0 0.0
    %697 = vmatpush1.xpose.msra.mxu0 0.0
    %698 = vmatprep.subr.mxu0 0.0
    %699 = vmatpush1.xpose.msra.mxu0 0.0
    %700 = vmatprep.subr.mxu0 0.0
    %701 = vmatpush1.xpose.msra.mxu0 0.0
    %702 = vmatprep.subr.mxu0 0.0
    %703 = vmatpush1.xpose.msra.mxu0 0.0
    %704 = vmatprep.subr.mxu0 0.0
    %705 = vmatpush1.xpose.msra.mxu0 0.0
    %706 = vmatprep.subr.mxu0 0.0
    %707 = vmatpush1.xpose.msra.mxu0 0.0
    %708 = vmatprep.subr.mxu0 0.0
    %709 = vmatpush1.xpose.msra.mxu0 0.0
    %710 = vmatprep.subr.mxu0 0.0
    %711 = vmatpush1.xpose.msra.mxu0 0.0
    %712 = vmatprep.subr.mxu0 0.0
    %713 = vmatpush1.xpose.msra.mxu0 0.0
    %714 = vmatprep.subr.mxu0 0.0
    %715 = vmatpush1.xpose.msra.mxu0 0.0
    %716 = vmatprep.subr.mxu0 0.0
    %717 = vmatpush1.xpose.msra.mxu0 0.0
    %718 = vmatprep.subr.mxu0 0.0
    %719 = vmatpush1.xpose.msra.mxu0 0.0
    %720 = vmatprep.subr.mxu0 0.0
    %721 = vmatpush1.xpose.msra.mxu0 0.0
    %722 = vmatprep.subr.mxu0 0.0
    %723 = vmatpush1.xpose.msra.mxu0 0.0
    %724 = vmatprep.subr.mxu0 0.0
    %725 = vmatpush1.xpose.msra.mxu0 0.0
    %726 = vmatprep.subr.mxu0 0.0
    %727 = vmatpush1.xpose.msra.mxu0 0.0
    %728 = vmatprep.subr.mxu0 0.0
    %729 = vmatpush1.xpose.msra.mxu0 0.0
    %730 = vmatprep.subr.mxu0 0.0
    %731 = vmatpush1.xpose.msra.mxu0 0.0
    %732 = vmatprep.subr.mxu0 0.0
    %733 = vmatpush1.xpose.msra.mxu0 0.0
    %734 = vmatprep.subr.mxu0 0.0
    %735 = vmatpush1.xpose.msra.mxu0 0.0
    %736 = vmatprep.subr.mxu0 0.0
    %737 = vmatpush1.xpose.msra.mxu0 0.0
    %738 = vmatprep.subr.mxu0 0.0
    %739 = vmatpush1.xpose.msra.mxu0 0.0
    %740 = vmatprep.subr.mxu0 0.0
    %741 = vmatpush1.xpose.msra.mxu0 0.0
    %742 = vmatprep.subr.mxu0 0.0
    %743 = vmatpush1.xpose.msra.mxu0 0.0
    %744 = vmatprep.subr.mxu0 0.0
    %745 = vmatpush1.xpose.msra.mxu0 0.0
    %746 = vmatprep.subr.mxu0 0.0
    %747 = vmatpush1.xpose.msra.mxu0 0.0
    %748 = vmatprep.subr.mxu0 0.0
    %749 = vmatpush1.xpose.msra.mxu0 0.0
    %750 = vmatprep.subr.mxu0 0.0
    %751 = vmatpush1.xpose.msra.mxu0 0.0
    %752 = vmatprep.subr.mxu0 0.0
    %753 = vmatpush1.xpose.msra.mxu0 0.0
    %754 = vmatprep.mubr.f32.mxu0 0.0
    %755 = vmatmul.mubr.f32.gmra.mrb[0].mxu0 %v686
    %v756 = vpop.f32.mrb[0].mxu0
    %v757 = vadd.f32 0.0, %v756
    %v758 = vpop.f32.mrb[0].mxu0
    %759 = vdwg.mxu0
    %760 = vrot.lane.b32.xlu0 %v374, 96
    %v761 = vpop.permute.xlu0 %760
    %v762 = vsel %vm381, %v374, 0
    %v764 = vsel %vm381, %v761, 0
    %766 = vmatprep.subr.mxu0 0.0
    %767 = vmatpush1.xpose.msra.mxu0 %v764
    %768 = vmatprep.subr.mxu0 0.0
    %769 = vmatpush1.xpose.msra.mxu0 0.0
    %770 = vmatprep.subr.mxu0 0.0
    %771 = vmatpush1.xpose.msra.mxu0 0.0
    %772 = vmatprep.subr.mxu0 0.0
    %773 = vmatpush1.xpose.msra.mxu0 0.0
    %774 = vmatprep.subr.mxu0 0.0
    %775 = vmatpush1.xpose.msra.mxu0 0.0
    %776 = vmatprep.subr.mxu0 0.0
    %777 = vmatpush1.xpose.msra.mxu0 0.0
    %778 = vmatprep.subr.mxu0 0.0
    %779 = vmatpush1.xpose.msra.mxu0 0.0
    %780 = vmatprep.subr.mxu0 0.0
    %781 = vmatpush1.xpose.msra.mxu0 0.0
    %782 = vmatprep.subr.mxu0 0.0
    %783 = vmatpush1.xpose.msra.mxu0 0.0
    %784 = vmatprep.subr.mxu0 0.0
    %785 = vmatpush1.xpose.msra.mxu0 0.0
    %786 = vmatprep.subr.mxu0 0.0
    %787 = vmatpush1.xpose.msra.mxu0 0.0
    %788 = vmatprep.subr.mxu0 0.0
    %789 = vmatpush1.xpose.msra.mxu0 0.0
    %790 = vmatprep.subr.mxu0 0.0
    %791 = vmatpush1.xpose.msra.mxu0 0.0
    %792 = vmatprep.subr.mxu0 0.0
    %793 = vmatpush1.xpose.msra.mxu0 0.0
    %794 = vmatprep.subr.mxu0 0.0
    %795 = vmatpush1.xpose.msra.mxu0 0.0
    %796 = vmatprep.subr.mxu0 0.0
    %797 = vmatpush1.xpose.msra.mxu0 0.0
    %798 = vmatprep.subr.mxu0 0.0
    %799 = vmatpush1.xpose.msra.mxu0 0.0
    %800 = vmatprep.subr.mxu0 0.0
    %801 = vmatpush1.xpose.msra.mxu0 0.0
    %802 = vmatprep.subr.mxu0 0.0
    %803 = vmatpush1.xpose.msra.mxu0 0.0
    %804 = vmatprep.subr.mxu0 0.0
    %805 = vmatpush1.xpose.msra.mxu0 0.0
    %806 = vmatprep.subr.mxu0 0.0
    %807 = vmatpush1.xpose.msra.mxu0 0.0
    %808 = vmatprep.subr.mxu0 0.0
    %809 = vmatpush1.xpose.msra.mxu0 0.0
    %810 = vmatprep.subr.mxu0 0.0
    %811 = vmatpush1.xpose.msra.mxu0 0.0
    %812 = vmatprep.subr.mxu0 0.0
    %813 = vmatpush1.xpose.msra.mxu0 0.0
    %814 = vmatprep.subr.mxu0 0.0
    %815 = vmatpush1.xpose.msra.mxu0 0.0
    %816 = vmatprep.subr.mxu0 0.0
    %817 = vmatpush1.xpose.msra.mxu0 0.0
    %818 = vmatprep.subr.mxu0 0.0
    %819 = vmatpush1.xpose.msra.mxu0 0.0
    %820 = vmatprep.subr.mxu0 0.0
    %821 = vmatpush1.xpose.msra.mxu0 0.0
    %822 = vmatprep.subr.mxu0 0.0
    %823 = vmatpush1.xpose.msra.mxu0 0.0
    %824 = vmatprep.subr.mxu0 0.0
    %825 = vmatpush1.xpose.msra.mxu0 0.0
    %826 = vmatprep.subr.mxu0 0.0
    %827 = vmatpush1.xpose.msra.mxu0 0.0
    %828 = vmatprep.subr.mxu0 0.0
    %829 = vmatpush1.xpose.msra.mxu0 0.0
    %830 = vmatprep.mubr.f32.mxu0 0.0
    %831 = vmatmul.mubr.f32.gmra.mrb[0].mxu0 %v762
    %v832 = vpop.f32.mrb[0].mxu0
    %v833 = vadd.f32 0.0, %v832
    %v834 = vpop.f32.mrb[0].mxu0
    %835 = vdwg.mxu0
    %836 = vrot.lane.b32.xlu0 %v376, 96
    %v837 = vpop.permute.xlu0 %836
    %v838 = vsel %vm381, %v376, 0
    %v840 = vsel %vm381, %v837, 0
    %842 = vmatprep.subr.mxu0 0.0
    %843 = vmatpush1.xpose.msra.mxu0 %v840
    %844 = vmatprep.subr.mxu0 0.0
    %845 = vmatpush1.xpose.msra.mxu0 0.0
    %846 = vmatprep.subr.mxu0 0.0
    %847 = vmatpush1.xpose.msra.mxu0 0.0
    %848 = vmatprep.subr.mxu0 0.0
    %849 = vmatpush1.xpose.msra.mxu0 0.0
    %850 = vmatprep.subr.mxu0 0.0
    %851 = vmatpush1.xpose.msra.mxu0 0.0
    %852 = vmatprep.subr.mxu0 0.0
    %853 = vmatpush1.xpose.msra.mxu0 0.0
    %854 = vmatprep.subr.mxu0 0.0
    %855 = vmatpush1.xpose.msra.mxu0 0.0
    %856 = vmatprep.subr.mxu0 0.0
    %857 = vmatpush1.xpose.msra.mxu0 0.0
    %858 = vmatprep.subr.mxu0 0.0
    %859 = vmatpush1.xpose.msra.mxu0 0.0
    %860 = vmatprep.subr.mxu0 0.0
    %861 = vmatpush1.xpose.msra.mxu0 0.0
    %862 = vmatprep.subr.mxu0 0.0
    %863 = vmatpush1.xpose.msra.mxu0 0.0
    %864 = vmatprep.subr.mxu0 0.0
    %865 = vmatpush1.xpose.msra.mxu0 0.0
    %866 = vmatprep.subr.mxu0 0.0
    %867 = vmatpush1.xpose.msra.mxu0 0.0
    %868 = vmatprep.subr.mxu0 0.0
    %869 = vmatpush1.xpose.msra.mxu0 0.0
    %870 = vmatprep.subr.mxu0 0.0
    %871 = vmatpush1.xpose.msra.mxu0 0.0
    %872 = vmatprep.subr.mxu0 0.0
    %873 = vmatpush1.xpose.msra.mxu0 0.0
    %874 = vmatprep.subr.mxu0 0.0
    %875 = vmatpush1.xpose.msra.mxu0 0.0
    %876 = vmatprep.subr.mxu0 0.0
    %877 = vmatpush1.xpose.msra.mxu0 0.0
    %878 = vmatprep.subr.mxu0 0.0
    %879 = vmatpush1.xpose.msra.mxu0 0.0
    %880 = vmatprep.subr.mxu0 0.0
    %881 = vmatpush1.xpose.msra.mxu0 0.0
    %882 = vmatprep.subr.mxu0 0.0
    %883 = vmatpush1.xpose.msra.mxu0 0.0
    %884 = vmatprep.subr.mxu0 0.0
    %885 = vmatpush1.xpose.msra.mxu0 0.0
    %886 = vmatprep.subr.mxu0 0.0
    %887 = vmatpush1.xpose.msra.mxu0 0.0
    %888 = vmatprep.subr.mxu0 0.0
    %889 = vmatpush1.xpose.msra.mxu0 0.0
    %890 = vmatprep.subr.mxu0 0.0
    %891 = vmatpush1.xpose.msra.mxu0 0.0
    %892 = vmatprep.subr.mxu0 0.0
    %893 = vmatpush1.xpose.msra.mxu0 0.0
    %894 = vmatprep.subr.mxu0 0.0
    %895 = vmatpush1.xpose.msra.mxu0 0.0
    %896 = vmatprep.subr.mxu0 0.0
    %897 = vmatpush1.xpose.msra.mxu0 0.0
    %898 = vmatprep.subr.mxu0 0.0
    %899 = vmatpush1.xpose.msra.mxu0 0.0
    %900 = vmatprep.subr.mxu0 0.0
    %901 = vmatpush1.xpose.msra.mxu0 0.0
    %902 = vmatprep.subr.mxu0 0.0
    %903 = vmatpush1.xpose.msra.mxu0 0.0
    %904 = vmatprep.subr.mxu0 0.0
    %905 = vmatpush1.xpose.msra.mxu0 0.0
    %906 = vmatprep.mubr.f32.mxu0 0.0
    %907 = vmatmul.mubr.f32.gmra.mrb[0].mxu0 %v838
    %v908 = vpop.f32.mrb[0].mxu0
    %v909 = vadd.f32 0.0, %v908
    %v910 = vpop.f32.mrb[0].mxu0
    %911 = vdwg.mxu0
    %912 = vrot.lane.b32.xlu0 %v378, 96
    %v913 = vpop.permute.xlu0 %912
    %v914 = vsel %vm381, %v378, 0
    %v916 = vsel %vm381, %v913, 0
    %918 = vmatprep.subr.mxu0 0.0
    %919 = vmatpush1.xpose.msra.mxu0 %v916
    %920 = vmatprep.subr.mxu0 0.0
    %921 = vmatpush1.xpose.msra.mxu0 0.0
    %922 = vmatprep.subr.mxu0 0.0
    %923 = vmatpush1.xpose.msra.mxu0 0.0
    %924 = vmatprep.subr.mxu0 0.0
    %925 = vmatpush1.xpose.msra.mxu0 0.0
    %926 = vmatprep.subr.mxu0 0.0
    %927 = vmatpush1.xpose.msra.mxu0 0.0
    %928 = vmatprep.subr.mxu0 0.0
    %929 = vmatpush1.xpose.msra.mxu0 0.0
    %930 = vmatprep.subr.mxu0 0.0
    %931 = vmatpush1.xpose.msra.mxu0 0.0
    %932 = vmatprep.subr.mxu0 0.0
    %933 = vmatpush1.xpose.msra.mxu0 0.0
    %934 = vmatprep.subr.mxu0 0.0
    %935 = vmatpush1.xpose.msra.mxu0 0.0
    %936 = vmatprep.subr.mxu0 0.0
    %937 = vmatpush1.xpose.msra.mxu0 0.0
    %938 = vmatprep.subr.mxu0 0.0
    %939 = vmatpush1.xpose.msra.mxu0 0.0
    %940 = vmatprep.subr.mxu0 0.0
    %941 = vmatpush1.xpose.msra.mxu0 0.0
    %942 = vmatprep.subr.mxu0 0.0
    %943 = vmatpush1.xpose.msra.mxu0 0.0
    %944 = vmatprep.subr.mxu0 0.0
    %945 = vmatpush1.xpose.msra.mxu0 0.0
    %946 = vmatprep.subr.mxu0 0.0
    %947 = vmatpush1.xpose.msra.mxu0 0.0
    %948 = vmatprep.subr.mxu0 0.0
    %949 = vmatpush1.xpose.msra.mxu0 0.0
    %950 = vmatprep.subr.mxu0 0.0
    %951 = vmatpush1.xpose.msra.mxu0 0.0
    %952 = vmatprep.subr.mxu0 0.0
    %953 = vmatpush1.xpose.msra.mxu0 0.0
    %954 = vmatprep.subr.mxu0 0.0
    %955 = vmatpush1.xpose.msra.mxu0 0.0
    %956 = vmatprep.subr.mxu0 0.0
    %957 = vmatpush1.xpose.msra.mxu0 0.0
    %958 = vmatprep.subr.mxu0 0.0
    %959 = vmatpush1.xpose.msra.mxu0 0.0
    %960 = vmatprep.subr.mxu0 0.0
    %961 = vmatpush1.xpose.msra.mxu0 0.0
    %962 = vmatprep.subr.mxu0 0.0
    %963 = vmatpush1.xpose.msra.mxu0 0.0
    %964 = vmatprep.subr.mxu0 0.0
    %965 = vmatpush1.xpose.msra.mxu0 0.0
    %966 = vmatprep.subr.mxu0 0.0
    %967 = vmatpush1.xpose.msra.mxu0 0.0
    %968 = vmatprep.subr.mxu0 0.0
    %969 = vmatpush1.xpose.msra.mxu0 0.0
    %970 = vmatprep.subr.mxu0 0.0
    %971 = vmatpush1.xpose.msra.mxu0 0.0
    %972 = vmatprep.subr.mxu0 0.0
    %973 = vmatpush1.xpose.msra.mxu0 0.0
    %974 = vmatprep.subr.mxu0 0.0
    %975 = vmatpush1.xpose.msra.mxu0 0.0
    %976 = vmatprep.subr.mxu0 0.0
    %977 = vmatpush1.xpose.msra.mxu0 0.0
    %978 = vmatprep.subr.mxu0 0.0
    %979 = vmatpush1.xpose.msra.mxu0 0.0
    %980 = vmatprep.subr.mxu0 0.0
    %981 = vmatpush1.xpose.msra.mxu0 0.0
    %982 = vmatprep.mubr.f32.mxu0 0.0
    %983 = vmatmul.mubr.f32.gmra.mrb[0].mxu0 %v914
    %v984 = vpop.f32.mrb[0].mxu0
    %v985 = vadd.f32 0.0, %v984
    %v986 = vpop.f32.mrb[0].mxu0
    %987 = vdwg.mxu0
    %v988 = vmul.f32 %v453, 0.17677669
    %v989 = vmul.f32 %v529, 0.17677669
    %v990 = vmul.f32 %v605, 0.17677669
    %v991 = vmul.f32 %v681, 0.17677669
    %v992 = vmul.f32 %v757, 0.17677669
    %v993 = vmul.f32 %v833, 0.17677669
    %v994 = vmul.f32 %v909, 0.17677669
    %v995 = vmul.f32 %v985, 0.17677669
    %v996 = vsel %vm233, 1, 0
    %vm997 = vcmp.eq.s32.totalorder %v996, 1
    %v998 = vsel %vm997, %v988, -inf
    %v999 = vsel %vm997, %v989, -inf
    %v1000 = vsel %vm997, %v990, -inf
    %v1001 = vsel %vm997, %v991, -inf
    %v1002 = vsel %vm997, %v992, -inf
    %v1003 = vsel %vm997, %v993, -inf
    %v1004 = vsel %vm997, %v994, -inf
    %v1005 = vsel %vm997, %v995, -inf
    %v1006 = vsel %vm381, %v998, -inf
    %1007 = vmax.xlane.f32.xlu0 %v1006
    %v1008 = vpop.xlane.xlu0 %1007
    %v1009 = vsel %vm381, %v999, -inf
    %1010 = vmax.xlane.f32.xlu0 %v1009
    %v1011 = vpop.xlane.xlu0 %1010
    %v1012 = vsel %vm381, %v1000, -inf
    %1013 = vmax.xlane.f32.xlu0 %v1012
    %v1014 = vpop.xlane.xlu0 %1013
    %v1015 = vsel %vm381, %v1001, -inf
    %1016 = vmax.xlane.f32.xlu0 %v1015
    %v1017 = vpop.xlane.xlu0 %1016
    %v1018 = vsel %vm381, %v1002, -inf
    %1019 = vmax.xlane.f32.xlu0 %v1018
    %v1020 = vpop.xlane.xlu0 %1019
    %v1021 = vsel %vm381, %v1003, -inf
    %1022 = vmax.xlane.f32.xlu0 %v1021
    %v1023 = vpop.xlane.xlu0 %1022
    %v1024 = vsel %vm381, %v1004, -inf
    %1025 = vmax.xlane.f32.xlu0 %v1024
    %v1026 = vpop.xlane.xlu0 %1025
    %v1027 = vsel %vm381, %v1005, -inf
    %1028 = vmax.xlane.f32.xlu0 %v1027
    %v1029 = vpop.xlane.xlu0 %1028
    %v1030 = vsub.f32 %v998, %v1008
    %v1031 = vsub.f32 %v999, %v1011
    %v1032 = vsub.f32 %v1000, %v1014
    %v1033 = vsub.f32 %v1001, %v1017
    %v1034 = vsub.f32 %v1002, %v1020
    %v1035 = vsub.f32 %v1003, %v1023
    %v1036 = vsub.f32 %v1004, %v1026
    %v1037 = vsub.f32 %v1005, %v1029
    %v1038 = vmul.f32 %v1030, 1.442695
    %v1039 = vpow.pop %v1038
    %v1040 = vmul.f32 %v1031, 1.442695
    %v1041 = vpow.pop %v1040
    %v1042 = vmul.f32 %v1032, 1.442695
    %v1043 = vpow.pop %v1042
    %v1044 = vmul.f32 %v1033, 1.442695
    %v1045 = vpow.pop %v1044
    %v1046 = vmul.f32 %v1034, 1.442695
    %v1047 = vpow.pop %v1046
    %v1048 = vmul.f32 %v1035, 1.442695
    %v1049 = vpow.pop %v1048
    %v1050 = vmul.f32 %v1036, 1.442695
    %v1051 = vpow.pop %v1050
    %v1052 = vmul.f32 %v1037, 1.442695
    %v1053 = vpow.pop %v1052
    %v1054 = vsel %vm381, %v1039, 0.0
    %1055 = vadd.xlane.f32.xlu0 %v1054
    %v1056 = vpop.xlane.xlu0 %1055
    %v1057 = vsel %vm381, %v1041, 0.0
    %1058 = vadd.xlane.f32.xlu0 %v1057
    %v1059 = vpop.xlane.xlu0 %1058
    %v1060 = vsel %vm381, %v1043, 0.0
    %1061 = vadd.xlane.f32.xlu0 %v1060
    %v1062 = vpop.xlane.xlu0 %1061
    %v1063 = vsel %vm381, %v1045, 0.0
    %1064 = vadd.xlane.f32.xlu0 %v1063
    %v1065 = vpop.xlane.xlu0 %1064
    %v1066 = vsel %vm381, %v1047, 0.0
    %1067 = vadd.xlane.f32.xlu0 %v1066
    %v1068 = vpop.xlane.xlu0 %1067
    %v1069 = vsel %vm381, %v1049, 0.0
    %1070 = vadd.xlane.f32.xlu0 %v1069
    %v1071 = vpop.xlane.xlu0 %1070
    %v1072 = vsel %vm381, %v1051, 0.0
    %1073 = vadd.xlane.f32.xlu0 %v1072
    %v1074 = vpop.xlane.xlu0 %1073
    %v1075 = vsel %vm381, %v1053, 0.0
    %1076 = vadd.xlane.f32.xlu0 %v1075
    %v1077 = vpop.xlane.xlu0 %1076
    %v1078 = vrcp.pop %v1056
    %v1079 = vrcp.pop %v1059
    %v1080 = vrcp.pop %v1062
    %v1081 = vrcp.pop %v1065
    %v1082 = vrcp.pop %v1068
    %v1083 = vrcp.pop %v1071
    %v1084 = vrcp.pop %v1074
    %v1085 = vrcp.pop %v1077
    %v1086 = vmul.f32 %v1039, %v1078
    %v1087 = vmul.f32 %v1041, %v1079
    %v1088 = vmul.f32 %v1043, %v1080
    %v1089 = vmul.f32 %v1045, %v1081
    %v1090 = vmul.f32 %v1047, %v1082
    %v1091 = vmul.f32 %v1049, %v1083
    %v1092 = vmul.f32 %v1051, %v1084
    %v1093 = vmul.f32 %v1053, %v1085
    %1094 = vrot.lane.b32.xlu0 %v357, 64
    %v1095 = vpop.permute.xlu0 %1094
    %v1098 = vsel %vm381, %v1086, 0
    %1100 = vmatprep.subr.mxu0 0.0
    %1101 = vmatpush1.msra.mxu0 %v1095
    %1102 = vmatprep.subr.mxu0 0.0
    %1103 = vmatpush1.msra.mxu0 0.0
    %1104 = vmatprep.subr.mxu0 0.0
    %1105 = vmatpush1.msra.mxu0 0.0
    %1106 = vmatprep.subr.mxu0 0.0
    %1107 = vmatpush1.msra.mxu0 0.0
    %1108 = vmatprep.subr.mxu0 0.0
    %1109 = vmatpush1.msra.mxu0 0.0
    %1110 = vmatprep.subr.mxu0 0.0
    %1111 = vmatpush1.msra.mxu0 0.0
    %1112 = vmatprep.subr.mxu0 0.0
    %1113 = vmatpush1.msra.mxu0 0.0
    %1114 = vmatprep.subr.mxu0 0.0
    %1115 = vmatpush1.msra.mxu0 0.0
    %1116 = vmatprep.subr.mxu0 0.0
    %1117 = vmatpush1.msra.mxu0 0.0
    %1118 = vmatprep.subr.mxu0 0.0
    %1119 = vmatpush1.msra.mxu0 0.0
    %1120 = vmatprep.subr.mxu0 0.0
    %1121 = vmatpush1.msra.mxu0 0.0
    %1122 = vmatprep.subr.mxu0 0.0
    %1123 = vmatpush1.msra.mxu0 0.0
    %1124 = vmatprep.subr.mxu0 0.0
    %1125 = vmatpush1.msra.mxu0 0.0
    %1126 = vmatprep.subr.mxu0 0.0
    %1127 = vmatpush1.msra.mxu0 0.0
    %1128 = vmatprep.subr.mxu0 0.0
    %1129 = vmatpush1.msra.mxu0 0.0
    %1130 = vmatprep.subr.mxu0 0.0
    %1131 = vmatpush1.msra.mxu0 0.0
    %1132 = vmatprep.subr.mxu0 0.0
    %1133 = vmatpush1.msra.mxu0 0.0
    %1134 = vmatprep.subr.mxu0 0.0
    %1135 = vmatpush1.msra.mxu0 0.0
    %1136 = vmatprep.subr.mxu0 0.0
    %1137 = vmatpush1.msra.mxu0 0.0
    %1138 = vmatprep.subr.mxu0 0.0
    %1139 = vmatpush1.msra.mxu0 0.0
    %1140 = vmatprep.subr.mxu0 0.0
    %1141 = vmatpush1.msra.mxu0 0.0
    %1142 = vmatprep.subr.mxu0 0.0
    %1143 = vmatpush1.msra.mxu0 0.0
    %1144 = vmatprep.subr.mxu0 0.0
    %1145 = vmatpush1.msra.mxu0 0.0
    %1146 = vmatprep.subr.mxu0 0.0
    %1147 = vmatpush1.msra.mxu0 0.0
    %1148 = vmatprep.subr.mxu0 0.0
    %1149 = vmatpush1.msra.mxu0 0.0
    %1150 = vmatprep.subr.mxu0 0.0
    %1151 = vmatpush1.msra.mxu0 0.0
    %1152 = vmatprep.subr.mxu0 0.0
    %1153 = vmatpush1.msra.mxu0 0.0
    %1154 = vmatprep.subr.mxu0 0.0
    %1155 = vmatpush1.msra.mxu0 0.0
    %1156 = vmatprep.subr.mxu0 0.0
    %1157 = vmatpush1.msra.mxu0 0.0
    %1158 = vmatprep.subr.mxu0 0.0
    %1159 = vmatpush1.msra.mxu0 0.0
    %1160 = vmatprep.subr.mxu0 0.0
    %1161 = vmatpush1.msra.mxu0 0.0
    %1162 = vmatprep.subr.mxu0 0.0
    %1163 = vmatpush1.msra.mxu0 0.0
    %1164 = vmatprep.mubr.f32.mxu0 0.0
    %1165 = vmatmul.mubr.f32.gmra.mrb[0].mxu0 %v1098
    %v1166 = vpop.f32.mrb[0].mxu0
    %v1167 = vadd.f32 0.0, %v1166
    %v1168 = vpop.f32.mrb[0].mxu0
    %1169 = vdwg.mxu0
    %1170 = vrot.lane.b32.xlu0 %v367, 64
    %v1171 = vpop.permute.xlu0 %1170
    %v1174 = vsel %vm381, %v1087, 0
    %1176 = vmatprep.subr.mxu0 0.0
    %1177 = vmatpush1.msra.mxu0 %v1171
    %1178 = vmatprep.subr.mxu0 0.0
    %1179 = vmatpush1.msra.mxu0 0.0
    %1180 = vmatprep.subr.mxu0 0.0
    %1181 = vmatpush1.msra.mxu0 0.0
    %1182 = vmatprep.subr.mxu0 0.0
    %1183 = vmatpush1.msra.mxu0 0.0
    %1184 = vmatprep.subr.mxu0 0.0
    %1185 = vmatpush1.msra.mxu0 0.0
    %1186 = vmatprep.subr.mxu0 0.0
    %1187 = vmatpush1.msra.mxu0 0.0
    %1188 = vmatprep.subr.mxu0 0.0
    %1189 = vmatpush1.msra.mxu0 0.0
    %1190 = vmatprep.subr.mxu0 0.0
    %1191 = vmatpush1.msra.mxu0 0.0
    %1192 = vmatprep.subr.mxu0 0.0
    %1193 = vmatpush1.msra.mxu0 0.0
    %1194 = vmatprep.subr.mxu0 0.0
    %1195 = vmatpush1.msra.mxu0 0.0
    %1196 = vmatprep.subr.mxu0 0.0
    %1197 = vmatpush1.msra.mxu0 0.0
    %1198 = vmatprep.subr.mxu0 0.0
    %1199 = vmatpush1.msra.mxu0 0.0
    %1200 = vmatprep.subr.mxu0 0.0
    %1201 = vmatpush1.msra.mxu0 0.0
    %1202 = vmatprep.subr.mxu0 0.0
    %1203 = vmatpush1.msra.mxu0 0.0
    %1204 = vmatprep.subr.mxu0 0.0
    %1205 = vmatpush1.msra.mxu0 0.0
    %1206 = vmatprep.subr.mxu0 0.0
    %1207 = vmatpush1.msra.mxu0 0.0
    %1208 = vmatprep.subr.mxu0 0.0
    %1209 = vmatpush1.msra.mxu0 0.0
    %1210 = vmatprep.subr.mxu0 0.0
    %1211 = vmatpush1.msra.mxu0 0.0
    %1212 = vmatprep.subr.mxu0 0.0
    %1213 = vmatpush1.msra.mxu0 0.0
    %1214 = vmatprep.subr.mxu0 0.0
    %1215 = vmatpush1.msra.mxu0 0.0
    %1216 = vmatprep.subr.mxu0 0.0
    %1217 = vmatpush1.msra.mxu0 0.0
    %1218 = vmatprep.subr.mxu0 0.0
    %1219 = vmatpush1.msra.mxu0 0.0
    %1220 = vmatprep.subr.mxu0 0.0
    %1221 = vmatpush1.msra.mxu0 0.0
    %1222 = vmatprep.subr.mxu0 0.0
    %1223 = vmatpush1.msra.mxu0 0.0
    %1224 = vmatprep.subr.mxu0 0.0
    %1225 = vmatpush1.msra.mxu0 0.0
    %1226 = vmatprep.subr.mxu0 0.0
    %1227 = vmatpush1.msra.mxu0 0.0
    %1228 = vmatprep.subr.mxu0 0.0
    %1229 = vmatpush1.msra.mxu0 0.0
    %1230 = vmatprep.subr.mxu0 0.0
    %1231 = vmatpush1.msra.mxu0 0.0
    %1232 = vmatprep.subr.mxu0 0.0
    %1233 = vmatpush1.msra.mxu0 0.0
    %1234 = vmatprep.subr.mxu0 0.0
    %1235 = vmatpush1.msra.mxu0 0.0
    %1236 = vmatprep.subr.mxu0 0.0
    %1237 = vmatpush1.msra.mxu0 0.0
    %1238 = vmatprep.subr.mxu0 0.0
    %1239 = vmatpush1.msra.mxu0 0.0
    %1240 = vmatprep.mubr.f32.mxu0 0.0
    %1241 = vmatmul.mubr.f32.gmra.mrb[0].mxu0 %v1174
    %v1242 = vpop.f32.mrb[0].mxu0
    %v1243 = vadd.f32 0.0, %v1242
    %v1244 = vpop.f32.mrb[0].mxu0
    %1245 = vdwg.mxu0
    %1246 = vrot.lane.b32.xlu0 %v369, 64
    %v1247 = vpop.permute.xlu0 %1246
    %v1250 = vsel %vm381, %v1088, 0
    %1252 = vmatprep.subr.mxu0 0.0
    %1253 = vmatpush1.msra.mxu0 %v1247
    %1254 = vmatprep.subr.mxu0 0.0
    %1255 = vmatpush1.msra.mxu0 0.0
    %1256 = vmatprep.subr.mxu0 0.0
    %1257 = vmatpush1.msra.mxu0 0.0
    %1258 = vmatprep.subr.mxu0 0.0
    %1259 = vmatpush1.msra.mxu0 0.0
    %1260 = vmatprep.subr.mxu0 0.0
    %1261 = vmatpush1.msra.mxu0 0.0
    %1262 = vmatprep.subr.mxu0 0.0
    %1263 = vmatpush1.msra.mxu0 0.0
    %1264 = vmatprep.subr.mxu0 0.0
    %1265 = vmatpush1.msra.mxu0 0.0
    %1266 = vmatprep.subr.mxu0 0.0
    %1267 = vmatpush1.msra.mxu0 0.0
    %1268 = vmatprep.subr.mxu0 0.0
    %1269 = vmatpush1.msra.mxu0 0.0
    %1270 = vmatprep.subr.mxu0 0.0
    %1271 = vmatpush1.msra.mxu0 0.0
    %1272 = vmatprep.subr.mxu0 0.0
    %1273 = vmatpush1.msra.mxu0 0.0
    %1274 = vmatprep.subr.mxu0 0.0
    %1275 = vmatpush1.msra.mxu0 0.0
    %1276 = vmatprep.subr.mxu0 0.0
    %1277 = vmatpush1.msra.mxu0 0.0
    %1278 = vmatprep.subr.mxu0 0.0
    %1279 = vmatpush1.msra.mxu0 0.0
    %1280 = vmatprep.subr.mxu0 0.0
    %1281 = vmatpush1.msra.mxu0 0.0
    %1282 = vmatprep.subr.mxu0 0.0
    %1283 = vmatpush1.msra.mxu0 0.0
    %1284 = vmatprep.subr.mxu0 0.0
    %1285 = vmatpush1.msra.mxu0 0.0
    %1286 = vmatprep.subr.mxu0 0.0
    %1287 = vmatpush1.msra.mxu0 0.0
    %1288 = vmatprep.subr.mxu0 0.0
    %1289 = vmatpush1.msra.mxu0 0.0
    %1290 = vmatprep.subr.mxu0 0.0
    %1291 = vmatpush1.msra.mxu0 0.0
    %1292 = vmatprep.subr.mxu0 0.0
    %1293 = vmatpush1.msra.mxu0 0.0
    %1294 = vmatprep.subr.mxu0 0.0
    %1295 = vmatpush1.msra.mxu0 0.0
    %1296 = vmatprep.subr.mxu0 0.0
    %1297 = vmatpush1.msra.mxu0 0.0
    %1298 = vmatprep.subr.mxu0 0.0
    %1299 = vmatpush1.msra.mxu0 0.0
    %1300 = vmatprep.subr.mxu0 0.0
    %1301 = vmatpush1.msra.mxu0 0.0
    %1302 = vmatprep.subr.mxu0 0.0
    %1303 = vmatpush1.msra.mxu0 0.0
    %1304 = vmatprep.subr.mxu0 0.0
    %1305 = vmatpush1.msra.mxu0 0.0
    %1306 = vmatprep.subr.mxu0 0.0
    %1307 = vmatpush1.msra.mxu0 0.0
    %1308 = vmatprep.subr.mxu0 0.0
    %1309 = vmatpush1.msra.mxu0 0.0
    %1310 = vmatprep.subr.mxu0 0.0
    %1311 = vmatpush1.msra.mxu0 0.0
    %1312 = vmatprep.subr.mxu0 0.0
    %1313 = vmatpush1.msra.mxu0 0.0
    %1314 = vmatprep.subr.mxu0 0.0
    %1315 = vmatpush1.msra.mxu0 0.0
    %1316 = vmatprep.mubr.f32.mxu0 0.0
    %1317 = vmatmul.mubr.f32.gmra.mrb[0].mxu0 %v1250
    %v1318 = vpop.f32.mrb[0].mxu0
    %v1319 = vadd.f32 0.0, %v1318
    %v1320 = vpop.f32.mrb[0].mxu0
    %1321 = vdwg.mxu0
    %1322 = vrot.lane.b32.xlu0 %v371, 64
    %v1323 = vpop.permute.xlu0 %1322
    %v1326 = vsel %vm381, %v1089, 0
    %1328 = vmatprep.subr.mxu0 0.0
    %1329 = vmatpush1.msra.mxu0 %v1323
    %1330 = vmatprep.subr.mxu0 0.0
    %1331 = vmatpush1.msra.mxu0 0.0
    %1332 = vmatprep.subr.mxu0 0.0
    %1333 = vmatpush1.msra.mxu0 0.0
    %1334 = vmatprep.subr.mxu0 0.0
    %1335 = vmatpush1.msra.mxu0 0.0
    %1336 = vmatprep.subr.mxu0 0.0
    %1337 = vmatpush1.msra.mxu0 0.0
    %1338 = vmatprep.subr.mxu0 0.0
    %1339 = vmatpush1.msra.mxu0 0.0
    %1340 = vmatprep.subr.mxu0 0.0
    %1341 = vmatpush1.msra.mxu0 0.0
    %1342 = vmatprep.subr.mxu0 0.0
    %1343 = vmatpush1.msra.mxu0 0.0
    %1344 = vmatprep.subr.mxu0 0.0
    %1345 = vmatpush1.msra.mxu0 0.0
    %1346 = vmatprep.subr.mxu0 0.0
    %1347 = vmatpush1.msra.mxu0 0.0
    %1348 = vmatprep.subr.mxu0 0.0
    %1349 = vmatpush1.msra.mxu0 0.0
    %1350 = vmatprep.subr.mxu0 0.0
    %1351 = vmatpush1.msra.mxu0 0.0
    %1352 = vmatprep.subr.mxu0 0.0
    %1353 = vmatpush1.msra.mxu0 0.0
    %1354 = vmatprep.subr.mxu0 0.0
    %1355 = vmatpush1.msra.mxu0 0.0
    %1356 = vmatprep.subr.mxu0 0.0
    %1357 = vmatpush1.msra.mxu0 0.0
    %1358 = vmatprep.subr.mxu0 0.0
    %1359 = vmatpush1.msra.mxu0 0.0
    %1360 = vmatprep.subr.mxu0 0.0
    %1361 = vmatpush1.msra.mxu0 0.0
    %1362 = vmatprep.subr.mxu0 0.0
    %1363 = vmatpush1.msra.mxu0 0.0
    %1364 = vmatprep.subr.mxu0 0.0
    %1365 = vmatpush1.msra.mxu0 0.0
    %1366 = vmatprep.subr.mxu0 0.0
    %1367 = vmatpush1.msra.mxu0 0.0
    %1368 = vmatprep.subr.mxu0 0.0
    %1369 = vmatpush1.msra.mxu0 0.0
    %1370 = vmatprep.subr.mxu0 0.0
    %1371 = vmatpush1.msra.mxu0 0.0
    %1372 = vmatprep.subr.mxu0 0.0
    %1373 = vmatpush1.msra.mxu0 0.0
    %1374 = vmatprep.subr.mxu0 0.0
    %1375 = vmatpush1.msra.mxu0 0.0
    %1376 = vmatprep.subr.mxu0 0.0
    %1377 = vmatpush1.msra.mxu0 0.0
    %1378 = vmatprep.subr.mxu0 0.0
    %1379 = vmatpush1.msra.mxu0 0.0
    %1380 = vmatprep.subr.mxu0 0.0
    %1381 = vmatpush1.msra.mxu0 0.0
    %1382 = vmatprep.subr.mxu0 0.0
    %1383 = vmatpush1.msra.mxu0 0.0
    %1384 = vmatprep.subr.mxu0 0.0
    %1385 = vmatpush1.msra.mxu0 0.0
    %1386 = vmatprep.subr.mxu0 0.0
    %1387 = vmatpush1.msra.mxu0 0.0
    %1388 = vmatprep.subr.mxu0 0.0
    %1389 = vmatpush1.msra.mxu0 0.0
    %1390 = vmatprep.subr.mxu0 0.0
    %1391 = vmatpush1.msra.mxu0 0.0
    %1392 = vmatprep.mubr.f32.mxu0 0.0
    %1393 = vmatmul.mubr.f32.gmra.mrb[0].mxu0 %v1326
    %v1394 = vpop.f32.mrb[0].mxu0
    %v1395 = vadd.f32 0.0, %v1394
    %v1396 = vpop.f32.mrb[0].mxu0
    %1397 = vdwg.mxu0
    %1398 = vrot.lane.b32.xlu0 %v362, 64
    %v1399 = vpop.permute.xlu0 %1398
    %v1402 = vsel %vm381, %v1090, 0
    %1404 = vmatprep.subr.mxu0 0.0
    %1405 = vmatpush1.msra.mxu0 %v1399
    %1406 = vmatprep.subr.mxu0 0.0
    %1407 = vmatpush1.msra.mxu0 0.0
    %1408 = vmatprep.subr.mxu0 0.0
    %1409 = vmatpush1.msra.mxu0 0.0
    %1410 = vmatprep.subr.mxu0 0.0
    %1411 = vmatpush1.msra.mxu0 0.0
    %1412 = vmatprep.subr.mxu0 0.0
    %1413 = vmatpush1.msra.mxu0 0.0
    %1414 = vmatprep.subr.mxu0 0.0
    %1415 = vmatpush1.msra.mxu0 0.0
    %1416 = vmatprep.subr.mxu0 0.0
    %1417 = vmatpush1.msra.mxu0 0.0
    %1418 = vmatprep.subr.mxu0 0.0
    %1419 = vmatpush1.msra.mxu0 0.0
    %1420 = vmatprep.subr.mxu0 0.0
    %1421 = vmatpush1.msra.mxu0 0.0
    %1422 = vmatprep.subr.mxu0 0.0
    %1423 = vmatpush1.msra.mxu0 0.0
    %1424 = vmatprep.subr.mxu0 0.0
    %1425 = vmatpush1.msra.mxu0 0.0
    %1426 = vmatprep.subr.mxu0 0.0
    %1427 = vmatpush1.msra.mxu0 0.0
    %1428 = vmatprep.subr.mxu0 0.0
    %1429 = vmatpush1.msra.mxu0 0.0
    %1430 = vmatprep.subr.mxu0 0.0
    %1431 = vmatpush1.msra.mxu0 0.0
    %1432 = vmatprep.subr.mxu0 0.0
    %1433 = vmatpush1.msra.mxu0 0.0
    %1434 = vmatprep.subr.mxu0 0.0
    %1435 = vmatpush1.msra.mxu0 0.0
    %1436 = vmatprep.subr.mxu0 0.0
    %1437 = vmatpush1.msra.mxu0 0.0
    %1438 = vmatprep.subr.mxu0 0.0
    %1439 = vmatpush1.msra.mxu0 0.0
    %1440 = vmatprep.subr.mxu0 0.0
    %1441 = vmatpush1.msra.mxu0 0.0
    %1442 = vmatprep.subr.mxu0 0.0
    %1443 = vmatpush1.msra.mxu0 0.0
    %1444 = vmatprep.subr.mxu0 0.0
    %1445 = vmatpush1.msra.mxu0 0.0
    %1446 = vmatprep.subr.mxu0 0.0
    %1447 = vmatpush1.msra.mxu0 0.0
    %1448 = vmatprep.subr.mxu0 0.0
    %1449 = vmatpush1.msra.mxu0 0.0
    %1450 = vmatprep.subr.mxu0 0.0
    %1451 = vmatpush1.msra.mxu0 0.0
    %1452 = vmatprep.subr.mxu0 0.0
    %1453 = vmatpush1.msra.mxu0 0.0
    %1454 = vmatprep.subr.mxu0 0.0
    %1455 = vmatpush1.msra.mxu0 0.0
    %1456 = vmatprep.subr.mxu0 0.0
    %1457 = vmatpush1.msra.mxu0 0.0
    %1458 = vmatprep.subr.mxu0 0.0
    %1459 = vmatpush1.msra.mxu0 0.0
    %1460 = vmatprep.subr.mxu0 0.0
    %1461 = vmatpush1.msra.mxu0 0.0
    %1462 = vmatprep.subr.mxu0 0.0
    %1463 = vmatpush1.msra.mxu0 0.0
    %1464 = vmatprep.subr.mxu0 0.0
    %1465 = vmatpush1.msra.mxu0 0.0
    %1466 = vmatprep.subr.mxu0 0.0
    %1467 = vmatpush1.msra.mxu0 0.0
    %1468 = vmatprep.mubr.f32.mxu0 0.0
    %1469 = vmatmul.mubr.f32.gmra.mrb[0].mxu0 %v1402
    %v1470 = vpop.f32.mrb[0].mxu0
    %v1471 = vadd.f32 0.0, %v1470
    %v1472 = vpop.f32.mrb[0].mxu0
    %1473 = vdwg.mxu0
    %1474 = vrot.lane.b32.xlu0 %v374, 64
    %v1475 = vpop.permute.xlu0 %1474
    %v1478 = vsel %vm381, %v1091, 0
    %1480 = vmatprep.subr.mxu0 0.0
    %1481 = vmatpush1.msra.mxu0 %v1475
    %1482 = vmatprep.subr.mxu0 0.0
    %1483 = vmatpush1.msra.mxu0 0.0
    %1484 = vmatprep.subr.mxu0 0.0
    %1485 = vmatpush1.msra.mxu0 0.0
    %1486 = vmatprep.subr.mxu0 0.0
    %1487 = vmatpush1.msra.mxu0 0.0
    %1488 = vmatprep.subr.mxu0 0.0
    %1489 = vmatpush1.msra.mxu0 0.0
    %1490 = vmatprep.subr.mxu0 0.0
    %1491 = vmatpush1.msra.mxu0 0.0
    %1492 = vmatprep.subr.mxu0 0.0
    %1493 = vmatpush1.msra.mxu0 0.0
    %1494 = vmatprep.subr.mxu0 0.0
    %1495 = vmatpush1.msra.mxu0 0.0
    %1496 = vmatprep.subr.mxu0 0.0
    %1497 = vmatpush1.msra.mxu0 0.0
    %1498 = vmatprep.subr.mxu0 0.0
    %1499 = vmatpush1.msra.mxu0 0.0
    %1500 = vmatprep.subr.mxu0 0.0
    %1501 = vmatpush1.msra.mxu0 0.0
    %1502 = vmatprep.subr.mxu0 0.0
    %1503 = vmatpush1.msra.mxu0 0.0
    %1504 = vmatprep.subr.mxu0 0.0
    %1505 = vmatpush1.msra.mxu0 0.0
    %1506 = vmatprep.subr.mxu0 0.0
    %1507 = vmatpush1.msra.mxu0 0.0
    %1508 = vmatprep.subr.mxu0 0.0
    %1509 = vmatpush1.msra.mxu0 0.0
    %1510 = vmatprep.subr.mxu0 0.0
    %1511 = vmatpush1.msra.mxu0 0.0
    %1512 = vmatprep.subr.mxu0 0.0
    %1513 = vmatpush1.msra.mxu0 0.0
    %1514 = vmatprep.subr.mxu0 0.0
    %1515 = vmatpush1.msra.mxu0 0.0
    %1516 = vmatprep.subr.mxu0 0.0
    %1517 = vmatpush1.msra.mxu0 0.0
    %1518 = vmatprep.subr.mxu0 0.0
    %1519 = vmatpush1.msra.mxu0 0.0
    %1520 = vmatprep.subr.mxu0 0.0
    %1521 = vmatpush1.msra.mxu0 0.0
    %1522 = vmatprep.subr.mxu0 0.0
    %1523 = vmatpush1.msra.mxu0 0.0
    %1524 = vmatprep.subr.mxu0 0.0
    %1525 = vmatpush1.msra.mxu0 0.0
    %1526 = vmatprep.subr.mxu0 0.0
    %1527 = vmatpush1.msra.mxu0 0.0
    %1528 = vmatprep.subr.mxu0 0.0
    %1529 = vmatpush1.msra.mxu0 0.0
    %1530 = vmatprep.subr.mxu0 0.0
    %1531 = vmatpush1.msra.mxu0 0.0
    %1532 = vmatprep.subr.mxu0 0.0
    %1533 = vmatpush1.msra.mxu0 0.0
    %1534 = vmatprep.subr.mxu0 0.0
    %1535 = vmatpush1.msra.mxu0 0.0
    %1536 = vmatprep.subr.mxu0 0.0
    %1537 = vmatpush1.msra.mxu0 0.0
    %1538 = vmatprep.subr.mxu0 0.0
    %1539 = vmatpush1.msra.mxu0 0.0
    %1540 = vmatprep.subr.mxu0 0.0
    %1541 = vmatpush1.msra.mxu0 0.0
    %1542 = vmatprep.subr.mxu0 0.0
    %1543 = vmatpush1.msra.mxu0 0.0
    %1544 = vmatprep.mubr.f32.mxu0 0.0
    %1545 = vmatmul.mubr.f32.gmra.mrb[0].mxu0 %v1478
    %v1546 = vpop.f32.mrb[0].mxu0
    %v1547 = vadd.f32 0.0, %v1546
    %v1548 = vpop.f32.mrb[0].mxu0
    %1549 = vdwg.mxu0
    %1550 = vrot.lane.b32.xlu0 %v376, 64
    %v1551 = vpop.permute.xlu0 %1550
    %v1554 = vsel %vm381, %v1092, 0
    %1556 = vmatprep.subr.mxu0 0.0
    %1557 = vmatpush1.msra.mxu0 %v1551
    %1558 = vmatprep.subr.mxu0 0.0
    %1559 = vmatpush1.msra.mxu0 0.0
    %1560 = vmatprep.subr.mxu0 0.0
    %1561 = vmatpush1.msra.mxu0 0.0
    %1562 = vmatprep.subr.mxu0 0.0
    %1563 = vmatpush1.msra.mxu0 0.0
    %1564 = vmatprep.subr.mxu0 0.0
    %1565 = vmatpush1.msra.mxu0 0.0
    %1566 = vmatprep.subr.mxu0 0.0
    %1567 = vmatpush1.msra.mxu0 0.0
    %1568 = vmatprep.subr.mxu0 0.0
    %1569 = vmatpush1.msra.mxu0 0.0
    %1570 = vmatprep.subr.mxu0 0.0
    %1571 = vmatpush1.msra.mxu0 0.0
    %1572 = vmatprep.subr.mxu0 0.0
    %1573 = vmatpush1.msra.mxu0 0.0
    %1574 = vmatprep.subr.mxu0 0.0
    %1575 = vmatpush1.msra.mxu0 0.0
    %1576 = vmatprep.subr.mxu0 0.0
    %1577 = vmatpush1.msra.mxu0 0.0
    %1578 = vmatprep.subr.mxu0 0.0
    %1579 = vmatpush1.msra.mxu0 0.0
    %1580 = vmatprep.subr.mxu0 0.0
    %1581 = vmatpush1.msra.mxu0 0.0
    %1582 = vmatprep.subr.mxu0 0.0
    %1583 = vmatpush1.msra.mxu0 0.0
    %1584 = vmatprep.subr.mxu0 0.0
    %1585 = vmatpush1.msra.mxu0 0.0
    %1586 = vmatprep.subr.mxu0 0.0
    %1587 = vmatpush1.msra.mxu0 0.0
    %1588 = vmatprep.subr.mxu0 0.0
    %1589 = vmatpush1.msra.mxu0 0.0
    %1590 = vmatprep.subr.mxu0 0.0
    %1591 = vmatpush1.msra.mxu0 0.0
    %1592 = vmatprep.subr.mxu0 0.0
    %1593 = vmatpush1.msra.mxu0 0.0
    %1594 = vmatprep.subr.mxu0 0.0
    %1595 = vmatpush1.msra.mxu0 0.0
    %1596 = vmatprep.subr.mxu0 0.0
    %1597 = vmatpush1.msra.mxu0 0.0
    %1598 = vmatprep.subr.mxu0 0.0
    %1599 = vmatpush1.msra.mxu0 0.0
    %1600 = vmatprep.subr.mxu0 0.0
    %1601 = vmatpush1.msra.mxu0 0.0
    %1602 = vmatprep.subr.mxu0 0.0
    %1603 = vmatpush1.msra.mxu0 0.0
    %1604 = vmatprep.subr.mxu0 0.0
    %1605 = vmatpush1.msra.mxu0 0.0
    %1606 = vmatprep.subr.mxu0 0.0
    %1607 = vmatpush1.msra.mxu0 0.0
    %1608 = vmatprep.subr.mxu0 0.0
    %1609 = vmatpush1.msra.mxu0 0.0
    %1610 = vmatprep.subr.mxu0 0.0
    %1611 = vmatpush1.msra.mxu0 0.0
    %1612 = vmatprep.subr.mxu0 0.0
    %1613 = vmatpush1.msra.mxu0 0.0
    %1614 = vmatprep.subr.mxu0 0.0
    %1615 = vmatpush1.msra.mxu0 0.0
    %1616 = vmatprep.subr.mxu0 0.0
    %1617 = vmatpush1.msra.mxu0 0.0
    %1618 = vmatprep.subr.mxu0 0.0
    %1619 = vmatpush1.msra.mxu0 0.0
    %1620 = vmatprep.mubr.f32.mxu0 0.0
    %1621 = vmatmul.mubr.f32.gmra.mrb[0].mxu0 %v1554
    %v1622 = vpop.f32.mrb[0].mxu0
    %v1623 = vadd.f32 0.0, %v1622
    %v1624 = vpop.f32.mrb[0].mxu0
    %1625 = vdwg.mxu0
    %1626 = vrot.lane.b32.xlu0 %v378, 64
    %v1627 = vpop.permute.xlu0 %1626
    %v1630 = vsel %vm381, %v1093, 0
    %1632 = vmatprep.subr.mxu0 0.0
    %1633 = vmatpush1.msra.mxu0 %v1627
    %1634 = vmatprep.subr.mxu0 0.0
    %1635 = vmatpush1.msra.mxu0 0.0
    %1636 = vmatprep.subr.mxu0 0.0
    %1637 = vmatpush1.msra.mxu0 0.0
    %1638 = vmatprep.subr.mxu0 0.0
    %1639 = vmatpush1.msra.mxu0 0.0
    %1640 = vmatprep.subr.mxu0 0.0
    %1641 = vmatpush1.msra.mxu0 0.0
    %1642 = vmatprep.subr.mxu0 0.0
    %1643 = vmatpush1.msra.mxu0 0.0
    %1644 = vmatprep.subr.mxu0 0.0
    %1645 = vmatpush1.msra.mxu0 0.0
    %1646 = vmatprep.subr.mxu0 0.0
    %1647 = vmatpush1.msra.mxu0 0.0
    %1648 = vmatprep.subr.mxu0 0.0
    %1649 = vmatpush1.msra.mxu0 0.0
    %1650 = vmatprep.subr.mxu0 0.0
    %1651 = vmatpush1.msra.mxu0 0.0
    %1652 = vmatprep.subr.mxu0 0.0
    %1653 = vmatpush1.msra.mxu0 0.0
    %1654 = vmatprep.subr.mxu0 0.0
    %1655 = vmatpush1.msra.mxu0 0.0
    %1656 = vmatprep.subr.mxu0 0.0
    %1657 = vmatpush1.msra.mxu0 0.0
    %1658 = vmatprep.subr.mxu0 0.0
    %1659 = vmatpush1.msra.mxu0 0.0
    %1660 = vmatprep.subr.mxu0 0.0
    %1661 = vmatpush1.msra.mxu0 0.0
    %1662 = vmatprep.subr.mxu0 0.0
    %1663 = vmatpush1.msra.mxu0 0.0
    %1664 = vmatprep.subr.mxu0 0.0
    %1665 = vmatpush1.msra.mxu0 0.0
    %1666 = vmatprep.subr.mxu0 0.0
    %1667 = vmatpush1.msra.mxu0 0.0
    %1668 = vmatprep.subr.mxu0 0.0
    %1669 = vmatpush1.msra.mxu0 0.0
    %1670 = vmatprep.subr.mxu0 0.0
    %1671 = vmatpush1.msra.mxu0 0.0
    %1672 = vmatprep.subr.mxu0 0.0
    %1673 = vmatpush1.msra.mxu0 0.0
    %1674 = vmatprep.subr.mxu0 0.0
    %1675 = vmatpush1.msra.mxu0 0.0
    %1676 = vmatprep.subr.mxu0 0.0
    %1677 = vmatpush1.msra.mxu0 0.0
    %1678 = vmatprep.subr.mxu0 0.0
    %1679 = vmatpush1.msra.mxu0 0.0
    %1680 = vmatprep.subr.mxu0 0.0
    %1681 = vmatpush1.msra.mxu0 0.0
    %1682 = vmatprep.subr.mxu0 0.0
    %1683 = vmatpush1.msra.mxu0 0.0
    %1684 = vmatprep.subr.mxu0 0.0
    %1685 = vmatpush1.msra.mxu0 0.0
    %1686 = vmatprep.subr.mxu0 0.0
    %1687 = vmatpush1.msra.mxu0 0.0
    %1688 = vmatprep.subr.mxu0 0.0
    %1689 = vmatpush1.msra.mxu0 0.0
    %1690 = vmatprep.subr.mxu0 0.0
    %1691 = vmatpush1.msra.mxu0 0.0
    %1692 = vmatprep.subr.mxu0 0.0
    %1693 = vmatpush1.msra.mxu0 0.0
    %1694 = vmatprep.subr.mxu0 0.0
    %1695 = vmatpush1.msra.mxu0 0.0
    %1696 = vmatprep.mubr.f32.mxu0 0.0
    %1697 = vmatmul.mubr.f32.gmra.mrb[0].mxu0 %v1630
    %v1698 = vpop.f32.mrb[0].mxu0
    %v1699 = vadd.f32 0.0, %v1698
    %v1700 = vpop.f32.mrb[0].mxu0
    %1701 = vdwg.mxu0
    %1703 = vrot.lane.b32.xlu0 %v1243, 8
    %v1704 = vpop.permute.xlu0 %1703
    %1707 = vrot.lane.b32.xlu0 %v1319, 16
    %v1708 = vpop.permute.xlu0 %1707
    %1711 = vrot.lane.b32.xlu0 %v1395, 24
    %v1712 = vpop.permute.xlu0 %1711
    %v1714 = vsel %vm381, %v1167, %v1704
    %vm1715 = vcmask 130048
    %v1716 = vsel %vm1715, %v1714, %v1708
    %vm1717 = vcmask 195584
    %v1718 = vsel %vm1717, %v1716, %v1712
    %1720 = vrot.lane.b32.xlu0 %v1547, 8
    %v1721 = vpop.permute.xlu0 %1720
    %1724 = vrot.lane.b32.xlu0 %v1623, 16
    %v1725 = vpop.permute.xlu0 %1724
    %1728 = vrot.lane.b32.xlu0 %v1699, 24
    %v1729 = vpop.permute.xlu0 %1728
    %v1731 = vsel %vm381, %v1471, %v1721
    %v1732 = vsel %vm1715, %v1731, %v1725
    %v1733 = vsel %vm1717, %v1732, %v1729
    %v1734 = vld [vmem:[%s13] sm:$0xff]
    %v1735 = vld [vmem:[%s13 + $0x8] sm:$0xff]
    %v1736 = vld [vmem:[%s13 + $0x10] sm:$0xff]
    %v1737 = vld [vmem:[%s13 + $0x18] sm:$0xff]
    %v1739 = vsel %vm236, %v1718, 0
    %v1742 = vsel %vm236, %v1733, 0
    %1744 = vmatprep.subr.mxu0 0.0
    %1745 = vmatpush1.msra.mxu0 %v1734
    %1746 = vmatprep.subr.mxu0 0.0
    %1747 = vmatpush1.msra.mxu0 %v1735
    %1748 = vmatprep.subr.mxu0 0.0
    %1749 = vmatpush1.msra.mxu0 %v1736
    %1750 = vmatprep.subr.mxu0 0.0
    %1751 = vmatpush1.msra.mxu0 %v1737
    %1752 = vmatprep.subr.mxu0 0.0
    %1753 = vmatpush1.msra.mxu0 0.0
    %1754 = vmatprep.subr.mxu0 0.0
    %1755 = vmatpush1.msra.mxu0 0.0
    %1756 = vmatprep.subr.mxu0 0.0
    %1757 = vmatpush1.msra.mxu0 0.0
    %1758 = vmatprep.subr.mxu0 0.0
    %1759 = vmatpush1.msra.mxu0 0.0
    %1760 = vmatprep.subr.mxu0 0.0
    %1761 = vmatpush1.msra.mxu0 0.0
    %1762 = vmatprep.subr.mxu0 0.0
    %1763 = vmatpush1.msra.mxu0 0.0
    %1764 = vmatprep.subr.mxu0 0.0
    %1765 = vmatpush1.msra.mxu0 0.0
    %1766 = vmatprep.subr.mxu0 0.0
    %1767 = vmatpush1.msra.mxu0 0.0
    %1768 = vmatprep.subr.mxu0 0.0
    %1769 = vmatpush1.msra.mxu0 0.0
    %1770 = vmatprep.subr.mxu0 0.0
    %1771 = vmatpush1.msra.mxu0 0.0
    %1772 = vmatprep.subr.mxu0 0.0
    %1773 = vmatpush1.msra.mxu0 0.0
    %1774 = vmatprep.subr.mxu0 0.0
    %1775 = vmatpush1.msra.mxu0 0.0
    %1776 = vmatprep.subr.mxu0 0.0
    %1777 = vmatpush1.msra.mxu0 0.0
    %1778 = vmatprep.subr.mxu0 0.0
    %1779 = vmatpush1.msra.mxu0 0.0
    %1780 = vmatprep.subr.mxu0 0.0
    %1781 = vmatpush1.msra.mxu0 0.0
    %1782 = vmatprep.subr.mxu0 0.0
    %1783 = vmatpush1.msra.mxu0 0.0
    %1784 = vmatprep.subr.mxu0 0.0
    %1785 = vmatpush1.msra.mxu0 0.0
    %1786 = vmatprep.subr.mxu0 0.0
    %1787 = vmatpush1.msra.mxu0 0.0
    %1788 = vmatprep.subr.mxu0 0.0
    %1789 = vmatpush1.msra.mxu0 0.0
    %1790 = vmatprep.subr.mxu0 0.0
    %1791 = vmatpush1.msra.mxu0 0.0
    %1792 = vmatprep.subr.mxu0 0.0
    %1793 = vmatpush1.msra.mxu0 0.0
    %1794 = vmatprep.subr.mxu0 0.0
    %1795 = vmatpush1.msra.mxu0 0.0
    %1796 = vmatprep.subr.mxu0 0.0
    %1797 = vmatpush1.msra.mxu0 0.0
    %1798 = vmatprep.subr.mxu0 0.0
    %1799 = vmatpush1.msra.mxu0 0.0
    %1800 = vmatprep.subr.mxu0 0.0
    %1801 = vmatpush1.msra.mxu0 0.0
    %1802 = vmatprep.subr.mxu0 0.0
    %1803 = vmatpush1.msra.mxu0 0.0
    %1804 = vmatprep.subr.mxu0 0.0
    %1805 = vmatpush1.msra.mxu0 0.0
    %1806 = vmatprep.subr.mxu0 0.0
    %1807 = vmatpush1.msra.mxu0 0.0
    %1808 = vmatprep.mubr.f32.mxu0 0.0
    %1809 = vmatmul.mubr.f32.gmra.mrb[0].mxu0 %v1739
    %v1810 = vpop.f32.mrb[0].mxu0
    %v1811 = vadd.f32 0.0, %v1810
    %v1812 = vpop.f32.mrb[0].mxu0
    %1813 = vmatprep.mubr.f32.mxu0 0.0
    %1814 = vmatmul.mubr.f32.gmra.mrb[0].mxu0 %v1742
    %v1815 = vpop.f32.mrb[0].mxu0
    %v1816 = vadd.f32 0.0, %v1815
    %v1817 = vpop.f32.mrb[0].mxu0
    %1818 = vdwg.mxu0
    %v1819 = vadd.f32 %v223, %v1811
    %v1820 = vadd.f32 %v228, %v1816
    %v1821 = vld [vmem:[%s15] sm:$0x1]
    %v1823 = vlaneseq
    %v1824 = vshrl.u32 %v1823, 7
    %v1825 = vsub.s32 0, %v1824
    %v1826 = vrot.slane %v1821, %v1825
    %v1828 = vadd.f32 %v1819, %v1826
    %v1829 = vadd.f32 %v1820, %v1826
    %v1830 = vld [vmem:[%s17] sm:$0x1]
    %v1831 = vld [vmem:[%s19] sm:$0x1]
    %v1832 = vsel %vm236, %v1828, 0.0
    %1833 = vadd.xlane.f32.xlu0 %v1832
    %v1834 = vpop.xlane.xlu0 %1833
    %v1835 = vsel %vm236, %v1829, 0.0
    %1836 = vadd.xlane.f32.xlu0 %v1835
    %v1837 = vpop.xlane.xlu0 %1836
    %v1838 = vmul.f32 %v1834, %v243
    %v1839 = vmul.f32 %v1837, %v243
    %v1840 = vsub.f32 %v1828, %v1838
    %v1841 = vsub.f32 %v1829, %v1839
    %v1842 = vmul.f32 %v1840, %v1840
    %v1843 = vmul.f32 %v1841, %v1841
    %v1844 = vsel %vm236, %v1842, 0.0
    %1845 = vadd.xlane.f32.xlu0 %v1844
    %v1846 = vpop.xlane.xlu0 %1845
    %v1847 = vsel %vm236, %v1843, 0.0
    %1848 = vadd.xlane.f32.xlu0 %v1847
    %v1849 = vpop.xlane.xlu0 %1848
    %v1850 = vmul.f32 %v1846, %v243
    %v1851 = vmul.f32 %v1849, %v243
    %v1852 = vadd.f32 %v1850, 1e-05
    %v1853 = vadd.f32 %v1851, 1e-05
    %v1854 = vrsqrt.pop %v1852
    %v1855 = vrsqrt.pop %v1853
    %v1856 = vmul.f32 %v1840, %v1854
    %v1857 = vmul.f32 %v1841, %v1855
    %v1859 = vlaneseq
    %v1860 = vshrl.u32 %v1859, 7
    %v1861 = vsub.s32 0, %v1860
    %v1862 = vrot.slane %v1830, %v1861
    %v1864 = vmul.f32 %v1856, %v1862
    %v1865 = vmul.f32 %v1857, %v1862
    %v1867 = vlaneseq
    %v1868 = vshrl.u32 %v1867, 7
    %v1869 = vsub.s32 0, %v1868
    %v1870 = vrot.slane %v1831, %v1869
    %v1872 = vadd.f32 %v1864, %v1870
    %v1873 = vadd.f32 %v1865, %v1870
    %v1874 = vld [vmem:[%s21] sm:$0xff]
    %v1875 = vld [vmem:[%s21 + $0x8] sm:$0xff]
    %v1876 = vld [vmem:[%s21 + $0x10] sm:$0xff]
    %v1877 = vld [vmem:[%s21 + $0x18] sm:$0xff]
    %v1878 = vld [vmem:[%s23] sm:$0x1]
    %v1880 = vlaneseq
    %v1881 = vshrl.u32 %v1880, 7
    %v1882 = vsub.s32 0, %v1881
    %v1883 = vrot.slane %v1878, %v1882
    %v1886 = vsel %vm236, %v1872, 0
    %v1889 = vsel %vm236, %v1873, 0
    %1891 = vmatprep.subr.mxu0 0.0
    %1892 = vmatpush1.msra.mxu0 %v1874
    %1893 = vmatprep.subr.mxu0 0.0
    %1894 = vmatpush1.msra.mxu0 %v1875
    %1895 = vmatprep.subr.mxu0 0.0
    %1896 = vmatpush1.msra.mxu0 %v1876
    %1897 = vmatprep.subr.mxu0 0.0
    %1898 = vmatpush1.msra.mxu0 %v1877
    %1899 = vmatprep.subr.mxu0 0.0
    %1900 = vmatpush1.msra.mxu0 0.0
    %1901 = vmatprep.subr.mxu0 0.0
    %1902 = vmatpush1.msra.mxu0 0.0
    %1903 = vmatprep.subr.mxu0 0.0
    %1904 = vmatpush1.msra.mxu0 0.0
    %1905 = vmatprep.subr.mxu0 0.0
    %1906 = vmatpush1.msra.mxu0 0.0
    %1907 = vmatprep.subr.mxu0 0.0
    %1908 = vmatpush1.msra.mxu0 0.0
    %1909 = vmatprep.subr.mxu0 0.0
    %1910 = vmatpush1.msra.mxu0 0.0
    %1911 = vmatprep.subr.mxu0 0.0
    %1912 = vmatpush1.msra.mxu0 0.0
    %1913 = vmatprep.subr.mxu0 0.0
    %1914 = vmatpush1.msra.mxu0 0.0
    %1915 = vmatprep.subr.mxu0 0.0
    %1916 = vmatpush1.msra.mxu0 0.0
    %1917 = vmatprep.subr.mxu0 0.0
    %1918 = vmatpush1.msra.mxu0 0.0
    %1919 = vmatprep.subr.mxu0 0.0
    %1920 = vmatpush1.msra.mxu0 0.0
    %1921 = vmatprep.subr.mxu0 0.0
    %1922 = vmatpush1.msra.mxu0 0.0
    %1923 = vmatprep.subr.mxu0 0.0
    %1924 = vmatpush1.msra.mxu0 0.0
    %1925 = vmatprep.subr.mxu0 0.0
    %1926 = vmatpush1.msra.mxu0 0.0
    %1927 = vmatprep.subr.mxu0 0.0
    %1928 = vmatpush1.msra.mxu0 0.0
    %1929 = vmatprep.subr.mxu0 0.0
    %1930 = vmatpush1.msra.mxu0 0.0
    %1931 = vmatprep.subr.mxu0 0.0
    %1932 = vmatpush1.msra.mxu0 0.0
    %1933 = vmatprep.subr.mxu0 0.0
    %1934 = vmatpush1.msra.mxu0 0.0
    %1935 = vmatprep.subr.mxu0 0.0
    %1936 = vmatpush1.msra.mxu0 0.0
    %1937 = vmatprep.subr.mxu0 0.0
    %1938 = vmatpush1.msra.mxu0 0.0
    %1939 = vmatprep.subr.mxu0 0.0
    %1940 = vmatpush1.msra.mxu0 0.0
    %1941 = vmatprep.subr.mxu0 0.0
    %1942 = vmatpush1.msra.mxu0 0.0
    %1943 = vmatprep.subr.mxu0 0.0
    %1944 = vmatpush1.msra.mxu0 0.0
    %1945 = vmatprep.subr.mxu0 0.0
    %1946 = vmatpush1.msra.mxu0 0.0
    %1947 = vmatprep.subr.mxu0 0.0
    %1948 = vmatpush1.msra.mxu0 0.0
    %1949 = vmatprep.subr.mxu0 0.0
    %1950 = vmatpush1.msra.mxu0 0.0
    %1951 = vmatprep.subr.mxu0 0.0
    %1952 = vmatpush1.msra.mxu0 0.0
    %1953 = vmatprep.subr.mxu0 0.0
    %1954 = vmatpush1.msra.mxu0 0.0
    %1955 = vmatprep.mubr.f32.mxu0 0.0
    %1956 = vmatmul.mubr.f32.gmra.mrb[0].mxu0 %v1886
    %v1957 = vpop.f32.mrb[0].mxu0
    %v1958 = vadd.f32 %v1883, %v1957
    %v1959 = vpop.f32.mrb[0].mxu0
    %1960 = vmatprep.mubr.f32.mxu0 0.0
    %1961 = vmatmul.mubr.f32.gmra.mrb[0].mxu0 %v1889
    %v1962 = vpop.f32.mrb[0].mxu0
    %v1963 = vadd.f32 %v1883, %v1962
    %v1964 = vpop.f32.mrb[0].mxu0
    %1965 = vdwg.mxu0
    %v1966 = vmax.f32 %v1958, 0.0
    %v1967 = vmax.f32 %v1963, 0.0
    %v1968 = vld [vmem:[%s25] sm:$0xff]
    %v1969 = vld [vmem:[%s25 + $0x8] sm:$0xff]
    %v1970 = vld [vmem:[%s25 + $0x10] sm:$0xff]
    %v1971 = vld [vmem:[%s25 + $0x18] sm:$0xff]
    %v1972 = vld [vmem:[%s25 + $0x20] sm:$0xff]
    %v1973 = vld [vmem:[%s25 + $0x28] sm:$0xff]
    %v1974 = vld [vmem:[%s25 + $0x30] sm:$0xff]
    %v1975 = vld [vmem:[%s25 + $0x38] sm:$0xff]
    %v1976 = vld [vmem:[%s25 + $0x40] sm:$0xff]
    %v1977 = vld [vmem:[%s25 + $0x48] sm:$0xff]
    %v1978 = vld [vmem:[%s25 + $0x50] sm:$0xff]
    %v1979 = vld [vmem:[%s25 + $0x58] sm:$0xff]
    %v1980 = vld [vmem:[%s25 + $0x60] sm:$0xff]
    %v1981 = vld [vmem:[%s25 + $0x68] sm:$0xff]
    %v1982 = vld [vmem:[%s25 + $0x70] sm:$0xff]
    %v1983 = vld [vmem:[%s25 + $0x78] sm:$0xff]
    %1984 = vmatprep.subr.mxu0 0.0
    %1985 = vmatpush1.msra.mxu0 %v1968
    %1986 = vmatprep.subr.mxu0 0.0
    %1987 = vmatpush1.msra.mxu0 %v1969
    %1988 = vmatprep.subr.mxu0 0.0
    %1989 = vmatpush1.msra.mxu0 %v1970
    %1990 = vmatprep.subr.mxu0 0.0
    %1991 = vmatpush1.msra.mxu0 %v1971
    %1992 = vmatprep.subr.mxu0 0.0
    %1993 = vmatpush1.msra.mxu0 %v1972
    %1994 = vmatprep.subr.mxu0 0.0
    %1995 = vmatpush1.msra.mxu0 %v1973
    %1996 = vmatprep.subr.mxu0 0.0
    %1997 = vmatpush1.msra.mxu0 %v1974
    %1998 = vmatprep.subr.mxu0 0.0
    %1999 = vmatpush1.msra.mxu0 %v1975
    %2000 = vmatprep.subr.mxu0 0.0
    %2001 = vmatpush1.msra.mxu0 %v1976
    %2002 = vmatprep.subr.mxu0 0.0
    %2003 = vmatpush1.msra.mxu0 %v1977
    %2004 = vmatprep.subr.mxu0 0.0
    %2005 = vmatpush1.msra.mxu0 %v1978
    %2006 = vmatprep.subr.mxu0 0.0
    %2007 = vmatpush1.msra.mxu0 %v1979
    %2008 = vmatprep.subr.mxu0 0.0
    %2009 = vmatpush1.msra.mxu0 %v1980
    %2010 = vmatprep.subr.mxu0 0.0
    %2011 = vmatpush1.msra.mxu0 %v1981
    %2012 = vmatprep.subr.mxu0 0.0
    %2013 = vmatpush1.msra.mxu0 %v1982
    %2014 = vmatprep.subr.mxu0 0.0
    %2015 = vmatpush1.msra.mxu0 %v1983
    %2016 = vmatprep.subr.mxu0 0.0
    %2017 = vmatpush1.msra.mxu0 0.0
    %2018 = vmatprep.subr.mxu0 0.0
    %2019 = vmatpush1.msra.mxu0 0.0
    %2020 = vmatprep.subr.mxu0 0.0
    %2021 = vmatpush1.msra.mxu0 0.0
    %2022 = vmatprep.subr.mxu0 0.0
    %2023 = vmatpush1.msra.mxu0 0.0
    %2024 = vmatprep.subr.mxu0 0.0
    %2025 = vmatpush1.msra.mxu0 0.0
    %2026 = vmatprep.subr.mxu0 0.0
    %2027 = vmatpush1.msra.mxu0 0.0
    %2028 = vmatprep.subr.mxu0 0.0
    %2029 = vmatpush1.msra.mxu0 0.0
    %2030 = vmatprep.subr.mxu0 0.0
    %2031 = vmatpush1.msra.mxu0 0.0
    %2032 = vmatprep.subr.mxu0 0.0
    %2033 = vmatpush1.msra.mxu0 0.0
    %2034 = vmatprep.subr.mxu0 0.0
    %2035 = vmatpush1.msra.mxu0 0.0
    %2036 = vmatprep.subr.mxu0 0.0
    %2037 = vmatpush1.msra.mxu0 0.0
    %2038 = vmatprep.subr.mxu0 0.0
    %2039 = vmatpush1.msra.mxu0 0.0
    %2040 = vmatprep.subr.mxu0 0.0
    %2041 = vmatpush1.msra.mxu0 0.0
    %2042 = vmatprep.subr.mxu0 0.0
    %2043 = vmatpush1.msra.mxu0 0.0
    %2044 = vmatprep.subr.mxu0 0.0
    %2045 = vmatpush1.msra.mxu0 0.0
    %2046 = vmatprep.subr.mxu0 0.0
    %2047 = vmatpush1.msra.mxu0 0.0
    %2048 = vmatprep.mubr.f32.mxu0 0.0
    %2049 = vmatmul.mubr.f32.gmra.mrb[0].mxu0 %v1966
    %v2050 = vpop.f32.mrb[0].mxu0
    %v2051 = vadd.f32 0.0, %v2050
    %v2052 = vpop.f32.mrb[0].mxu0
    %2053 = vmatprep.mubr.f32.mxu0 0.0
    %2054 = vmatmul.mubr.f32.gmra.mrb[0].mxu0 %v1967
    %v2055 = vpop.f32.mrb[0].mxu0
    %v2056 = vadd.f32 0.0, %v2055
    %v2057 = vpop.f32.mrb[0].mxu0
    %2058 = vdwg.mxu0
    %v2059 = vadd.f32 %v1828, %v2051
    %v2060 = vadd.f32 %v1829, %v2056
    %v2061 = vld [vmem:[%s27] sm:$0x1]
    %v2063 = vlaneseq
    %v2064 = vshrl.u32 %v2063, 7
    %v2065 = vsub.s32 0, %v2064
    %v2066 = vrot.slane %v2061, %v2065
    %v2068 = vadd.f32 %v2059, %v2066
    %v2069 = vadd.f32 %v2060, %v2066
    %v2070 = vld [vmem:[%s29] sm:$0x1]
    %v2071 = vld [vmem:[%s31] sm:$0x1]
    %v2072 = vsel %vm236, %v2068, 0.0
    %2073 = vadd.xlane.f32.xlu0 %v2072
    %v2074 = vpop.xlane.xlu0 %2073
    %v2075 = vsel %vm236, %v2069, 0.0
    %2076 = vadd.xlane.f32.xlu0 %v2075
    %v2077 = vpop.xlane.xlu0 %2076
    %v2078 = vmul.f32 %v2074, %v243
    %v2079 = vmul.f32 %v2077, %v243
    %v2080 = vsub.f32 %v2068, %v2078
    %v2081 = vsub.f32 %v2069, %v2079
    %v2082 = vmul.f32 %v2080, %v2080
    %v2083 = vmul.f32 %v2081, %v2081
    %v2084 = vsel %vm236, %v2082, 0.0
    %2085 = vadd.xlane.f32.xlu0 %v2084
    %v2086 = vpop.xlane.xlu0 %2085
    %v2087 = vsel %vm236, %v2083, 0.0
    %2088 = vadd.xlane.f32.xlu0 %v2087
    %v2089 = vpop.xlane.xlu0 %2088
    %v2090 = vmul.f32 %v2086, %v243
    %v2091 = vmul.f32 %v2089, %v243
    %v2092 = vadd.f32 %v2090, 1e-05
    %v2093 = vadd.f32 %v2091, 1e-05
    %v2094 = vrsqrt.pop %v2092
    %v2095 = vrsqrt.pop %v2093
    %v2096 = vmul.f32 %v2080, %v2094
    %v2097 = vmul.f32 %v2081, %v2095
    %v2099 = vlaneseq
    %v2100 = vshrl.u32 %v2099, 7
    %v2101 = vsub.s32 0, %v2100
    %v2102 = vrot.slane %v2070, %v2101
    %v2104 = vmul.f32 %v2096, %v2102
    %v2105 = vmul.f32 %v2097, %v2102
    %v2107 = vlaneseq
    %v2108 = vshrl.u32 %v2107, 7
    %v2109 = vsub.s32 0, %v2108
    %v2110 = vrot.slane %v2071, %v2109
    %v2112 = vadd.f32 %v2104, %v2110
    %v2113 = vadd.f32 %v2105, %v2110
    %v2114 = vld [vmem:[%s33] sm:$0xff]
    %v2115 = vld [vmem:[%s33 + $0x8] sm:$0xff]
    %v2116 = vld [vmem:[%s33 + $0x10] sm:$0xff]
    %v2117 = vld [vmem:[%s33 + $0x18] sm:$0xff]
    %v2119 = vsel %vm236, %v2112, 0
    %v2122 = vsel %vm236, %v2113, 0
    %2124 = vmatprep.subr.mxu0 0.0
    %2125 = vmatpush1.msra.mxu0 %v2114
    %2126 = vmatprep.subr.mxu0 0.0
    %2127 = vmatpush1.msra.mxu0 %v2115
    %2128 = vmatprep.subr.mxu0 0.0
    %2129 = vmatpush1.msra.mxu0 %v2116
    %2130 = vmatprep.subr.mxu0 0.0
    %2131 = vmatpush1.msra.mxu0 %v2117
    %2132 = vmatprep.subr.mxu0 0.0
    %2133 = vmatpush1.msra.mxu0 0.0
    %2134 = vmatprep.subr.mxu0 0.0
    %2135 = vmatpush1.msra.mxu0 0.0
    %2136 = vmatprep.subr.mxu0 0.0
    %2137 = vmatpush1.msra.mxu0 0.0
    %2138 = vmatprep.subr.mxu0 0.0
    %2139 = vmatpush1.msra.mxu0 0.0
    %2140 = vmatprep.subr.mxu0 0.0
    %2141 = vmatpush1.msra.mxu0 0.0
    %2142 = vmatprep.subr.mxu0 0.0
    %2143 = vmatpush1.msra.mxu0 0.0
    %2144 = vmatprep.subr.mxu0 0.0
    %2145 = vmatpush1.msra.mxu0 0.0
    %2146 = vmatprep.subr.mxu0 0.0
    %2147 = vmatpush1.msra.mxu0 0.0
    %2148 = vmatprep.subr.mxu0 0.0
    %2149 = vmatpush1.msra.mxu0 0.0
    %2150 = vmatprep.subr.mxu0 0.0
    %2151 = vmatpush1.msra.mxu0 0.0
    %2152 = vmatprep.subr.mxu0 0.0
    %2153 = vmatpush1.msra.mxu0 0.0
    %2154 = vmatprep.subr.mxu0 0.0
    %2155 = vmatpush1.msra.mxu0 0.0
    %2156 = vmatprep.subr.mxu0 0.0
    %2157 = vmatpush1.msra.mxu0 0.0
    %2158 = vmatprep.subr.mxu0 0.0
    %2159 = vmatpush1.msra.mxu0 0.0
    %2160 = vmatprep.subr.mxu0 0.0
    %2161 = vmatpush1.msra.mxu0 0.0
    %2162 = vmatprep.subr.mxu0 0.0
    %2163 = vmatpush1.msra.mxu0 0.0
    %2164 = vmatprep.subr.mxu0 0.0
    %2165 = vmatpush1.msra.mxu0 0.0
    %2166 = vmatprep.subr.mxu0 0.0
    %2167 = vmatpush1.msra.mxu0 0.0
    %2168 = vmatprep.subr.mxu0 0.0
    %2169 = vmatpush1.msra.mxu0 0.0
    %2170 = vmatprep.subr.mxu0 0.0
    %2171 = vmatpush1.msra.mxu0 0.0
    %2172 = vmatprep.subr.mxu0 0.0
    %2173 = vmatpush1.msra.mxu0 0.0
    %2174 = vmatprep.subr.mxu0 0.0
    %2175 = vmatpush1.msra.mxu0 0.0
    %2176 = vmatprep.subr.mxu0 0.0
    %2177 = vmatpush1.msra.mxu0 0.0
    %2178 = vmatprep.subr.mxu0 0.0
    %2179 = vmatpush1.msra.mxu0 0.0
    %2180 = vmatprep.subr.mxu0 0.0
    %2181 = vmatpush1.msra.mxu0 0.0
    %2182 = vmatprep.subr.mxu0 0.0
    %2183 = vmatpush1.msra.mxu0 0.0
    %2184 = vmatprep.subr.mxu0 0.0
    %2185 = vmatpush1.msra.mxu0 0.0
    %2186 = vmatprep.subr.mxu0 0.0
    %2187 = vmatpush1.msra.mxu0 0.0
    %2188 = vmatprep.mubr.f32.mxu0 0.0
    %2189 = vmatmul.mubr.f32.gmra.mrb[0].mxu0 %v2119
    %v2190 = vpop.f32.mrb[0].mxu0
    %v2191 = vadd.f32 0.0, %v2190
    %v2192 = vpop.f32.mrb[0].mxu0
    %2193 = vmatprep.mubr.f32.mxu0 0.0
    %2194 = vmatmul.mubr.f32.gmra.mrb[0].mxu0 %v2122
    %v2195 = vpop.f32.mrb[0].mxu0
    %v2196 = vadd.f32 0.0, %v2195
    %v2197 = vpop.f32.mrb[0].mxu0
    %2198 = vdwg.mxu0
    %2200 = vrot.lane.b32.xlu0 %v2191, 120
    %v2201 = vpop.permute.xlu0 %2200
    %2202 = vrot.lane.b32.xlu0 %v2191, 112
    %v2203 = vpop.permute.xlu0 %2202
    %2204 = vrot.lane.b32.xlu0 %v2191, 104
    %v2205 = vpop.permute.xlu0 %2204
    %2207 = vrot.lane.b32.xlu0 %v2196, 120
    %v2208 = vpop.permute.xlu0 %2207
    %2209 = vrot.lane.b32.xlu0 %v2196, 112
    %v2210 = vpop.permute.xlu0 %2209
    %2211 = vrot.lane.b32.xlu0 %v2196, 104
    %v2212 = vpop.permute.xlu0 %2211
    %2213 = vrot.lane.b32.xlu0 %v2191, 96
    %v2214 = vpop.permute.xlu0 %2213
    %v2215 = vsel %vm381, %v2191, 0
    %v2217 = vsel %vm381, %v2214, 0
    %2219 = vmatprep.subr.mxu0 0.0
    %2220 = vmatpush1.xpose.msra.mxu0 %v2217
    %2221 = vmatprep.subr.mxu0 0.0
    %2222 = vmatpush1.xpose.msra.mxu0 0.0
    %2223 = vmatprep.subr.mxu0 0.0
    %2224 = vmatpush1.xpose.msra.mxu0 0.0
    %2225 = vmatprep.subr.mxu0 0.0
    %2226 = vmatpush1.xpose.msra.mxu0 0.0
    %2227 = vmatprep.subr.mxu0 0.0
    %2228 = vmatpush1.xpose.msra.mxu0 0.0
    %2229 = vmatprep.subr.mxu0 0.0
    %2230 = vmatpush1.xpose.msra.mxu0 0.0
    %2231 = vmatprep.subr.mxu0 0.0
    %2232 = vmatpush1.xpose.msra.mxu0 0.0
    %2233 = vmatprep.subr.mxu0 0.0
    %2234 = vmatpush1.xpose.msra.mxu0 0.0
    %2235 = vmatprep.subr.mxu0 0.0
    %2236 = vmatpush1.xpose.msra.mxu0 0.0
    %2237 = vmatprep.subr.mxu0 0.0
    %2238 = vmatpush1.xpose.msra.mxu0 0.0
    %2239 = vmatprep.subr.mxu0 0.0
    %2240 = vmatpush1.xpose.msra.mxu0 0.0
    %2241 = vmatprep.subr.mxu0 0.0
    %2242 = vmatpush1.xpose.msra.mxu0 0.0
    %2243 = vmatprep.subr.mxu0 0.0
    %2244 = vmatpush1.xpose.msra.mxu0 0.0
    %2245 = vmatprep.subr.mxu0 0.0
    %2246 = vmatpush1.xpose.msra.mxu0 0.0
    %2247 = vmatprep.subr.mxu0 0.0
    %2248 = vmatpush1.xpose.msra.mxu0 0.0
    %2249 = vmatprep.subr.mxu0 0.0
    %2250 = vmatpush1.xpose.msra.mxu0 0.0
    %2251 = vmatprep.subr.mxu0 0.0
    %2252 = vmatpush1.xpose.msra.mxu0 0.0
    %2253 = vmatprep.subr.mxu0 0.0
    %2254 = vmatpush1.xpose.msra.mxu0 0.0
    %2255 = vmatprep.subr.mxu0 0.0
    %2256 = vmatpush1.xpose.msra.mxu0 0.0
    %2257 = vmatprep.subr.mxu0 0.0
    %2258 = vmatpush1.xpose.msra.mxu0 0.0
    %2259 = vmatprep.subr.mxu0 0.0
    %2260 = vmatpush1.xpose.msra.mxu0 0.0
    %2261 = vmatprep.subr.mxu0 0.0
    %2262 = vmatpush1.xpose.msra.mxu0 0.0
    %2263 = vmatprep.subr.mxu0 0.0
    %2264 = vmatpush1.xpose.msra.mxu0 0.0
    %2265 = vmatprep.subr.mxu0 0.0
    %2266 = vmatpush1.xpose.msra.mxu0 0.0
    %2267 = vmatprep.subr.mxu0 0.0
    %2268 = vmatpush1.xpose.msra.mxu0 0.0
    %2269 = vmatprep.subr.mxu0 0.0
    %2270 = vmatpush1.xpose.msra.mxu0 0.0
    %2271 = vmatprep.subr.mxu0 0.0
    %2272 = vmatpush1.xpose.msra.mxu0 0.0
    %2273 = vmatprep.subr.mxu0 0.0
    %2274 = vmatpush1.xpose.msra.mxu0 0.0
    %2275 = vmatprep.subr.mxu0 0.0
    %2276 = vmatpush1.xpose.msra.mxu0 0.0
    %2277 = vmatprep.subr.mxu0 0.0
    %2278 = vmatpush1.xpose.msra.mxu0 0.0
    %2279 = vmatprep.subr.mxu0 0.0
    %2280 = vmatpush1.xpose.msra.mxu0 0.0
    %2281 = vmatprep.subr.mxu0 0.0
    %2282 = vmatpush1.xpose.msra.mxu0 0.0
    %2283 = vmatprep.mubr.f32.mxu0 0.0
    %2284 = vmatmul.mubr.f32.gmra.mrb[0].mxu0 %v2215
    %v2285 = vpop.f32.mrb[0].mxu0
    %v2286 = vadd.f32 0.0, %v2285
    %v2287 = vpop.f32.mrb[0].mxu0
    %2288 = vdwg.mxu0
    %2289 = vrot.lane.b32.xlu0 %v2201, 96
    %v2290 = vpop.permute.xlu0 %2289
    %v2291 = vsel %vm381, %v2201, 0
    %v2293 = vsel %vm381, %v2290, 0
    %2295 = vmatprep.subr.mxu0 0.0
    %2296 = vmatpush1.xpose.msra.mxu0 %v2293
    %2297 = vmatprep.subr.mxu0 0.0
    %2298 = vmatpush1.xpose.msra.mxu0 0.0
    %2299 = vmatprep.subr.mxu0 0.0
    %2300 = vmatpush1.xpose.msra.mxu0 0.0
    %2301 = vmatprep.subr.mxu0 0.0
    %2302 = vmatpush1.xpose.msra.mxu0 0.0
    %2303 = vmatprep.subr.mxu0 0.0
    %2304 = vmatpush1.xpose.msra.mxu0 0.0
    %2305 = vmatprep.subr.mxu0 0.0
    %2306 = vmatpush1.xpose.msra.mxu0 0.0
    %2307 = vmatprep.subr.mxu0 0.0
    %2308 = vmatpush1.xpose.msra.mxu0 0.0
    %2309 = vmatprep.subr.mxu0 0.0
    %2310 = vmatpush1.xpose.msra.mxu0 0.0
    %2311 = vmatprep.subr.mxu0 0.0
    %2312 = vmatpush1.xpose.msra.mxu0 0.0
    %2313 = vmatprep.subr.mxu0 0.0
    %2314 = vmatpush1.xpose.msra.mxu0 0.0
    %2315 = vmatprep.subr.mxu0 0.0
    %2316 = vmatpush1.xpose.msra.mxu0 0.0
    %2317 = vmatprep.subr.mxu0 0.0
    %2318 = vmatpush1.xpose.msra.mxu0 0.0
    %2319 = vmatprep.subr.mxu0 0.0
    %2320 = vmatpush1.xpose.msra.mxu0 0.0
    %2321 = vmatprep.subr.mxu0 0.0
    %2322 = vmatpush1.xpose.msra.mxu0 0.0
    %2323 = vmatprep.subr.mxu0 0.0
    %2324 = vmatpush1.xpose.msra.mxu0 0.0
    %2325 = vmatprep.subr.mxu0 0.0
    %2326 = vmatpush1.xpose.msra.mxu0 0.0
    %2327 = vmatprep.subr.mxu0 0.0
    %2328 = vmatpush1.xpose.msra.mxu0 0.0
    %2329 = vmatprep.subr.mxu0 0.0
    %2330 = vmatpush1.xpose.msra.mxu0 0.0
    %2331 = vmatprep.subr.mxu0 0.0
    %2332 = vmatpush1.xpose.msra.mxu0 0.0
    %2333 = vmatprep.subr.mxu0 0.0
    %2334 = vmatpush1.xpose.msra.mxu0 0.0
    %2335 = vmatprep.subr.mxu0 0.0
    %2336 = vmatpush1.xpose.msra.mxu0 0.0
    %2337 = vmatprep.subr.mxu0 0.0
    %2338 = vmatpush1.xpose.msra.mxu0 0.0
    %2339 = vmatprep.subr.mxu0 0.0
    %2340 = vmatpush1.xpose.msra.mxu0 0.0
    %2341 = vmatprep.subr.mxu0 0.0
    %2342 = vmatpush1.xpose.msra.mxu0 0.0
    %2343 = vmatprep.subr.mxu0 0.0
    %2344 = vmatpush1.xpose.msra.mxu0 0.0
    %2345 = vmatprep.subr.mxu0 0.0
    %2346 = vmatpush1.xpose.msra.mxu0 0.0
    %2347 = vmatprep.subr.mxu0 0.0
    %2348 = vmatpush1.xpose.msra.mxu0 0.0
    %2349 = vmatprep.subr.mxu0 0.0
    %2350 = vmatpush1.xpose.msra.mxu0 0.0
    %2351 = vmatprep.subr.mxu0 0.0
    %2352 = vmatpush1.xpose.msra.mxu0 0.0
    %2353 = vmatprep.subr.mxu0 0.0
    %2354 = vmatpush1.xpose.msra.mxu0 0.0
    %2355 = vmatprep.subr.mxu0 0.0
    %2356 = vmatpush1.xpose.msra.mxu0 0.0
    %2357 = vmatprep.subr.mxu0 0.0
    %2358 = vmatpush1.xpose.msra.mxu0 0.0
    %2359 = vmatprep.mubr.f32.mxu0 0.0
    %2360 = vmatmul.mubr.f32.gmra.mrb[0].mxu0 %v2291
    %v2361 = vpop.f32.mrb[0].mxu0
    %v2362 = vadd.f32 0.0, %v2361
    %v2363 = vpop.f32.mrb[0].mxu0
    %2364 = vdwg.mxu0
    %2365 = vrot.lane.b32.xlu0 %v2203, 96
    %v2366 = vpop.permute.xlu0 %2365
    %v2367 = vsel %vm381, %v2203, 0
    %v2369 = vsel %vm381, %v2366, 0
    %2371 = vmatprep.subr.mxu0 0.0
    %2372 = vmatpush1.xpose.msra.mxu0 %v2369
    %2373 = vmatprep.subr.mxu0 0.0
    %2374 = vmatpush1.xpose.msra.mxu0 0.0
    %2375 = vmatprep.subr.mxu0 0.0
    %2376 = vmatpush1.xpose.msra.mxu0 0.0
    %2377 = vmatprep.subr.mxu0 0.0
    %2378 = vmatpush1.xpose.msra.mxu0 0.0
    %2379 = vmatprep.subr.mxu0 0.0
    %2380 = vmatpush1.xpose.msra.mxu0 0.0
    %2381 = vmatprep.subr.mxu0 0.0
    %2382 = vmatpush1.xpose.msra.mxu0 0.0
    %2383 = vmatprep.subr.mxu0 0.0
    %2384 = vmatpush1.xpose.msra.mxu0 0.0
    %2385 = vmatprep.subr.mxu0 0.0
    %2386 = vmatpush1.xpose.msra.mxu0 0.0
    %2387 = vmatprep.subr.mxu0 0.0
    %2388 = vmatpush1.xpose.msra.mxu0 0.0
    %2389 = vmatprep.subr.mxu0 0.0
    %2390 = vmatpush1.xpose.msra.mxu0 0.0
    %2391 = vmatprep.subr.mxu0 0.0
    %2392 = vmatpush1.xpose.msra.mxu0 0.0
    %2393 = vmatprep.subr.mxu0 0.0
    %2394 = vmatpush1.xpose.msra.mxu0 0.0
    %2395 = vmatprep.subr.mxu0 0.0
    %2396 = vmatpush1.xpose.msra.mxu0 0.0
    %2397 = vmatprep.subr.mxu0 0.0
    %2398 = vmatpush1.xpose.msra.mxu0 0.0
    %2399 = vmatprep.subr.mxu0 0.0
    %2400 = vmatpush1.xpose.msra.mxu0 0.0
    %2401 = vmatprep.subr.mxu0 0.0
    %2402 = vmatpush1.xpose.msra.mxu0 0.0
    %2403 = vmatprep.subr.mxu0 0.0
    %2404 = vmatpush1.xpose.msra.mxu0 0.0
    %2405 = vmatprep.subr.mxu0 0.0
    %2406 = vmatpush1.xpose.msra.mxu0 0.0
    %2407 = vmatprep.subr.mxu0 0.0
    %2408 = vmatpush1.xpose.msra.mxu0 0.0
    %2409 = vmatprep.subr.mxu0 0.0
    %2410 = vmatpush1.xpose.msra.mxu0 0.0
    %2411 = vmatprep.subr.mxu0 0.0
    %2412 = vmatpush1.xpose.msra.mxu0 0.0
    %2413 = vmatprep.subr.mxu0 0.0
    %2414 = vmatpush1.xpose.msra.mxu0 0.0
    %2415 = vmatprep.subr.mxu0 0.0
    %2416 = vmatpush1.xpose.msra.mxu0 0.0
    %2417 = vmatprep.subr.mxu0 0.0
    %2418 = vmatpush1.xpose.msra.mxu0 0.0
    %2419 = vmatprep.subr.mxu0 0.0
    %2420 = vmatpush1.xpose.msra.mxu0 0.0
    %2421 = vmatprep.subr.mxu0 0.0
    %2422 = vmatpush1.xpose.msra.mxu0 0.0
    %2423 = vmatprep.subr.mxu0 0.0
    %2424 = vmatpush1.xpose.msra.mxu0 0.0
    %2425 = vmatprep.subr.mxu0 0.0
    %2426 = vmatpush1.xpose.msra.mxu0 0.0
    %2427 = vmatprep.subr.mxu0 0.0
    %2428 = vmatpush1.xpose.msra.mxu0 0.0
    %2429 = vmatprep.subr.mxu0 0.0
    %2430 = vmatpush1.xpose.msra.mxu0 0.0
    %2431 = vmatprep.subr.mxu0 0.0
    %2432 = vmatpush1.xpose.msra.mxu0 0.0
    %2433 = vmatprep.subr.mxu0 0.0
    %2434 = vmatpush1.xpose.msra.mxu0 0.0
    %2435 = vmatprep.mubr.f32.mxu0 0.0
    %2436 = vmatmul.mubr.f32.gmra.mrb[0].mxu0 %v2367
    %v2437 = vpop.f32.mrb[0].mxu0
    %v2438 = vadd.f32 0.0, %v2437
    %v2439 = vpop.f32.mrb[0].mxu0
    %2440 = vdwg.mxu0
    %2441 = vrot.lane.b32.xlu0 %v2205, 96
    %v2442 = vpop.permute.xlu0 %2441
    %v2443 = vsel %vm381, %v2205, 0
    %v2445 = vsel %vm381, %v2442, 0
    %2447 = vmatprep.subr.mxu0 0.0
    %2448 = vmatpush1.xpose.msra.mxu0 %v2445
    %2449 = vmatprep.subr.mxu0 0.0
    %2450 = vmatpush1.xpose.msra.mxu0 0.0
    %2451 = vmatprep.subr.mxu0 0.0
    %2452 = vmatpush1.xpose.msra.mxu0 0.0
    %2453 = vmatprep.subr.mxu0 0.0
    %2454 = vmatpush1.xpose.msra.mxu0 0.0
    %2455 = vmatprep.subr.mxu0 0.0
    %2456 = vmatpush1.xpose.msra.mxu0 0.0
    %2457 = vmatprep.subr.mxu0 0.0
    %2458 = vmatpush1.xpose.msra.mxu0 0.0
    %2459 = vmatprep.subr.mxu0 0.0
    %2460 = vmatpush1.xpose.msra.mxu0 0.0
    %2461 = vmatprep.subr.mxu0 0.0
    %2462 = vmatpush1.xpose.msra.mxu0 0.0
    %2463 = vmatprep.subr.mxu0 0.0
    %2464 = vmatpush1.xpose.msra.mxu0 0.0
    %2465 = vmatprep.subr.mxu0 0.0
    %2466 = vmatpush1.xpose.msra.mxu0 0.0
    %2467 = vmatprep.subr.mxu0 0.0
    %2468 = vmatpush1.xpose.msra.mxu0 0.0
    %2469 = vmatprep.subr.mxu0 0.0
    %2470 = vmatpush1.xpose.msra.mxu0 0.0
    %2471 = vmatprep.subr.mxu0 0.0
    %2472 = vmatpush1.xpose.msra.mxu0 0.0
    %2473 = vmatprep.subr.mxu0 0.0
    %2474 = vmatpush1.xpose.msra.mxu0 0.0
    %2475 = vmatprep.subr.mxu0 0.0
    %2476 = vmatpush1.xpose.msra.mxu0 0.0
    %2477 = vmatprep.subr.mxu0 0.0
    %2478 = vmatpush1.xpose.msra.mxu0 0.0
    %2479 = vmatprep.subr.mxu0 0.0
    %2480 = vmatpush1.xpose.msra.mxu0 0.0
    %2481 = vmatprep.subr.mxu0 0.0
    %2482 = vmatpush1.xpose.msra.mxu0 0.0
    %2483 = vmatprep.subr.mxu0 0.0
    %2484 = vmatpush1.xpose.msra.mxu0 0.0
    %2485 = vmatprep.subr.mxu0 0.0
    %2486 = vmatpush1.xpose.msra.mxu0 0.0
    %2487 = vmatprep.subr.mxu0 0.0
    %2488 = vmatpush1.xpose.msra.mxu0 0.0
    %2489 = vmatprep.subr.mxu0 0.0
    %2490 = vmatpush1.xpose.msra.mxu0 0.0
    %2491 = vmatprep.subr.mxu0 0.0
    %2492 = vmatpush1.xpose.msra.mxu0 0.0
    %2493 = vmatprep.subr.mxu0 0.0
    %2494 = vmatpush1.xpose.msra.mxu0 0.0
    %2495 = vmatprep.subr.mxu0 0.0
    %2496 = vmatpush1.xpose.msra.mxu0 0.0
    %2497 = vmatprep.subr.mxu0 0.0
    %2498 = vmatpush1.xpose.msra.mxu0 0.0
    %2499 = vmatprep.subr.mxu0 0.0
    %2500 = vmatpush1.xpose.msra.mxu0 0.0
    %2501 = vmatprep.subr.mxu0 0.0
    %2502 = vmatpush1.xpose.msra.mxu0 0.0
    %2503 = vmatprep.subr.mxu0 0.0
    %2504 = vmatpush1.xpose.msra.mxu0 0.0
    %2505 = vmatprep.subr.mxu0 0.0
    %2506 = vmatpush1.xpose.msra.mxu0 0.0
    %2507 = vmatprep.subr.mxu0 0.0
    %2508 = vmatpush1.xpose.msra.mxu0 0.0
    %2509 = vmatprep.subr.mxu0 0.0
    %2510 = vmatpush1.xpose.msra.mxu0 0.0
    %2511 = vmatprep.mubr.f32.mxu0 0.0
    %2512 = vmatmul.mubr.f32.gmra.mrb[0].mxu0 %v2443
    %v2513 = vpop.f32.mrb[0].mxu0
    %v2514 = vadd.f32 0.0, %v2513
    %v2515 = vpop.f32.mrb[0].mxu0
    %2516 = vdwg.mxu0
    %2517 = vrot.lane.b32.xlu0 %v2196, 96
    %v2518 = vpop.permute.xlu0 %2517
    %v2519 = vsel %vm381, %v2196, 0
    %v2521 = vsel %vm381, %v2518, 0
    %2523 = vmatprep.subr.mxu0 0.0
    %2524 = vmatpush1.xpose.msra.mxu0 %v2521
    %2525 = vmatprep.subr.mxu0 0.0
    %2526 = vmatpush1.xpose.msra.mxu0 0.0
    %2527 = vmatprep.subr.mxu0 0.0
    %2528 = vmatpush1.xpose.msra.mxu0 0.0
    %2529 = vmatprep.subr.mxu0 0.0
    %2530 = vmatpush1.xpose.msra.mxu0 0.0
    %2531 = vmatprep.subr.mxu0 0.0
    %2532 = vmatpush1.xpose.msra.mxu0 0.0
    %2533 = vmatprep.subr.mxu0 0.0
    %2534 = vmatpush1.xpose.msra.mxu0 0.0
    %2535 = vmatprep.subr.mxu0 0.0
    %2536 = vmatpush1.xpose.msra.mxu0 0.0
    %2537 = vmatprep.subr.mxu0 0.0
    %2538 = vmatpush1.xpose.msra.mxu0 0.0
    %2539 = vmatprep.subr.mxu0 0.0
    %2540 = vmatpush1.xpose.msra.mxu0 0.0
    %2541 = vmatprep.subr.mxu0 0.0
    %2542 = vmatpush1.xpose.msra.mxu0 0.0
    %2543 = vmatprep.subr.mxu0 0.0
    %2544 = vmatpush1.xpose.msra.mxu0 0.0
    %2545 = vmatprep.subr.mxu0 0.0
    %2546 = vmatpush1.xpose.msra.mxu0 0.0
    %2547 = vmatprep.subr.mxu0 0.0
    %2548 = vmatpush1.xpose.msra.mxu0 0.0
    %2549 = vmatprep.subr.mxu0 0.0
    %2550 = vmatpush1.xpose.msra.mxu0 0.0
    %2551 = vmatprep.subr.mxu0 0.0
    %2552 = vmatpush1.xpose.msra.mxu0 0.0
    %2553 = vmatprep.subr.mxu0 0.0
    %2554 = vmatpush1.xpose.msra.mxu0 0.0
    %2555 = vmatprep.subr.mxu0 0.0
    %2556 = vmatpush1.xpose.msra.mxu0 0.0
    %2557 = vmatprep.subr.mxu0 0.0
    %2558 = vmatpush1.xpose.msra.mxu0 0.0
    %2559 = vmatprep.subr.mxu0 0.0
    %2560 = vmatpush1.xpose.msra.mxu0 0.0
    %2561 = vmatprep.subr.mxu0 0.0
    %2562 = vmatpush1.xpose.msra.mxu0 0.0
    %2563 = vmatprep.subr.mxu0 0.0
    %2564 = vmatpush1.xpose.msra.mxu0 0.0
    %2565 = vmatprep.subr.mxu0 0.0
    %2566 = vmatpush1.xpose.msra.mxu0 0.0
    %2567 = vmatprep.subr.mxu0 0.0
    %2568 = vmatpush1.xpose.msra.mxu0 0.0
    %2569 = vmatprep.subr.mxu0 0.0
    %2570 = vmatpush1.xpose.msra.mxu0 0.0
    %2571 = vmatprep.subr.mxu0 0.0
    %2572 = vmatpush1.xpose.msra.mxu0 0.0
    %2573 = vmatprep.subr.mxu0 0.0
    %2574 = vmatpush1.xpose.msra.mxu0 0.0
    %2575 = vmatprep.subr.mxu0 0.0
    %2576 = vmatpush1.xpose.msra.mxu0 0.0
    %2577 = vmatprep.subr.mxu0 0.0
    %2578 = vmatpush1.xpose.msra.mxu0 0.0
    %2579 = vmatprep.subr.mxu0 0.0
    %2580 = vmatpush1.xpose.msra.mxu0 0.0
    %2581 = vmatprep.subr.mxu0 0.0
    %2582 = vmatpush1.xpose.msra.mxu0 0.0
    %2583 = vmatprep.subr.mxu0 0.0
    %2584 = vmatpush1.xpose.msra.mxu0 0.0
    %2585 = vmatprep.subr.mxu0 0.0
    %2586 = vmatpush1.xpose.msra.mxu0 0.0
    %2587 = vmatprep.mubr.f32.mxu0 0.0
    %2588 = vmatmul.mubr.f32.gmra.mrb[0].mxu0 %v2519
    %v2589 = vpop.f32.mrb[0].mxu0
    %v2590 = vadd.f32 0.0, %v2589
    %v2591 = vpop.f32.mrb[0].mxu0
    %2592 = vdwg.mxu0
    %2593 = vrot.lane.b32.xlu0 %v2208, 96
    %v2594 = vpop.permute.xlu0 %2593
    %v2595 = vsel %vm381, %v2208, 0
    %v2597 = vsel %vm381, %v2594, 0
    %2599 = vmatprep.subr.mxu0 0.0
    %2600 = vmatpush1.xpose.msra.mxu0 %v2597
    %2601 = vmatprep.subr.mxu0 0.0
    %2602 = vmatpush1.xpose.msra.mxu0 0.0
    %2603 = vmatprep.subr.mxu0 0.0
    %2604 = vmatpush1.xpose.msra.mxu0 0.0
    %2605 = vmatprep.subr.mxu0 0.0
    %2606 = vmatpush1.xpose.msra.mxu0 0.0
    %2607 = vmatprep.subr.mxu0 0.0
    %2608 = vmatpush1.xpose.msra.mxu0 0.0
    %2609 = vmatprep.subr.mxu0 0.0
    %2610 = vmatpush1.xpose.msra.mxu0 0.0
    %2611 = vmatprep.subr.mxu0 0.0
    %2612 = vmatpush1.xpose.msra.mxu0 0.0
    %2613 = vmatprep.subr.mxu0 0.0
    %2614 = vmatpush1.xpose.msra.mxu0 0.0
    %2615 = vmatprep.subr.mxu0 0.0
    %2616 = vmatpush1.xpose.msra.mxu0 0.0
    %2617 = vmatprep.subr.mxu0 0.0
    %2618 = vmatpush1.xpose.msra.mxu0 0.0
    %2619 = vmatprep.subr.mxu0 0.0
    %2620 = vmatpush1.xpose.msra.mxu0 0.0
    %2621 = vmatprep.subr.mxu0 0.0
    %2622 = vmatpush1.xpose.msra.mxu0 0.0
    %2623 = vmatprep.subr.mxu0 0.0
    %2624 = vmatpush1.xpose.msra.mxu0 0.0
    %2625 = vmatprep.subr.mxu0 0.0
    %2626 = vmatpush1.xpose.msra.mxu0 0.0
    %2627 = vmatprep.subr.mxu0 0.0
    %2628 = vmatpush1.xpose.msra.mxu0 0.0
    %2629 = vmatprep.subr.mxu0 0.0
    %2630 = vmatpush1.xpose.msra.mxu0 0.0
    %2631 = vmatprep.subr.mxu0 0.0
    %2632 = vmatpush1.xpose.msra.mxu0 0.0
    %2633 = vmatprep.subr.mxu0 0.0
    %2634 = vmatpush1.xpose.msra.mxu0 0.0
    %2635 = vmatprep.subr.mxu0 0.0
    %2636 = vmatpush1.xpose.msra.mxu0 0.0
    %2637 = vmatprep.subr.mxu0 0.0
    %2638 = vmatpush1.xpose.msra.mxu0 0.0
    %2639 = vmatprep.subr.mxu0 0.0
    %2640 = vmatpush1.xpose.msra.mxu0 0.0
    %2641 = vmatprep.subr.mxu0 0.0
    %2642 = vmatpush1.xpose.msra.mxu0 0.0
    %2643 = vmatprep.subr.mxu0 0.0
    %2644 = vmatpush1.xpose.msra.mxu0 0.0
    %2645 = vmatprep.subr.mxu0 0.0
    %2646 = vmatpush1.xpose.msra.mxu0 0.0
    %2647 = vmatprep.subr.mxu0 0.0
    %2648 = vmatpush1.xpose.msra.mxu0 0.0
    %2649 = vmatprep.subr.mxu0 0.0
    %2650 = vmatpush1.xpose.msra.mxu0 0.0
    %2651 = vmatprep.subr.mxu0 0.0
    %2652 = vmatpush1.xpose.msra.mxu0 0.0
    %2653 = vmatprep.subr.mxu0 0.0
    %2654 = vmatpush1.xpose.msra.mxu0 0.0
    %2655 = vmatprep.subr.mxu0 0.0
    %2656 = vmatpush1.xpose.msra.mxu0 0.0
    %2657 = vmatprep.subr.mxu0 0.0
    %2658 = vmatpush1.xpose.msra.mxu0 0.0
    %2659 = vmatprep.subr.mxu0 0.0
    %2660 = vmatpush1.xpose.msra.mxu0 0.0
    %2661 = vmatprep.subr.mxu0 0.0
    %2662 = vmatpush1.xpose.msra.mxu0 0.0
    %2663 = vmatprep.mubr.f32.mxu0 0.0
    %2664 = vmatmul.mubr.f32.gmra.mrb[0].mxu0 %v2595
    %v2665 = vpop.f32.mrb[0].mxu0
    %v2666 = vadd.f32 0.0, %v2665
    %v2667 = vpop.f32.mrb[0].mxu0
    %2668 = vdwg.mxu0
    %2669 = vrot.lane.b32.xlu0 %v2210, 96
    %v2670 = vpop.permute.xlu0 %2669
    %v2671 = vsel %vm381, %v2210, 0
    %v2673 = vsel %vm381, %v2670, 0
    %2675 = vmatprep.subr.mxu0 0.0
    %2676 = vmatpush1.xpose.msra.mxu0 %v2673
    %2677 = vmatprep.subr.mxu0 0.0
    %2678 = vmatpush1.xpose.msra.mxu0 0.0
    %2679 = vmatprep.subr.mxu0 0.0
    %2680 = vmatpush1.xpose.msra.mxu0 0.0
    %2681 = vmatprep.subr.mxu0 0.0
    %2682 = vmatpush1.xpose.msra.mxu0 0.0
    %2683 = vmatprep.subr.mxu0 0.0
    %2684 = vmatpush1.xpose.msra.mxu0 0.0
    %2685 = vmatprep.subr.mxu0 0.0
    %2686 = vmatpush1.xpose.msra.mxu0 0.0
    %2687 = vmatprep.subr.mxu0 0.0
    %2688 = vmatpush1.xpose.msra.mxu0 0.0
    %2689 = vmatprep.subr.mxu0 0.0
    %2690 = vmatpush1.xpose.msra.mxu0 0.0
    %2691 = vmatprep.subr.mxu0 0.0
    %2692 = vmatpush1.xpose.msra.mxu0 0.0
    %2693 = vmatprep.subr.mxu0 0.0
    %2694 = vmatpush1.xpose.msra.mxu0 0.0
    %2695 = vmatprep.subr.mxu0 0.0
    %2696 = vmatpush1.xpose.msra.mxu0 0.0
    %2697 = vmatprep.subr.mxu0 0.0
    %2698 = vmatpush1.xpose.msra.mxu0 0.0
    %2699 = vmatprep.subr.mxu0 0.0
    %2700 = vmatpush1.xpose.msra.mxu0 0.0
    %2701 = vmatprep.subr.mxu0 0.0
    %2702 = vmatpush1.xpose.msra.mxu0 0.0
    %2703 = vmatprep.subr.mxu0 0.0
    %2704 = vmatpush1.xpose.msra.mxu0 0.0
    %2705 = vmatprep.subr.mxu0 0.0
    %2706 = vmatpush1.xpose.msra.mxu0 0.0
    %2707 = vmatprep.subr.mxu0 0.0
    %2708 = vmatpush1.xpose.msra.mxu0 0.0
    %2709 = vmatprep.subr.mxu0 0.0
    %2710 = vmatpush1.xpose.msra.mxu0 0.0
    %2711 = vmatprep.subr.mxu0 0.0
    %2712 = vmatpush1.xpose.msra.mxu0 0.0
    %2713 = vmatprep.subr.mxu0 0.0
    %2714 = vmatpush1.xpose.msra.mxu0 0.0
    %2715 = vmatprep.subr.mxu0 0.0
    %2716 = vmatpush1.xpose.msra.mxu0 0.0
    %2717 = vmatprep.subr.mxu0 0.0
    %2718 = vmatpush1.xpose.msra.mxu0 0.0
    %2719 = vmatprep.subr.mxu0 0.0
    %2720 = vmatpush1.xpose.msra.mxu0 0.0
    %2721 = vmatprep.subr.mxu0 0.0
    %2722 = vmatpush1.xpose.msra.mxu0 0.0
    %2723 = vmatprep.subr.mxu0 0.0
    %2724 = vmatpush1.xpose.msra.mxu0 0.0
    %2725 = vmatprep.subr.mxu0 0.0
    %2726 = vmatpush1.xpose.msra.mxu0 0.0
    %2727 = vmatprep.subr.mxu0 0.0
    %2728 = vmatpush1.xpose.msra.mxu0 0.0
    %2729 = vmatprep.subr.mxu0 0.0
    %2730 = vmatpush1.xpose.msra.mxu0 0.0
    %2731 = vmatprep.subr.mxu0 0.0
    %2732 = vmatpush1.xpose.msra.mxu0 0.0
    %2733 = vmatprep.subr.mxu0 0.0
    %2734 = vmatpush1.xpose.msra.mxu0 0.0
    %2735 = vmatprep.subr.mxu0 0.0
    %2736 = vmatpush1.xpose.msra.mxu0 0.0
    %2737 = vmatprep.subr.mxu0 0.0
    %2738 = vmatpush1.xpose.msra.mxu0 0.0
    %2739 = vmatprep.mubr.f32.mxu0 0.0
    %2740 = vmatmul.mubr.f32.gmra.mrb[0].mxu0 %v2671
    %v2741 = vpop.f32.mrb[0].mxu0
    %v2742 = vadd.f32 0.0, %v2741
    %v2743 = vpop.f32.mrb[0].mxu0
    %2744 = vdwg.mxu0
    %2745 = vrot.lane.b32.xlu0 %v2212, 96
    %v2746 = vpop.permute.xlu0 %2745
    %v2747 = vsel %vm381, %v2212, 0
    %v2749 = vsel %vm381, %v2746, 0
    %2751 = vmatprep.subr.mxu0 0.0
    %2752 = vmatpush1.xpose.msra.mxu0 %v2749
    %2753 = vmatprep.subr.mxu0 0.0
    %2754 = vmatpush1.xpose.msra.mxu0 0.0
    %2755 = vmatprep.subr.mxu0 0.0
    %2756 = vmatpush1.xpose.msra.mxu0 0.0
    %2757 = vmatprep.subr.mxu0 0.0
    %2758 = vmatpush1.xpose.msra.mxu0 0.0
    %2759 = vmatprep.subr.mxu0 0.0
    %2760 = vmatpush1.xpose.msra.mxu0 0.0
    %2761 = vmatprep.subr.mxu0 0.0
    %2762 = vmatpush1.xpose.msra.mxu0 0.0
    %2763 = vmatprep.subr.mxu0 0.0
    %2764 = vmatpush1.xpose.msra.mxu0 0.0
    %2765 = vmatprep.subr.mxu0 0.0
    %2766 = vmatpush1.xpose.msra.mxu0 0.0
    %2767 = vmatprep.subr.mxu0 0.0
    %2768 = vmatpush1.xpose.msra.mxu0 0.0
    %2769 = vmatprep.subr.mxu0 0.0
    %2770 = vmatpush1.xpose.msra.mxu0 0.0
    %2771 = vmatprep.subr.mxu0 0.0
    %2772 = vmatpush1.xpose.msra.mxu0 0.0
    %2773 = vmatprep.subr.mxu0 0.0
    %2774 = vmatpush1.xpose.msra.mxu0 0.0
    %2775 = vmatprep.subr.mxu0 0.0
    %2776 = vmatpush1.xpose.msra.mxu0 0.0
    %2777 = vmatprep.subr.mxu0 0.0
    %2778 = vmatpush1.xpose.msra.mxu0 0.0
    %2779 = vmatprep.subr.mxu0 0.0
    %2780 = vmatpush1.xpose.msra.mxu0 0.0
    %2781 = vmatprep.subr.mxu0 0.0
    %2782 = vmatpush1.xpose.msra.mxu0 0.0
    %2783 = vmatprep.subr.mxu0 0.0
    %2784 = vmatpush1.xpose.msra.mxu0 0.0
    %2785 = vmatprep.subr.mxu0 0.0
    %2786 = vmatpush1.xpose.msra.mxu0 0.0
    %2787 = vmatprep.subr.mxu0 0.0
    %2788 = vmatpush1.xpose.msra.mxu0 0.0
    %2789 = vmatprep.subr.mxu0 0.0
    %2790 = vmatpush1.xpose.msra.mxu0 0.0
    %2791 = vmatprep.subr.mxu0 0.0
    %2792 = vmatpush1.xpose.msra.mxu0 0.0
    %2793 = vmatprep.subr.mxu0 0.0
    %2794 = vmatpush1.xpose.msra.mxu0 0.0
    %2795 = vmatprep.subr.mxu0 0.0
    %2796 = vmatpush1.xpose.msra.mxu0 0.0
    %2797 = vmatprep.subr.mxu0 0.0
    %2798 = vmatpush1.xpose.msra.mxu0 0.0
    %2799 = vmatprep.subr.mxu0 0.0
    %2800 = vmatpush1.xpose.msra.mxu0 0.0
    %2801 = vmatprep.subr.mxu0 0.0
    %2802 = vmatpush1.xpose.msra.mxu0 0.0
    %2803 = vmatprep.subr.mxu0 0.0
    %2804 = vmatpush1.xpose.msra.mxu0 0.0
    %2805 = vmatprep.subr.mxu0 0.0
    %2806 = vmatpush1.xpose.msra.mxu0 0.0
    %2807 = vmatprep.subr.mxu0 0.0
    %2808 = vmatpush1.xpose.msra.mxu0 0.0
    %2809 = vmatprep.subr.mxu0 0.0
    %2810 = vmatpush1.xpose.msra.mxu0 0.0
    %2811 = vmatprep.subr.mxu0 0.0
    %2812 = vmatpush1.xpose.msra.mxu0 0.0
    %2813 = vmatprep.subr.mxu0 0.0
    %2814 = vmatpush1.xpose.msra.mxu0 0.0
    %2815 = vmatprep.mubr.f32.mxu0 0.0
    %2816 = vmatmul.mubr.f32.gmra.mrb[0].mxu0 %v2747
    %v2817 = vpop.f32.mrb[0].mxu0
    %v2818 = vadd.f32 0.0, %v2817
    %v2819 = vpop.f32.mrb[0].mxu0
    %2820 = vdwg.mxu0
    %v2821 = vmul.f32 %v2286, 0.17677669
    %v2822 = vmul.f32 %v2362, 0.17677669
    %v2823 = vmul.f32 %v2438, 0.17677669
    %v2824 = vmul.f32 %v2514, 0.17677669
    %v2825 = vmul.f32 %v2590, 0.17677669
    %v2826 = vmul.f32 %v2666, 0.17677669
    %v2827 = vmul.f32 %v2742, 0.17677669
    %v2828 = vmul.f32 %v2818, 0.17677669
    %v2829 = vsel %vm997, %v2821, -inf
    %v2830 = vsel %vm997, %v2822, -inf
    %v2831 = vsel %vm997, %v2823, -inf
    %v2832 = vsel %vm997, %v2824, -inf
    %v2833 = vsel %vm997, %v2825, -inf
    %v2834 = vsel %vm997, %v2826, -inf
    %v2835 = vsel %vm997, %v2827, -inf
    %v2836 = vsel %vm997, %v2828, -inf
    %v2837 = vsel %vm381, %v2829, -inf
    %2838 = vmax.xlane.f32.xlu0 %v2837
    %v2839 = vpop.xlane.xlu0 %2838
    %v2840 = vsel %vm381, %v2830, -inf
    %2841 = vmax.xlane.f32.xlu0 %v2840
    %v2842 = vpop.xlane.xlu0 %2841
    %v2843 = vsel %vm381, %v2831, -inf
    %2844 = vmax.xlane.f32.xlu0 %v2843
    %v2845 = vpop.xlane.xlu0 %2844
    %v2846 = vsel %vm381, %v2832, -inf
    %2847 = vmax.xlane.f32.xlu0 %v2846
    %v2848 = vpop.xlane.xlu0 %2847
    %v2849 = vsel %vm381, %v2833, -inf
    %2850 = vmax.xlane.f32.xlu0 %v2849
    %v2851 = vpop.xlane.xlu0 %2850
    %v2852 = vsel %vm381, %v2834, -inf
    %2853 = vmax.xlane.f32.xlu0 %v2852
    %v2854 = vpop.xlane.xlu0 %2853
    %v2855 = vsel %vm381, %v2835, -inf
    %2856 = vmax.xlane.f32.xlu0 %v2855
    %v2857 = vpop.xlane.xlu0 %2856
    %v2858 = vsel %vm381, %v2836, -inf
    %2859 = vmax.xlane.f32.xlu0 %v2858
    %v2860 = vpop.xlane.xlu0 %2859
    %v2861 = vsub.f32 %v2829, %v2839
    %v2862 = vsub.f32 %v2830, %v2842
    %v2863 = vsub.f32 %v2831, %v2845
    %v2864 = vsub.f32 %v2832, %v2848
    %v2865 = vsub.f32 %v2833, %v2851
    %v2866 = vsub.f32 %v2834, %v2854
    %v2867 = vsub.f32 %v2835, %v2857
    %v2868 = vsub.f32 %v2836, %v2860
    %v2869 = vmul.f32 %v2861, 1.442695
    %v2870 = vpow.pop %v2869
    %v2871 = vmul.f32 %v2862, 1.442695
    %v2872 = vpow.pop %v2871
    %v2873 = vmul.f32 %v2863, 1.442695
    %v2874 = vpow.pop %v2873
    %v2875 = vmul.f32 %v2864, 1.442695
    %v2876 = vpow.pop %v2875
    %v2877 = vmul.f32 %v2865, 1.442695
    %v2878 = vpow.pop %v2877
    %v2879 = vmul.f32 %v2866, 1.442695
    %v2880 = vpow.pop %v2879
    %v2881 = vmul.f32 %v2867, 1.442695
    %v2882 = vpow.pop %v2881
    %v2883 = vmul.f32 %v2868, 1.442695
    %v2884 = vpow.pop %v2883
    %v2885 = vsel %vm381, %v2870, 0.0
    %2886 = vadd.xlane.f32.xlu0 %v2885
    %v2887 = vpop.xlane.xlu0 %2886
    %v2888 = vsel %vm381, %v2872, 0.0
    %2889 = vadd.xlane.f32.xlu0 %v2888
    %v2890 = vpop.xlane.xlu0 %2889
    %v2891 = vsel %vm381, %v2874, 0.0
    %2892 = vadd.xlane.f32.xlu0 %v2891
    %v2893 = vpop.xlane.xlu0 %2892
    %v2894 = vsel %vm381, %v2876, 0.0
    %2895 = vadd.xlane.f32.xlu0 %v2894
    %v2896 = vpop.xlane.xlu0 %2895
    %v2897 = vsel %vm381, %v2878, 0.0
    %2898 = vadd.xlane.f32.xlu0 %v2897
    %v2899 = vpop.xlane.xlu0 %2898
    %v2900 = vsel %vm381, %v2880, 0.0
    %2901 = vadd.xlane.f32.xlu0 %v2900
    %v2902 = vpop.xlane.xlu0 %2901
    %v2903 = vsel %vm381, %v2882, 0.0
    %2904 = vadd.xlane.f32.xlu0 %v2903
    %v2905 = vpop.xlane.xlu0 %2904
    %v2906 = vsel %vm381, %v2884, 0.0
    %2907 = vadd.xlane.f32.xlu0 %v2906
    %v2908 = vpop.xlane.xlu0 %2907
    %v2909 = vrcp.pop %v2887
    %v2910 = vrcp.pop %v2890
    %v2911 = vrcp.pop %v2893
    %v2912 = vrcp.pop %v2896
    %v2913 = vrcp.pop %v2899
    %v2914 = vrcp.pop %v2902
    %v2915 = vrcp.pop %v2905
    %v2916 = vrcp.pop %v2908
    %v2917 = vmul.f32 %v2870, %v2909
    %v2918 = vmul.f32 %v2872, %v2910
    %v2919 = vmul.f32 %v2874, %v2911
    %v2920 = vmul.f32 %v2876, %v2912
    %v2921 = vmul.f32 %v2878, %v2913
    %v2922 = vmul.f32 %v2880, %v2914
    %v2923 = vmul.f32 %v2882, %v2915
    %v2924 = vmul.f32 %v2884, %v2916
    %2925 = vrot.lane.b32.xlu0 %v2191, 64
    %v2926 = vpop.permute.xlu0 %2925
    %v2929 = vsel %vm381, %v2917, 0
    %2931 = vmatprep.subr.mxu0 0.0
    %2932 = vmatpush1.msra.mxu0 %v2926
    %2933 = vmatprep.subr.mxu0 0.0
    %2934 = vmatpush1.msra.mxu0 0.0
    %2935 = vmatprep.subr.mxu0 0.0
    %2936 = vmatpush1.msra.mxu0 0.0
    %2937 = vmatprep.subr.mxu0 0.0
    %2938 = vmatpush1.msra.mxu0 0.0
    %2939 = vmatprep.subr.mxu0 0.0
    %2940 = vmatpush1.msra.mxu0 0.0
    %2941 = vmatprep.subr.mxu0 0.0
    %2942 = vmatpush1.msra.mxu0 0.0
    %2943 = vmatprep.subr.mxu0 0.0
    %2944 = vmatpush1.msra.mxu0 0.0
    %2945 = vmatprep.subr.mxu0 0.0
    %2946 = vmatpush1.msra.mxu0 0.0
    %2947 = vmatprep.subr.mxu0 0.0
    %2948 = vmatpush1.msra.mxu0 0.0
    %2949 = vmatprep.subr.mxu0 0.0
    %2950 = vmatpush1.msra.mxu0 0.0
    %2951 = vmatprep.subr.mxu0 0.0
    %2952 = vmatpush1.msra.mxu0 0.0
    %2953 = vmatprep.subr.mxu0 0.0
    %2954 = vmatpush1.msra.mxu0 0.0
    %2955 = vmatprep.subr.mxu0 0.0
    %2956 = vmatpush1.msra.mxu0 0.0
    %2957 = vmatprep.subr.mxu0 0.0
    %2958 = vmatpush1.msra.mxu0 0.0
    %2959 = vmatprep.subr.mxu0 0.0
    %2960 = vmatpush1.msra.mxu0 0.0
    %2961 = vmatprep.subr.mxu0 0.0
    %2962 = vmatpush1.msra.mxu0 0.0
    %2963 = vmatprep.subr.mxu0 0.0
    %2964 = vmatpush1.msra.mxu0 0.0
    %2965 = vmatprep.subr.mxu0 0.0
    %2966 = vmatpush1.msra.mxu0 0.0
    %2967 = vmatprep.subr.mxu0 0.0
    %2968 = vmatpush1.msra.mxu0 0.0
    %2969 = vmatprep.subr.mxu0 0.0
    %2970 = vmatpush1.msra.mxu0 0.0
    %2971 = vmatprep.subr.mxu0 0.0
    %2972 = vmatpush1.msra.mxu0 0.0
    %2973 = vmatprep.subr.mxu0 0.0
    %2974 = vmatpush1.msra.mxu0 0.0
    %2975 = vmatprep.subr.mxu0 0.0
    %2976 = vmatpush1.msra.mxu0 0.0
    %2977 = vmatprep.subr.mxu0 0.0
    %2978 = vmatpush1.msra.mxu0 0.0
    %2979 = vmatprep.subr.mxu0 0.0
    %2980 = vmatpush1.msra.mxu0 0.0
    %2981 = vmatprep.subr.mxu0 0.0
    %2982 = vmatpush1.msra.mxu0 0.0
    %2983 = vmatprep.subr.mxu0 0.0
    %2984 = vmatpush1.msra.mxu0 0.0
    %2985 = vmatprep.subr.mxu0 0.0
    %2986 = vmatpush1.msra.mxu0 0.0
    %2987 = vmatprep.subr.mxu0 0.0
    %2988 = vmatpush1.msra.mxu0 0.0
    %2989 = vmatprep.subr.mxu0 0.0
    %2990 = vmatpush1.msra.mxu0 0.0
    %2991 = vmatprep.subr.mxu0 0.0
    %2992 = vmatpush1.msra.mxu0 0.0
    %2993 = vmatprep.subr.mxu0 0.0
    %2994 = vmatpush1.msra.mxu0 0.0
    %2995 = vmatprep.mubr.f32.mxu0 0.0
    %2996 = vmatmul.mubr.f32.gmra.mrb[0].mxu0 %v2929
    %v2997 = vpop.f32.mrb[0].mxu0
    %v2998 = vadd.f32 0.0, %v2997
    %v2999 = vpop.f32.mrb[0].mxu0
    %3000 = vdwg.mxu0
    %3001 = vrot.lane.b32.xlu0 %v2201, 64
    %v3002 = vpop.permute.xlu0 %3001
    %v3005 = vsel %vm381, %v2918, 0
    %3007 = vmatprep.subr.mxu0 0.0
    %3008 = vmatpush1.msra.mxu0 %v3002
    %3009 = vmatprep.subr.mxu0 0.0
    %3010 = vmatpush1.msra.mxu0 0.0
    %3011 = vmatprep.subr.mxu0 0.0
    %3012 = vmatpush1.msra.mxu0 0.0
    %3013 = vmatprep.subr.mxu0 0.0
    %3014 = vmatpush1.msra.mxu0 0.0
    %3015 = vmatprep.subr.mxu0 0.0
    %3016 = vmatpush1.msra.mxu0 0.0
    %3017 = vmatprep.subr.mxu0 0.0
    %3018 = vmatpush1.msra.mxu0 0.0
    %3019 = vmatprep.subr.mxu0 0.0
    %3020 = vmatpush1.msra.mxu0 0.0
    %3021 = vmatprep.subr.mxu0 0.0
    %3022 = vmatpush1.msra.mxu0 0.0
    %3023 = vmatprep.subr.mxu0 0.0
    %3024 = vmatpush1.msra.mxu0 0.0
    %3025 = vmatprep.subr.mxu0 0.0
    %3026 = vmatpush1.msra.mxu0 0.0
    %3027 = vmatprep.subr.mxu0 0.0
    %3028 = vmatpush1.msra.mxu0 0.0
    %3029 = vmatprep.subr.mxu0 0.0
    %3030 = vmatpush1.msra.mxu0 0.0
    %3031 = vmatprep.subr.mxu0 0.0
    %3032 = vmatpush1.msra.mxu0 0.0
    %3033 = vmatprep.subr.mxu0 0.0
    %3034 = vmatpush1.msra.mxu0 0.0
    %3035 = vmatprep.subr.mxu0 0.0
    %3036 = vmatpush1.msra.mxu0 0.0
    %3037 = vmatprep.subr.mxu0 0.0
    %3038 = vmatpush1.msra.mxu0 0.0
    %3039 = vmatprep.subr.mxu0 0.0
    %3040 = vmatpush1.msra.mxu0 0.0
    %3041 = vmatprep.subr.mxu0 0.0
    %3042 = vmatpush1.msra.mxu0 0.0
    %3043 = vmatprep.subr.mxu0 0.0
    %3044 = vmatpush1.msra.mxu0 0.0
    %3045 = vmatprep.subr.mxu0 0.0
    %3046 = vmatpush1.msra.mxu0 0.0
    %3047 = vmatprep.subr.mxu0 0.0
    %3048 = vmatpush1.msra.mxu0 0.0
    %3049 = vmatprep.subr.mxu0 0.0
    %3050 = vmatpush1.msra.mxu0 0.0
    %3051 = vmatprep.subr.mxu0 0.0
    %3052 = vmatpush1.msra.mxu0 0.0
    %3053 = vmatprep.subr.mxu0 0.0
    %3054 = vmatpush1.msra.mxu0 0.0
    %3055 = vmatprep.subr.mxu0 0.0
    %3056 = vmatpush1.msra.mxu0 0.0
    %3057 = vmatprep.subr.mxu0 0.0
    %3058 = vmatpush1.msra.mxu0 0.0
    %3059 = vmatprep.subr.mxu0 0.0
    %3060 = vmatpush1.msra.mxu0 0.0
    %3061 = vmatprep.subr.mxu0 0.0
    %3062 = vmatpush1.msra.mxu0 0.0
    %3063 = vmatprep.subr.mxu0 0.0
    %3064 = vmatpush1.msra.mxu0 0.0
    %3065 = vmatprep.subr.mxu0 0.0
    %3066 = vmatpush1.msra.mxu0 0.0
    %3067 = vmatprep.subr.mxu0 0.0
    %3068 = vmatpush1.msra.mxu0 0.0
    %3069 = vmatprep.subr.mxu0 0.0
    %3070 = vmatpush1.msra.mxu0 0.0
    %3071 = vmatprep.mubr.f32.mxu0 0.0
    %3072 = vmatmul.mubr.f32.gmra.mrb[0].mxu0 %v3005
    %v3073 = vpop.f32.mrb[0].mxu0
    %v3074 = vadd.f32 0.0, %v3073
    %v3075 = vpop.f32.mrb[0].mxu0
    %3076 = vdwg.mxu0
    %3077 = vrot.lane.b32.xlu0 %v2203, 64
    %v3078 = vpop.permute.xlu0 %3077
    %v3081 = vsel %vm381, %v2919, 0
    %3083 = vmatprep.subr.mxu0 0.0
    %3084 = vmatpush1.msra.mxu0 %v3078
    %3085 = vmatprep.subr.mxu0 0.0
    %3086 = vmatpush1.msra.mxu0 0.0
    %3087 = vmatprep.subr.mxu0 0.0
    %3088 = vmatpush1.msra.mxu0 0.0
    %3089 = vmatprep.subr.mxu0 0.0
    %3090 = vmatpush1.msra.mxu0 0.0
    %3091 = vmatprep.subr.mxu0 0.0
    %3092 = vmatpush1.msra.mxu0 0.0
    %3093 = vmatprep.subr.mxu0 0.0
    %3094 = vmatpush1.msra.mxu0 0.0
    %3095 = vmatprep.subr.mxu0 0.0
    %3096 = vmatpush1.msra.mxu0 0.0
    %3097 = vmatprep.subr.mxu0 0.0
    %3098 = vmatpush1.msra.mxu0 0.0
    %3099 = vmatprep.subr.mxu0 0.0
    %3100 = vmatpush1.msra.mxu0 0.0
    %3101 = vmatprep.subr.mxu0 0.0
    %3102 = vmatpush1.msra.mxu0 0.0
    %3103 = vmatprep.subr.mxu0 0.0
    %3104 = vmatpush1.msra.mxu0 0.0
    %3105 = vmatprep.subr.mxu0 0.0
    %3106 = vmatpush1.msra.mxu0 0.0
    %3107 = vmatprep.subr.mxu0 0.0
    %3108 = vmatpush1.msra.mxu0 0.0
    %3109 = vmatprep.subr.mxu0 0.0
    %3110 = vmatpush1.msra.mxu0 0.0
    %3111 = vmatprep.subr.mxu0 0.0
    %3112 = vmatpush1.msra.mxu0 0.0
    %3113 = vmatprep.subr.mxu0 0.0
    %3114 = vmatpush1.msra.mxu0 0.0
    %3115 = vmatprep.subr.mxu0 0.0
    %3116 = vmatpush1.msra.mxu0 0.0
    %3117 = vmatprep.subr.mxu0 0.0
    %3118 = vmatpush1.msra.mxu0 0.0
    %3119 = vmatprep.subr.mxu0 0.0
    %3120 = vmatpush1.msra.mxu0 0.0
    %3121 = vmatprep.subr.mxu0 0.0
    %3122 = vmatpush1.msra.mxu0 0.0
    %3123 = vmatprep.subr.mxu0 0.0
    %3124 = vmatpush1.msra.mxu0 0.0
    %3125 = vmatprep.subr.mxu0 0.0
    %3126 = vmatpush1.msra.mxu0 0.0
    %3127 = vmatprep.subr.mxu0 0.0
    %3128 = vmatpush1.msra.mxu0 0.0
    %3129 = vmatprep.subr.mxu0 0.0
    %3130 = vmatpush1.msra.mxu0 0.0
    %3131 = vmatprep.subr.mxu0 0.0
    %3132 = vmatpush1.msra.mxu0 0.0
    %3133 = vmatprep.subr.mxu0 0.0
    %3134 = vmatpush1.msra.mxu0 0.0
    %3135 = vmatprep.subr.mxu0 0.0
    %3136 = vmatpush1.msra.mxu0 0.0
    %3137 = vmatprep.subr.mxu0 0.0
    %3138 = vmatpush1.msra.mxu0 0.0
    %3139 = vmatprep.subr.mxu0 0.0
    %3140 = vmatpush1.msra.mxu0 0.0
    %3141 = vmatprep.subr.mxu0 0.0
    %3142 = vmatpush1.msra.mxu0 0.0
    %3143 = vmatprep.subr.mxu0 0.0
    %3144 = vmatpush1.msra.mxu0 0.0
    %3145 = vmatprep.subr.mxu0 0.0
    %3146 = vmatpush1.msra.mxu0 0.0
    %3147 = vmatprep.mubr.f32.mxu0 0.0
    %3148 = vmatmul.mubr.f32.gmra.mrb[0].mxu0 %v3081
    %v3149 = vpop.f32.mrb[0].mxu0
    %v3150 = vadd.f32 0.0, %v3149
    %v3151 = vpop.f32.mrb[0].mxu0
    %3152 = vdwg.mxu0
    %3153 = vrot.lane.b32.xlu0 %v2205, 64
    %v3154 = vpop.permute.xlu0 %3153
    %v3157 = vsel %vm381, %v2920, 0
    %3159 = vmatprep.subr.mxu0 0.0
    %3160 = vmatpush1.msra.mxu0 %v3154
    %3161 = vmatprep.subr.mxu0 0.0
    %3162 = vmatpush1.msra.mxu0 0.0
    %3163 = vmatprep.subr.mxu0 0.0
    %3164 = vmatpush1.msra.mxu0 0.0
    %3165 = vmatprep.subr.mxu0 0.0
    %3166 = vmatpush1.msra.mxu0 0.0
    %3167 = vmatprep.subr.mxu0 0.0
    %3168 = vmatpush1.msra.mxu0 0.0
    %3169 = vmatprep.subr.mxu0 0.0
    %3170 = vmatpush1.msra.mxu0 0.0
    %3171 = vmatprep.subr.mxu0 0.0
    %3172 = vmatpush1.msra.mxu0 0.0
    %3173 = vmatprep.subr.mxu0 0.0
    %3174 = vmatpush1.msra.mxu0 0.0
    %3175 = vmatprep.subr.mxu0 0.0
    %3176 = vmatpush1.msra.mxu0 0.0
    %3177 = vmatprep.subr.mxu0 0.0
    %3178 = vmatpush1.msra.mxu0 0.0
    %3179 = vmatprep.subr.mxu0 0.0
    %3180 = vmatpush1.msra.mxu0 0.0
    %3181 = vmatprep.subr.mxu0 0.0
    %3182 = vmatpush1.msra.mxu0 0.0
    %3183 = vmatprep.subr.mxu0 0.0
    %3184 = vmatpush1.msra.mxu0 0.0
    %3185 = vmatprep.subr.mxu0 0.0
    %3186 = vmatpush1.msra.mxu0 0.0
    %3187 = vmatprep.subr.mxu0 0.0
    %3188 = vmatpush1.msra.mxu0 0.0
    %3189 = vmatprep.subr.mxu0 0.0
    %3190 = vmatpush1.msra.mxu0 0.0
    %3191 = vmatprep.subr.mxu0 0.0
    %3192 = vmatpush1.msra.mxu0 0.0
    %3193 = vmatprep.subr.mxu0 0.0
    %3194 = vmatpush1.msra.mxu0 0.0
    %3195 = vmatprep.subr.mxu0 0.0
    %3196 = vmatpush1.msra.mxu0 0.0
    %3197 = vmatprep.subr.mxu0 0.0
    %3198 = vmatpush1.msra.mxu0 0.0
    %3199 = vmatprep.subr.mxu0 0.0
    %3200 = vmatpush1.msra.mxu0 0.0
    %3201 = vmatprep.subr.mxu0 0.0
    %3202 = vmatpush1.msra.mxu0 0.0
    %3203 = vmatprep.subr.mxu0 0.0
    %3204 = vmatpush1.msra.mxu0 0.0
    %3205 = vmatprep.subr.mxu0 0.0
    %3206 = vmatpush1.msra.mxu0 0.0
    %3207 = vmatprep.subr.mxu0 0.0
    %3208 = vmatpush1.msra.mxu0 0.0
    %3209 = vmatprep.subr.mxu0 0.0
    %3210 = vmatpush1.msra.mxu0 0.0
    %3211 = vmatprep.subr.mxu0 0.0
    %3212 = vmatpush1.msra.mxu0 0.0
    %3213 = vmatprep.subr.mxu0 0.0
    %3214 = vmatpush1.msra.mxu0 0.0
    %3215 = vmatprep.subr.mxu0 0.0
    %3216 = vmatpush1.msra.mxu0 0.0
    %3217 = vmatprep.subr.mxu0 0.0
    %3218 = vmatpush1.msra.mxu0 0.0
    %3219 = vmatprep.subr.mxu0 0.0
    %3220 = vmatpush1.msra.mxu0 0.0
    %3221 = vmatprep.subr.mxu0 0.0
    %3222 = vmatpush1.msra.mxu0 0.0
    %3223 = vmatprep.mubr.f32.mxu0 0.0
    %3224 = vmatmul.mubr.f32.gmra.mrb[0].mxu0 %v3157
    %v3225 = vpop.f32.mrb[0].mxu0
    %v3226 = vadd.f32 0.0, %v3225
    %v3227 = vpop.f32.mrb[0].mxu0
    %3228 = vdwg.mxu0
    %3229 = vrot.lane.b32.xlu0 %v2196, 64
    %v3230 = vpop.permute.xlu0 %3229
    %v3233 = vsel %vm381, %v2921, 0
    %3235 = vmatprep.subr.mxu0 0.0
    %3236 = vmatpush1.msra.mxu0 %v3230
    %3237 = vmatprep.subr.mxu0 0.0
    %3238 = vmatpush1.msra.mxu0 0.0
    %3239 = vmatprep.subr.mxu0 0.0
    %3240 = vmatpush1.msra.mxu0 0.0
    %3241 = vmatprep.subr.mxu0 0.0
    %3242 = vmatpush1.msra.mxu0 0.0
    %3243 = vmatprep.subr.mxu0 0.0
    %3244 = vmatpush1.msra.mxu0 0.0
    %3245 = vmatprep.subr.mxu0 0.0
    %3246 = vmatpush1.msra.mxu0 0.0
    %3247 = vmatprep.subr.mxu0 0.0
    %3248 = vmatpush1.msra.mxu0 0.0
    %3249 = vmatprep.subr.mxu0 0.0
    %3250 = vmatpush1.msra.mxu0 0.0
    %3251 = vmatprep.subr.mxu0 0.0
    %3252 = vmatpush1.msra.mxu0 0.0
    %3253 = vmatprep.subr.mxu0 0.0
    %3254 = vmatpush1.msra.mxu0 0.0
    %3255 = vmatprep.subr.mxu0 0.0
    %3256 = vmatpush1.msra.mxu0 0.0
    %3257 = vmatprep.subr.mxu0 0.0
    %3258 = vmatpush1.msra.mxu0 0.0
    %3259 = vmatprep.subr.mxu0 0.0
    %3260 = vmatpush1.msra.mxu0 0.0
    %3261 = vmatprep.subr.mxu0 0.0
    %3262 = vmatpush1.msra.mxu0 0.0
    %3263 = vmatprep.subr.mxu0 0.0
    %3264 = vmatpush1.msra.mxu0 0.0
    %3265 = vmatprep.subr.mxu0 0.0
    %3266 = vmatpush1.msra.mxu0 0.0
    %3267 = vmatprep.subr.mxu0 0.0
    %3268 = vmatpush1.msra.mxu0 0.0
    %3269 = vmatprep.subr.mxu0 0.0
    %3270 = vmatpush1.msra.mxu0 0.0
    %3271 = vmatprep.subr.mxu0 0.0
    %3272 = vmatpush1.msra.mxu0 0.0
    %3273 = vmatprep.subr.mxu0 0.0
    %3274 = vmatpush1.msra.mxu0 0.0
    %3275 = vmatprep.subr.mxu0 0.0
    %3276 = vmatpush1.msra.mxu0 0.0
    %3277 = vmatprep.subr.mxu0 0.0
    %3278 = vmatpush1.msra.mxu0 0.0
    %3279 = vmatprep.subr.mxu0 0.0
    %3280 = vmatpush1.msra.mxu0 0.0
    %3281 = vmatprep.subr.mxu0 0.0
    %3282 = vmatpush1.msra.mxu0 0.0
    %3283 = vmatprep.subr.mxu0 0.0
    %3284 = vmatpush1.msra.mxu0 0.0
    %3285 = vmatprep.subr.mxu0 0.0
    %3286 = vmatpush1.msra.mxu0 0.0
    %3287 = vmatprep.subr.mxu0 0.0
    %3288 = vmatpush1.msra.mxu0 0.0
    %3289 = vmatprep.subr.mxu0 0.0
    %3290 = vmatpush1.msra.mxu0 0.0
    %3291 = vmatprep.subr.mxu0 0.0
    %3292 = vmatpush1.msra.mxu0 0.0
    %3293 = vmatprep.subr.mxu0 0.0
    %3294 = vmatpush1.msra.mxu0 0.0
    %3295 = vmatprep.subr.mxu0 0.0
    %3296 = vmatpush1.msra.mxu0 0.0
    %3297 = vmatprep.subr.mxu0 0.0
    %3298 = vmatpush1.msra.mxu0 0.0
    %3299 = vmatprep.mubr.f32.mxu0 0.0
    %3300 = vmatmul.mubr.f32.gmra.mrb[0].mxu0 %v3233
    %v3301 = vpop.f32.mrb[0].mxu0
    %v3302 = vadd.f32 0.0, %v3301
    %v3303 = vpop.f32.mrb[0].mxu0
    %3304 = vdwg.mxu0
    %3305 = vrot.lane.b32.xlu0 %v2208, 64
    %v3306 = vpop.permute.xlu0 %3305
    %v3309 = vsel %vm381, %v2922, 0
    %3311 = vmatprep.subr.mxu0 0.0
    %3312 = vmatpush1.msra.mxu0 %v3306
    %3313 = vmatprep.subr.mxu0 0.0
    %3314 = vmatpush1.msra.mxu0 0.0
    %3315 = vmatprep.subr.mxu0 0.0
    %3316 = vmatpush1.msra.mxu0 0.0
    %3317 = vmatprep.subr.mxu0 0.0
    %3318 = vmatpush1.msra.mxu0 0.0
    %3319 = vmatprep.subr.mxu0 0.0
    %3320 = vmatpush1.msra.mxu0 0.0
    %3321 = vmatprep.subr.mxu0 0.0
    %3322 = vmatpush1.msra.mxu0 0.0
    %3323 = vmatprep.subr.mxu0 0.0
    %3324 = vmatpush1.msra.mxu0 0.0
    %3325 = vmatprep.subr.mxu0 0.0
    %3326 = vmatpush1.msra.mxu0 0.0
    %3327 = vmatprep.subr.mxu0 0.0
    %3328 = vmatpush1.msra.mxu0 0.0
    %3329 = vmatprep.subr.mxu0 0.0
    %3330 = vmatpush1.msra.mxu0 0.0
    %3331 = vmatprep.subr.mxu0 0.0
    %3332 = vmatpush1.msra.mxu0 0.0
    %3333 = vmatprep.subr.mxu0 0.0
    %3334 = vmatpush1.msra.mxu0 0.0
    %3335 = vmatprep.subr.mxu0 0.0
    %3336 = vmatpush1.msra.mxu0 0.0
    %3337 = vmatprep.subr.mxu0 0.0
    %3338 = vmatpush1.msra.mxu0 0.0
    %3339 = vmatprep.subr.mxu0 0.0
    %3340 = vmatpush1.msra.mxu0 0.0
    %3341 = vmatprep.subr.mxu0 0.0
    %3342 = vmatpush1.msra.mxu0 0.0
    %3343 = vmatprep.subr.mxu0 0.0
    %3344 = vmatpush1.msra.mxu0 0.0
    %3345 = vmatprep.subr.mxu0 0.0
    %3346 = vmatpush1.msra.mxu0 0.0
    %3347 = vmatprep.subr.mxu0 0.0
    %3348 = vmatpush1.msra.mxu0 0.0
    %3349 = vmatprep.subr.mxu0 0.0
    %3350 = vmatpush1.msra.mxu0 0.0
    %3351 = vmatprep.subr.mxu0 0.0
    %3352 = vmatpush1.msra.mxu0 0.0
    %3353 = vmatprep.subr.mxu0 0.0
    %3354 = vmatpush1.msra.mxu0 0.0
    %3355 = vmatprep.subr.mxu0 0.0
    %3356 = vmatpush1.msra.mxu0 0.0
    %3357 = vmatprep.subr.mxu0 0.0
    %3358 = vmatpush1.msra.mxu0 0.0
    %3359 = vmatprep.subr.mxu0 0.0
    %3360 = vmatpush1.msra.mxu0 0.0
    %3361 = vmatprep.subr.mxu0 0.0
    %3362 = vmatpush1.msra.mxu0 0.0
    %3363 = vmatprep.subr.mxu0 0.0
    %3364 = vmatpush1.msra.mxu0 0.0
    %3365 = vmatprep.subr.mxu0 0.0
    %3366 = vmatpush1.msra.mxu0 0.0
    %3367 = vmatprep.subr.mxu0 0.0
    %3368 = vmatpush1.msra.mxu0 0.0
    %3369 = vmatprep.subr.mxu0 0.0
    %3370 = vmatpush1.msra.mxu0 0.0
    %3371 = vmatprep.subr.mxu0 0.0
    %3372 = vmatpush1.msra.mxu0 0.0
    %3373 = vmatprep.subr.mxu0 0.0
    %3374 = vmatpush1.msra.mxu0 0.0
    %3375 = vmatprep.mubr.f32.mxu0 0.0
    %3376 = vmatmul.mubr.f32.gmra.mrb[0].mxu0 %v3309
    %v3377 = vpop.f32.mrb[0].mxu0
    %v3378 = vadd.f32 0.0, %v3377
    %v3379 = vpop.f32.mrb[0].mxu0
    %3380 = vdwg.mxu0
    %3381 = vrot.lane.b32.xlu0 %v2210, 64
    %v3382 = vpop.permute.xlu0 %3381
    %v3385 = vsel %vm381, %v2923, 0
    %3387 = vmatprep.subr.mxu0 0.0
    %3388 = vmatpush1.msra.mxu0 %v3382
    %3389 = vmatprep.subr.mxu0 0.0
    %3390 = vmatpush1.msra.mxu0 0.0
    %3391 = vmatprep.subr.mxu0 0.0
    %3392 = vmatpush1.msra.mxu0 0.0
    %3393 = vmatprep.subr.mxu0 0.0
    %3394 = vmatpush1.msra.mxu0 0.0
    %3395 = vmatprep.subr.mxu0 0.0
    %3396 = vmatpush1.msra.mxu0 0.0
    %3397 = vmatprep.subr.mxu0 0.0
    %3398 = vmatpush1.msra.mxu0 0.0
    %3399 = vmatprep.subr.mxu0 0.0
    %3400 = vmatpush1.msra.mxu0 0.0
    %3401 = vmatprep.subr.mxu0 0.0
    %3402 = vmatpush1.msra.mxu0 0.0
    %3403 = vmatprep.subr.mxu0 0.0
    %3404 = vmatpush1.msra.mxu0 0.0
    %3405 = vmatprep.subr.mxu0 0.0
    %3406 = vmatpush1.msra.mxu0 0.0
    %3407 = vmatprep.subr.mxu0 0.0
    %3408 = vmatpush1.msra.mxu0 0.0
    %3409 = vmatprep.subr.mxu0 0.0
    %3410 = vmatpush1.msra.mxu0 0.0
    %3411 = vmatprep.subr.mxu0 0.0
    %3412 = vmatpush1.msra.mxu0 0.0
    %3413 = vmatprep.subr.mxu0 0.0
    %3414 = vmatpush1.msra.mxu0 0.0
    %3415 = vmatprep.subr.mxu0 0.0
    %3416 = vmatpush1.msra.mxu0 0.0
    %3417 = vmatprep.subr.mxu0 0.0
    %3418 = vmatpush1.msra.mxu0 0.0
    %3419 = vmatprep.subr.mxu0 0.0
    %3420 = vmatpush1.msra.mxu0 0.0
    %3421 = vmatprep.subr.mxu0 0.0
    %3422 = vmatpush1.msra.mxu0 0.0
    %3423 = vmatprep.subr.mxu0 0.0
    %3424 = vmatpush1.msra.mxu0 0.0
    %3425 = vmatprep.subr.mxu0 0.0
    %3426 = vmatpush1.msra.mxu0 0.0
    %3427 = vmatprep.subr.mxu0 0.0
    %3428 = vmatpush1.msra.mxu0 0.0
    %3429 = vmatprep.subr.mxu0 0.0
    %3430 = vmatpush1.msra.mxu0 0.0
    %3431 = vmatprep.subr.mxu0 0.0
    %3432 = vmatpush1.msra.mxu0 0.0
    %3433 = vmatprep.subr.mxu0 0.0
    %3434 = vmatpush1.msra.mxu0 0.0
    %3435 = vmatprep.subr.mxu0 0.0
    %3436 = vmatpush1.msra.mxu0 0.0
    %3437 = vmatprep.subr.mxu0 0.0
    %3438 = vmatpush1.msra.mxu0 0.0
    %3439 = vmatprep.subr.mxu0 0.0
    %3440 = vmatpush1.msra.mxu0 0.0
    %3441 = vmatprep.subr.mxu0 0.0
    %3442 = vmatpush1.msra.mxu0 0.0
    %3443 = vmatprep.subr.mxu0 0.0
    %3444 = vmatpush1.msra.mxu0 0.0
    %3445 = vmatprep.subr.mxu0 0.0
    %3446 = vmatpush1.msra.mxu0 0.0
    %3447 = vmatprep.subr.mxu0 0.0
    %3448 = vmatpush1.msra.mxu0 0.0
    %3449 = vmatprep.subr.mxu0 0.0
    %3450 = vmatpush1.msra.mxu0 0.0
    %3451 = vmatprep.mubr.f32.mxu0 0.0
    %3452 = vmatmul.mubr.f32.gmra.mrb[0].mxu0 %v3385
    %v3453 = vpop.f32.mrb[0].mxu0
    %v3454 = vadd.f32 0.0, %v3453
    %v3455 = vpop.f32.mrb[0].mxu0
    %3456 = vdwg.mxu0
    %3457 = vrot.lane.b32.xlu0 %v2212, 64
    %v3458 = vpop.permute.xlu0 %3457
    %v3461 = vsel %vm381, %v2924, 0
    %3463 = vmatprep.subr.mxu0 0.0
    %3464 = vmatpush1.msra.mxu0 %v3458
    %3465 = vmatprep.subr.mxu0 0.0
    %3466 = vmatpush1.msra.mxu0 0.0
    %3467 = vmatprep.subr.mxu0 0.0
    %3468 = vmatpush1.msra.mxu0 0.0
    %3469 = vmatprep.subr.mxu0 0.0
    %3470 = vmatpush1.msra.mxu0 0.0
    %3471 = vmatprep.subr.mxu0 0.0
    %3472 = vmatpush1.msra.mxu0 0.0
    %3473 = vmatprep.subr.mxu0 0.0
    %3474 = vmatpush1.msra.mxu0 0.0
    %3475 = vmatprep.subr.mxu0 0.0
    %3476 = vmatpush1.msra.mxu0 0.0
    %3477 = vmatprep.subr.mxu0 0.0
    %3478 = vmatpush1.msra.mxu0 0.0
    %3479 = vmatprep.subr.mxu0 0.0
    %3480 = vmatpush1.msra.mxu0 0.0
    %3481 = vmatprep.subr.mxu0 0.0
    %3482 = vmatpush1.msra.mxu0 0.0
    %3483 = vmatprep.subr.mxu0 0.0
    %3484 = vmatpush1.msra.mxu0 0.0
    %3485 = vmatprep.subr.mxu0 0.0
    %3486 = vmatpush1.msra.mxu0 0.0
    %3487 = vmatprep.subr.mxu0 0.0
    %3488 = vmatpush1.msra.mxu0 0.0
    %3489 = vmatprep.subr.mxu0 0.0
    %3490 = vmatpush1.msra.mxu0 0.0
    %3491 = vmatprep.subr.mxu0 0.0
    %3492 = vmatpush1.msra.mxu0 0.0
    %3493 = vmatprep.subr.mxu0 0.0
    %3494 = vmatpush1.msra.mxu0 0.0
    %3495 = vmatprep.subr.mxu0 0.0
    %3496 = vmatpush1.msra.mxu0 0.0
    %3497 = vmatprep.subr.mxu0 0.0
    %3498 = vmatpush1.msra.mxu0 0.0
    %3499 = vmatprep.subr.mxu0 0.0
    %3500 = vmatpush1.msra.mxu0 0.0
    %3501 = vmatprep.subr.mxu0 0.0
    %3502 = vmatpush1.msra.mxu0 0.0
    %3503 = vmatprep.subr.mxu0 0.0
    %3504 = vmatpush1.msra.mxu0 0.0
    %3505 = vmatprep.subr.mxu0 0.0
    %3506 = vmatpush1.msra.mxu0 0.0
    %3507 = vmatprep.subr.mxu0 0.0
    %3508 = vmatpush1.msra.mxu0 0.0
    %3509 = vmatprep.subr.mxu0 0.0
    %3510 = vmatpush1.msra.mxu0 0.0
    %3511 = vmatprep.subr.mxu0 0.0
    %3512 = vmatpush1.msra.mxu0 0.0
    %3513 = vmatprep.subr.mxu0 0.0
    %3514 = vmatpush1.msra.mxu0 0.0
    %3515 = vmatprep.subr.mxu0 0.0
    %3516 = vmatpush1.msra.mxu0 0.0
    %3517 = vmatprep.subr.mxu0 0.0
    %3518 = vmatpush1.msra.mxu0 0.0
    %3519 = vmatprep.subr.mxu0 0.0
    %3520 = vmatpush1.msra.mxu0 0.0
    %3521 = vmatprep.subr.mxu0 0.0
    %3522 = vmatpush1.msra.mxu0 0.0
    %3523 = vmatprep.subr.mxu0 0.0
    %3524 = vmatpush1.msra.mxu0 0.0
    %3525 = vmatprep.subr.mxu0 0.0
    %3526 = vmatpush1.msra.mxu0 0.0
    %3527 = vmatprep.mubr.f32.mxu0 0.0
    %3528 = vmatmul.mubr.f32.gmra.mrb[0].mxu0 %v3461
    %v3529 = vpop.f32.mrb[0].mxu0
    %v3530 = vadd.f32 0.0, %v3529
    %v3531 = vpop.f32.mrb[0].mxu0
    %3532 = vdwg.mxu0
    %3534 = vrot.lane.b32.xlu0 %v3074, 8
    %v3535 = vpop.permute.xlu0 %3534
    %3538 = vrot.lane.b32.xlu0 %v3150, 16
    %v3539 = vpop.permute.xlu0 %3538
    %3542 = vrot.lane.b32.xlu0 %v3226, 24
    %v3543 = vpop.permute.xlu0 %3542
    %v3545 = vsel %vm381, %v2998, %v3535
    %v3546 = vsel %vm1715, %v3545, %v3539
    %v3547 = vsel %vm1717, %v3546, %v3543
    %3549 = vrot.lane.b32.xlu0 %v3378, 8
    %v3550 = vpop.permute.xlu0 %3549
    %3553 = vrot.lane.b32.xlu0 %v3454, 16
    %v3554 = vpop.permute.xlu0 %3553
    %3557 = vrot.lane.b32.xlu0 %v3530, 24
    %v3558 = vpop.permute.xlu0 %3557
    %v3560 = vsel %vm381, %v3302, %v3550
    %v3561 = vsel %vm1715, %v3560, %v3554
    %v3562 = vsel %vm1717, %v3561, %v3558
    %v3563 = vld [vmem:[%s35] sm:$0xff]
    %v3564 = vld [vmem:[%s35 + $0x8] sm:$0xff]
    %v3565 = vld [vmem:[%s35 + $0x10] sm:$0xff]
    %v3566 = vld [vmem:[%s35 + $0x18] sm:$0xff]
    %v3568 = vsel %vm236, %v3547, 0
    %v3571 = vsel %vm236, %v3562, 0
    %3573 = vmatprep.subr.mxu0 0.0
    %3574 = vmatpush1.msra.mxu0 %v3563
    %3575 = vmatprep.subr.mxu0 0.0
    %3576 = vmatpush1.msra.mxu0 %v3564
    %3577 = vmatprep.subr.mxu0 0.0
    %3578 = vmatpush1.msra.mxu0 %v3565
    %3579 = vmatprep.subr.mxu0 0.0
    %3580 = vmatpush1.msra.mxu0 %v3566
    %3581 = vmatprep.subr.mxu0 0.0
    %3582 = vmatpush1.msra.mxu0 0.0
    %3583 = vmatprep.subr.mxu0 0.0
    %3584 = vmatpush1.msra.mxu0 0.0
    %3585 = vmatprep.subr.mxu0 0.0
    %3586 = vmatpush1.msra.mxu0 0.0
    %3587 = vmatprep.subr.mxu0 0.0
    %3588 = vmatpush1.msra.mxu0 0.0
    %3589 = vmatprep.subr.mxu0 0.0
    %3590 = vmatpush1.msra.mxu0 0.0
    %3591 = vmatprep.subr.mxu0 0.0
    %3592 = vmatpush1.msra.mxu0 0.0
    %3593 = vmatprep.subr.mxu0 0.0
    %3594 = vmatpush1.msra.mxu0 0.0
    %3595 = vmatprep.subr.mxu0 0.0
    %3596 = vmatpush1.msra.mxu0 0.0
    %3597 = vmatprep.subr.mxu0 0.0
    %3598 = vmatpush1.msra.mxu0 0.0
    %3599 = vmatprep.subr.mxu0 0.0
    %3600 = vmatpush1.msra.mxu0 0.0
    %3601 = vmatprep.subr.mxu0 0.0
    %3602 = vmatpush1.msra.mxu0 0.0
    %3603 = vmatprep.subr.mxu0 0.0
    %3604 = vmatpush1.msra.mxu0 0.0
    %3605 = vmatprep.subr.mxu0 0.0
    %3606 = vmatpush1.msra.mxu0 0.0
    %3607 = vmatprep.subr.mxu0 0.0
    %3608 = vmatpush1.msra.mxu0 0.0
    %3609 = vmatprep.subr.mxu0 0.0
    %3610 = vmatpush1.msra.mxu0 0.0
    %3611 = vmatprep.subr.mxu0 0.0
    %3612 = vmatpush1.msra.mxu0 0.0
    %3613 = vmatprep.subr.mxu0 0.0
    %3614 = vmatpush1.msra.mxu0 0.0
    %3615 = vmatprep.subr.mxu0 0.0
    %3616 = vmatpush1.msra.mxu0 0.0
    %3617 = vmatprep.subr.mxu0 0.0
    %3618 = vmatpush1.msra.mxu0 0.0
    %3619 = vmatprep.subr.mxu0 0.0
    %3620 = vmatpush1.msra.mxu0 0.0
    %3621 = vmatprep.subr.mxu0 0.0
    %3622 = vmatpush1.msra.mxu0 0.0
    %3623 = vmatprep.subr.mxu0 0.0
    %3624 = vmatpush1.msra.mxu0 0.0
    %3625 = vmatprep.subr.mxu0 0.0
    %3626 = vmatpush1.msra.mxu0 0.0
    %3627 = vmatprep.subr.mxu0 0.0
    %3628 = vmatpush1.msra.mxu0 0.0
    %3629 = vmatprep.subr.mxu0 0.0
    %3630 = vmatpush1.msra.mxu0 0.0
    %3631 = vmatprep.subr.mxu0 0.0
    %3632 = vmatpush1.msra.mxu0 0.0
    %3633 = vmatprep.subr.mxu0 0.0
    %3634 = vmatpush1.msra.mxu0 0.0
    %3635 = vmatprep.subr.mxu0 0.0
    %3636 = vmatpush1.msra.mxu0 0.0
    %3637 = vmatprep.mubr.f32.mxu0 0.0
    %3638 = vmatmul.mubr.f32.gmra.mrb[0].mxu0 %v3568
    %v3639 = vpop.f32.mrb[0].mxu0
    %v3640 = vadd.f32 0.0, %v3639
    %v3641 = vpop.f32.mrb[0].mxu0
    %3642 = vmatprep.mubr.f32.mxu0 0.0
    %3643 = vmatmul.mubr.f32.gmra.mrb[0].mxu0 %v3571
    %v3644 = vpop.f32.mrb[0].mxu0
    %v3645 = vadd.f32 0.0, %v3644
    %v3646 = vpop.f32.mrb[0].mxu0
    %3647 = vdwg.mxu0
    %v3648 = vadd.f32 %v2068, %v3640
    %v3649 = vadd.f32 %v2069, %v3645
    %v3650 = vld [vmem:[%s37] sm:$0x1]
    %v3652 = vlaneseq
    %v3653 = vshrl.u32 %v3652, 7
    %v3654 = vsub.s32 0, %v3653
    %v3655 = vrot.slane %v3650, %v3654
    %v3657 = vadd.f32 %v3648, %v3655
    %v3658 = vadd.f32 %v3649, %v3655
    %v3659 = vld [vmem:[%s39] sm:$0x1]
    %v3660 = vld [vmem:[%s41] sm:$0x1]
    %v3661 = vsel %vm236, %v3657, 0.0
    %3662 = vadd.xlane.f32.xlu0 %v3661
    %v3663 = vpop.xlane.xlu0 %3662
    %v3664 = vsel %vm236, %v3658, 0.0
    %3665 = vadd.xlane.f32.xlu0 %v3664
    %v3666 = vpop.xlane.xlu0 %3665
    %v3667 = vmul.f32 %v3663, %v243
    %v3668 = vmul.f32 %v3666, %v243
    %v3669 = vsub.f32 %v3657, %v3667
    %v3670 = vsub.f32 %v3658, %v3668
    %v3671 = vmul.f32 %v3669, %v3669
    %v3672 = vmul.f32 %v3670, %v3670
    %v3673 = vsel %vm236, %v3671, 0.0
    %3674 = vadd.xlane.f32.xlu0 %v3673
    %v3675 = vpop.xlane.xlu0 %3674
    %v3676 = vsel %vm236, %v3672, 0.0
    %3677 = vadd.xlane.f32.xlu0 %v3676
    %v3678 = vpop.xlane.xlu0 %3677
    %v3679 = vmul.f32 %v3675, %v243
    %v3680 = vmul.f32 %v3678, %v243
    %v3681 = vadd.f32 %v3679, 1e-05
    %v3682 = vadd.f32 %v3680, 1e-05
    %v3683 = vrsqrt.pop %v3681
    %v3684 = vrsqrt.pop %v3682
    %v3685 = vmul.f32 %v3669, %v3683
    %v3686 = vmul.f32 %v3670, %v3684
    %v3688 = vlaneseq
    %v3689 = vshrl.u32 %v3688, 7
    %v3690 = vsub.s32 0, %v3689
    %v3691 = vrot.slane %v3659, %v3690
    %v3693 = vmul.f32 %v3685, %v3691
    %v3694 = vmul.f32 %v3686, %v3691
    %v3696 = vlaneseq
    %v3697 = vshrl.u32 %v3696, 7
    %v3698 = vsub.s32 0, %v3697
    %v3699 = vrot.slane %v3660, %v3698
    %v3701 = vadd.f32 %v3693, %v3699
    %v3702 = vadd.f32 %v3694, %v3699
    %v3703 = vld [vmem:[%s43] sm:$0xff]
    %v3704 = vld [vmem:[%s43 + $0x8] sm:$0xff]
    %v3705 = vld [vmem:[%s43 + $0x10] sm:$0xff]
    %v3706 = vld [vmem:[%s43 + $0x18] sm:$0xff]
    %v3707 = vld [vmem:[%s45] sm:$0x1]
    %v3709 = vlaneseq
    %v3710 = vshrl.u32 %v3709, 7
    %v3711 = vsub.s32 0, %v3710
    %v3712 = vrot.slane %v3707, %v3711
    %v3715 = vsel %vm236, %v3701, 0
    %v3718 = vsel %vm236, %v3702, 0
    %3720 = vmatprep.subr.mxu0 0.0
    %3721 = vmatpush1.msra.mxu0 %v3703
    %3722 = vmatprep.subr.mxu0 0.0
    %3723 = vmatpush1.msra.mxu0 %v3704
    %3724 = vmatprep.subr.mxu0 0.0
    %3725 = vmatpush1.msra.mxu0 %v3705
    %3726 = vmatprep.subr.mxu0 0.0
    %3727 = vmatpush1.msra.mxu0 %v3706
    %3728 = vmatprep.subr.mxu0 0.0
    %3729 = vmatpush1.msra.mxu0 0.0
    %3730 = vmatprep.subr.mxu0 0.0
    %3731 = vmatpush1.msra.mxu0 0.0
    %3732 = vmatprep.subr.mxu0 0.0
    %3733 = vmatpush1.msra.mxu0 0.0
    %3734 = vmatprep.subr.mxu0 0.0
    %3735 = vmatpush1.msra.mxu0 0.0
    %3736 = vmatprep.subr.mxu0 0.0
    %3737 = vmatpush1.msra.mxu0 0.0
    %3738 = vmatprep.subr.mxu0 0.0
    %3739 = vmatpush1.msra.mxu0 0.0
    %3740 = vmatprep.subr.mxu0 0.0
    %3741 = vmatpush1.msra.mxu0 0.0
    %3742 = vmatprep.subr.mxu0 0.0
    %3743 = vmatpush1.msra.mxu0 0.0
    %3744 = vmatprep.subr.mxu0 0.0
    %3745 = vmatpush1.msra.mxu0 0.0
    %3746 = vmatprep.subr.mxu0 0.0
    %3747 = vmatpush1.msra.mxu0 0.0
    %3748 = vmatprep.subr.mxu0 0.0
    %3749 = vmatpush1.msra.mxu0 0.0
    %3750 = vmatprep.subr.mxu0 0.0
    %3751 = vmatpush1.msra.mxu0 0.0
    %3752 = vmatprep.subr.mxu0 0.0
    %3753 = vmatpush1.msra.mxu0 0.0
    %3754 = vmatprep.subr.mxu0 0.0
    %3755 = vmatpush1.msra.mxu0 0.0
    %3756 = vmatprep.subr.mxu0 0.0
    %3757 = vmatpush1.msra.mxu0 0.0
    %3758 = vmatprep.subr.mxu0 0.0
    %3759 = vmatpush1.msra.mxu0 0.0
    %3760 = vmatprep.subr.mxu0 0.0
    %3761 = vmatpush1.msra.mxu0 0.0
    %3762 = vmatprep.subr.mxu0 0.0
    %3763 = vmatpush1.msra.mxu0 0.0
    %3764 = vmatprep.subr.mxu0 0.0
    %3765 = vmatpush1.msra.mxu0 0.0
    %3766 = vmatprep.subr.mxu0 0.0
    %3767 = vmatpush1.msra.mxu0 0.0
    %3768 = vmatprep.subr.mxu0 0.0
    %3769 = vmatpush1.msra.mxu0 0.0
    %3770 = vmatprep.subr.mxu0 0.0
    %3771 = vmatpush1.msra.mxu0 0.0
    %3772 = vmatprep.subr.mxu0 0.0
    %3773 = vmatpush1.msra.mxu0 0.0
    %3774 = vmatprep.subr.mxu0 0.0
    %3775 = vmatpush1.msra.mxu0 0.0
    %3776 = vmatprep.subr.mxu0 0.0
    %3777 = vmatpush1.msra.mxu0 0.0
    %3778 = vmatprep.subr.mxu0 0.0
    %3779 = vmatpush1.msra.mxu0 0.0
    %3780 = vmatprep.subr.mxu0 0.0
    %3781 = vmatpush1.msra.mxu0 0.0
    %3782 = vmatprep.subr.mxu0 0.0
    %3783 = vmatpush1.msra.mxu0 0.0
    %3784 = vmatprep.mubr.f32.mxu0 0.0
    %3785 = vmatmul.mubr.f32.gmra.mrb[0].mxu0 %v3715
    %v3786 = vpop.f32.mrb[0].mxu0
    %v3787 = vadd.f32 %v3712, %v3786
    %v3788 = vpop.f32.mrb[0].mxu0
    %3789 = vmatprep.mubr.f32.mxu0 0.0
    %3790 = vmatmul.mubr.f32.gmra.mrb[0].mxu0 %v3718
    %v3791 = vpop.f32.mrb[0].mxu0
    %v3792 = vadd.f32 %v3712, %v3791
    %v3793 = vpop.f32.mrb[0].mxu0
    %3794 = vdwg.mxu0
    %v3795 = vmax.f32 %v3787, 0.0
    %v3796 = vmax.f32 %v3792, 0.0
    %v3797 = vld [vmem:[%s47] sm:$0xff]
    %v3798 = vld [vmem:[%s47 + $0x8] sm:$0xff]
    %v3799 = vld [vmem:[%s47 + $0x10] sm:$0xff]
    %v3800 = vld [vmem:[%s47 + $0x18] sm:$0xff]
    %v3801 = vld [vmem:[%s47 + $0x20] sm:$0xff]
    %v3802 = vld [vmem:[%s47 + $0x28] sm:$0xff]
    %v3803 = vld [vmem:[%s47 + $0x30] sm:$0xff]
    %v3804 = vld [vmem:[%s47 + $0x38] sm:$0xff]
    %v3805 = vld [vmem:[%s47 + $0x40] sm:$0xff]
    %v3806 = vld [vmem:[%s47 + $0x48] sm:$0xff]
    %v3807 = vld [vmem:[%s47 + $0x50] sm:$0xff]
    %v3808 = vld [vmem:[%s47 + $0x58] sm:$0xff]
    %v3809 = vld [vmem:[%s47 + $0x60] sm:$0xff]
    %v3810 = vld [vmem:[%s47 + $0x68] sm:$0xff]
    %v3811 = vld [vmem:[%s47 + $0x70] sm:$0xff]
    %v3812 = vld [vmem:[%s47 + $0x78] sm:$0xff]
    %3813 = vmatprep.subr.mxu0 0.0
    %3814 = vmatpush1.msra.mxu0 %v3797
    %3815 = vmatprep.subr.mxu0 0.0
    %3816 = vmatpush1.msra.mxu0 %v3798
    %3817 = vmatprep.subr.mxu0 0.0
    %3818 = vmatpush1.msra.mxu0 %v3799
    %3819 = vmatprep.subr.mxu0 0.0
    %3820 = vmatpush1.msra.mxu0 %v3800
    %3821 = vmatprep.subr.mxu0 0.0
    %3822 = vmatpush1.msra.mxu0 %v3801
    %3823 = vmatprep.subr.mxu0 0.0
    %3824 = vmatpush1.msra.mxu0 %v3802
    %3825 = vmatprep.subr.mxu0 0.0
    %3826 = vmatpush1.msra.mxu0 %v3803
    %3827 = vmatprep.subr.mxu0 0.0
    %3828 = vmatpush1.msra.mxu0 %v3804
    %3829 = vmatprep.subr.mxu0 0.0
    %3830 = vmatpush1.msra.mxu0 %v3805
    %3831 = vmatprep.subr.mxu0 0.0
    %3832 = vmatpush1.msra.mxu0 %v3806
    %3833 = vmatprep.subr.mxu0 0.0
    %3834 = vmatpush1.msra.mxu0 %v3807
    %3835 = vmatprep.subr.mxu0 0.0
    %3836 = vmatpush1.msra.mxu0 %v3808
    %3837 = vmatprep.subr.mxu0 0.0
    %3838 = vmatpush1.msra.mxu0 %v3809
    %3839 = vmatprep.subr.mxu0 0.0
    %3840 = vmatpush1.msra.mxu0 %v3810
    %3841 = vmatprep.subr.mxu0 0.0
    %3842 = vmatpush1.msra.mxu0 %v3811
    %3843 = vmatprep.subr.mxu0 0.0
    %3844 = vmatpush1.msra.mxu0 %v3812
    %3845 = vmatprep.subr.mxu0 0.0
    %3846 = vmatpush1.msra.mxu0 0.0
    %3847 = vmatprep.subr.mxu0 0.0
    %3848 = vmatpush1.msra.mxu0 0.0
    %3849 = vmatprep.subr.mxu0 0.0
    %3850 = vmatpush1.msra.mxu0 0.0
    %3851 = vmatprep.subr.mxu0 0.0
    %3852 = vmatpush1.msra.mxu0 0.0
    %3853 = vmatprep.subr.mxu0 0.0
    %3854 = vmatpush1.msra.mxu0 0.0
    %3855 = vmatprep.subr.mxu0 0.0
    %3856 = vmatpush1.msra.mxu0 0.0
    %3857 = vmatprep.subr.mxu0 0.0
    %3858 = vmatpush1.msra.mxu0 0.0
    %3859 = vmatprep.subr.mxu0 0.0
    %3860 = vmatpush1.msra.mxu0 0.0
    %3861 = vmatprep.subr.mxu0 0.0
    %3862 = vmatpush1.msra.mxu0 0.0
    %3863 = vmatprep.subr.mxu0 0.0
    %3864 = vmatpush1.msra.mxu0 0.0
    %3865 = vmatprep.subr.mxu0 0.0
    %3866 = vmatpush1.msra.mxu0 0.0
    %3867 = vmatprep.subr.mxu0 0.0
    %3868 = vmatpush1.msra.mxu0 0.0
    %3869 = vmatprep.subr.mxu0 0.0
    %3870 = vmatpush1.msra.mxu0 0.0
    %3871 = vmatprep.subr.mxu0 0.0
    %3872 = vmatpush1.msra.mxu0 0.0
    %3873 = vmatprep.subr.mxu0 0.0
    %3874 = vmatpush1.msra.mxu0 0.0
    %3875 = vmatprep.subr.mxu0 0.0
    %3876 = vmatpush1.msra.mxu0 0.0
    %3877 = vmatprep.mubr.f32.mxu0 0.0
    %3878 = vmatmul.mubr.f32.gmra.mrb[0].mxu0 %v3795
    %v3879 = vpop.f32.mrb[0].mxu0
    %v3880 = vadd.f32 0.0, %v3879
    %v3881 = vpop.f32.mrb[0].mxu0
    %3882 = vmatprep.mubr.f32.mxu0 0.0
    %3883 = vmatmul.mubr.f32.gmra.mrb[0].mxu0 %v3796
    %v3884 = vpop.f32.mrb[0].mxu0
    %v3885 = vadd.f32 0.0, %v3884
    %v3886 = vpop.f32.mrb[0].mxu0
    %3887 = vdwg.mxu0
    %v3888 = vadd.f32 %v3657, %v3880
    %v3889 = vadd.f32 %v3658, %v3885
    %v3890 = vld [vmem:[%s49] sm:$0x1]
    %v3892 = vlaneseq
    %v3893 = vshrl.u32 %v3892, 7
    %v3894 = vsub.s32 0, %v3893
    %v3895 = vrot.slane %v3890, %v3894
    %v3897 = vadd.f32 %v3888, %v3895
    %v3898 = vadd.f32 %v3889, %v3895
    %v3899 = vld [vmem:[%s51] sm:$0x1]
    %v3900 = vld [vmem:[%s53] sm:$0x1]
    %v3901 = vsel %vm236, %v3897, 0.0
    %3902 = vadd.xlane.f32.xlu0 %v3901
    %v3903 = vpop.xlane.xlu0 %3902
    %v3904 = vsel %vm236, %v3898, 0.0
    %3905 = vadd.xlane.f32.xlu0 %v3904
    %v3906 = vpop.xlane.xlu0 %3905
    %v3907 = vmul.f32 %v3903, %v243
    %v3908 = vmul.f32 %v3906, %v243
    %v3909 = vsub.f32 %v3897, %v3907
    %v3910 = vsub.f32 %v3898, %v3908
    %v3911 = vmul.f32 %v3909, %v3909
    %v3912 = vmul.f32 %v3910, %v3910
    %v3913 = vsel %vm236, %v3911, 0.0
    %3914 = vadd.xlane.f32.xlu0 %v3913
    %v3915 = vpop.xlane.xlu0 %3914
    %v3916 = vsel %vm236, %v3912, 0.0
    %3917 = vadd.xlane.f32.xlu0 %v3916
    %v3918 = vpop.xlane.xlu0 %3917
    %v3919 = vmul.f32 %v3915, %v243
    %v3920 = vmul.f32 %v3918, %v243
    %v3921 = vadd.f32 %v3919, 1e-05
    %v3922 = vadd.f32 %v3920, 1e-05
    %v3923 = vrsqrt.pop %v3921
    %v3924 = vrsqrt.pop %v3922
    %v3925 = vmul.f32 %v3909, %v3923
    %v3926 = vmul.f32 %v3910, %v3924
    %v3928 = vlaneseq
    %v3929 = vshrl.u32 %v3928, 7
    %v3930 = vsub.s32 0, %v3929
    %v3931 = vrot.slane %v3899, %v3930
    %v3933 = vmul.f32 %v3925, %v3931
    %v3934 = vmul.f32 %v3926, %v3931
    %v3936 = vlaneseq
    %v3937 = vshrl.u32 %v3936, 7
    %v3938 = vsub.s32 0, %v3937
    %v3939 = vrot.slane %v3900, %v3938
    %v3941 = vadd.f32 %v3933, %v3939
    %v3942 = vadd.f32 %v3934, %v3939
    %v3943 = vld [vmem:[%s55] sm:$0xff]
    %v3944 = vld [vmem:[%s55 + $0x8] sm:$0xff]
    %v3945 = vld [vmem:[%s55 + $0x10] sm:$0xff]
    %v3946 = vld [vmem:[%s55 + $0x18] sm:$0xff]
    %v3947 = vld [vmem:[%s57] sm:$0x1]
    %v3949 = vlaneseq
    %v3950 = vshrl.u32 %v3949, 7
    %v3951 = vsub.s32 0, %v3950
    %v3952 = vrot.slane %v3947, %v3951
    %v3955 = vsel %vm236, %v3941, 0
    %v3958 = vsel %vm236, %v3942, 0
    %3960 = vmatprep.subr.mxu0 0.0
    %3961 = vmatpush1.msra.mxu0 %v3943
    %3962 = vmatprep.subr.mxu0 0.0
    %3963 = vmatpush1.msra.mxu0 %v3944
    %3964 = vmatprep.subr.mxu0 0.0
    %3965 = vmatpush1.msra.mxu0 %v3945
    %3966 = vmatprep.subr.mxu0 0.0
    %3967 = vmatpush1.msra.mxu0 %v3946
    %3968 = vmatprep.subr.mxu0 0.0
    %3969 = vmatpush1.msra.mxu0 0.0
    %3970 = vmatprep.subr.mxu0 0.0
    %3971 = vmatpush1.msra.mxu0 0.0
    %3972 = vmatprep.subr.mxu0 0.0
    %3973 = vmatpush1.msra.mxu0 0.0
    %3974 = vmatprep.subr.mxu0 0.0
    %3975 = vmatpush1.msra.mxu0 0.0
    %3976 = vmatprep.subr.mxu0 0.0
    %3977 = vmatpush1.msra.mxu0 0.0
    %3978 = vmatprep.subr.mxu0 0.0
    %3979 = vmatpush1.msra.mxu0 0.0
    %3980 = vmatprep.subr.mxu0 0.0
    %3981 = vmatpush1.msra.mxu0 0.0
    %3982 = vmatprep.subr.mxu0 0.0
    %3983 = vmatpush1.msra.mxu0 0.0
    %3984 = vmatprep.subr.mxu0 0.0
    %3985 = vmatpush1.msra.mxu0 0.0
    %3986 = vmatprep.subr.mxu0 0.0
    %3987 = vmatpush1.msra.mxu0 0.0
    %3988 = vmatprep.subr.mxu0 0.0
    %3989 = vmatpush1.msra.mxu0 0.0
    %3990 = vmatprep.subr.mxu0 0.0
    %3991 = vmatpush1.msra.mxu0 0.0
    %3992 = vmatprep.subr.mxu0 0.0
    %3993 = vmatpush1.msra.mxu0 0.0
    %3994 = vmatprep.subr.mxu0 0.0
    %3995 = vmatpush1.msra.mxu0 0.0
    %3996 = vmatprep.subr.mxu0 0.0
    %3997 = vmatpush1.msra.mxu0 0.0
    %3998 = vmatprep.subr.mxu0 0.0
    %3999 = vmatpush1.msra.mxu0 0.0
    %4000 = vmatprep.subr.mxu0 0.0
    %4001 = vmatpush1.msra.mxu0 0.0
    %4002 = vmatprep.subr.mxu0 0.0
    %4003 = vmatpush1.msra.mxu0 0.0
    %4004 = vmatprep.subr.mxu0 0.0
    %4005 = vmatpush1.msra.mxu0 0.0
    %4006 = vmatprep.subr.mxu0 0.0
    %4007 = vmatpush1.msra.mxu0 0.0
    %4008 = vmatprep.subr.mxu0 0.0
    %4009 = vmatpush1.msra.mxu0 0.0
    %4010 = vmatprep.subr.mxu0 0.0
    %4011 = vmatpush1.msra.mxu0 0.0
    %4012 = vmatprep.subr.mxu0 0.0
    %4013 = vmatpush1.msra.mxu0 0.0
    %4014 = vmatprep.subr.mxu0 0.0
    %4015 = vmatpush1.msra.mxu0 0.0
    %4016 = vmatprep.subr.mxu0 0.0
    %4017 = vmatpush1.msra.mxu0 0.0
    %4018 = vmatprep.subr.mxu0 0.0
    %4019 = vmatpush1.msra.mxu0 0.0
    %4020 = vmatprep.subr.mxu0 0.0
    %4021 = vmatpush1.msra.mxu0 0.0
    %4022 = vmatprep.subr.mxu0 0.0
    %4023 = vmatpush1.msra.mxu0 0.0
    %4024 = vmatprep.mubr.f32.mxu0 0.0
    %4025 = vmatmul.mubr.f32.gmra.mrb[0].mxu0 %v3955
    %v4026 = vpop.f32.mrb[0].mxu0
    %v4027 = vadd.f32 %v3952, %v4026
    %v4028 = vpop.f32.mrb[0].mxu0
    %4029 = vmatprep.mubr.f32.mxu0 0.0
    %4030 = vmatmul.mubr.f32.gmra.mrb[0].mxu0 %v3958
    %v4031 = vpop.f32.mrb[0].mxu0
    %v4032 = vadd.f32 %v3952, %v4031
    %v4033 = vpop.f32.mrb[0].mxu0
    %4034 = vdwg.mxu0
    %4035 = vst [vmem:[#allocation2] sm:$0xff] %v4027
    %4036 = vst [vmem:[#allocation2 + $0x8] sm:$0xff] %v4032
    // Predicated region
    $region118: #{_lambda_.1} parent=1 // pred_check
      _
    $region119: #{_lambda_.1} parent=1 // pred_check_branch
      %4038 = sbr.rel (0) target = $region121
    $region120: #{_lambda_.1} parent=1 // pred_region
      %s4040 = ssub.s32 256, 256
      %4041 = vsyncadd [#allocation3], %s4040
      %s4042 = sshll.u32 [#allocation2], 4
      %s4043 = int_to_ptr.vmem [resolvable:$true] %s4042
      %4048 = dma.vmem_to_hbm [thread:$0]  %s4043, 256, %s59, [#allocation3], 128, 128, 8
    $region121: #{_lambda_.1} parent=1 // pred_fallthru
      _
    // Predicated region
    $region122: #{_lambda_.1} parent=1 // pred_check
      _
    $region123: #{_lambda_.1} parent=1 // pred_check_branch
      %4050 = sbr.rel (0) target = $region125
    $region124: #{_lambda_.1} parent=1 // pred_region
      %4051 = dma.done [#allocation3], 256
    $region125: #{_lambda_.1} parent=1 // pred_fallthru
      _
    %4052 = vsyncpa [#allocation3], 1

</llo_original>
